<compile_context>
chip_gen: v7x
topology: tpu7x:2x2x1
jax: 0.10.0
libtpu: 0.0.40
codegen_flags: <defaults>
</compile_context>

<pallas_src>
import numpy as np

import jax
import jax.numpy as jnp
from jax.experimental import pallas as pl
from jax.experimental.pallas import tpu as pltpu


# -----------------------------------------------------------------------------
# The single fused kernel: conv1+pool1+conv2+pool2+fc for the whole batch.
# -----------------------------------------------------------------------------
def meisme_kernel(xs_ref, a1_ref, b1_ref, se1_ref, so1_ref, re1_ref, ro1_ref,
                  a2_ref, b2_ref, se2_ref, so2_ref, re2_ref, ro2_ref,
                  wfc_ref, bfc_ref, o_ref):
    f32 = jnp.float32
    B = o_ref.shape[0]

    def mm(a, b):
        return jnp.dot(a, b, preferred_element_type=f32)

    # ---- conv1: 5x5 valid conv (1 -> 10 ch) as 5 MXU matmuls, one per kernel
    # row, over pre-shifted input slabs.  Rows = (b, i), lanes = j*10 + o.
    c1 = mm(xs_ref[0], a1_ref[0])                                  # (B*24, 240)
    for kh in range(1, 5):
        c1 = c1 + mm(xs_ref[kh], a1_ref[kh])

    # ---- maxpool1 (2x2, stride 2), fused with conv2's row-window expansion:
    # output rows are ordered (kh, b, i) with i in 0..7 so each conv2 slab is a
    # contiguous, 8-aligned block of rows.
    r1 = jnp.maximum(mm(se1_ref[...], c1), mm(so1_ref[...], c1))   # (5*B*8, 240)
    p1 = jnp.maximum(mm(r1, re1_ref[...]), mm(r1, ro1_ref[...]))   # (5*B*8, 120)
    p1 = p1 + b1_ref[...]            # conv1 bias commutes with max-pool

    # ---- conv2: 5x5 valid conv (10 -> 20 ch): 5 matmuls over contiguous blocks.
    B8 = 8 * B
    c2 = mm(p1[0:B8, :], a2_ref[0])                                # (B*8, 160)
    for kh in range(1, 5):
        c2 = c2 + mm(p1[kh * B8:(kh + 1) * B8, :], a2_ref[kh])

    # ---- maxpool2 (2x2, stride 2); output rows ordered (h, b) so the collapsed
    # FC contracts each h-block with a contiguous row slice.
    r2 = jnp.maximum(mm(se2_ref[...], c2), mm(so2_ref[...], c2))   # (4*B, 160)
    p2 = jnp.maximum(mm(r2, re2_ref[...]), mm(r2, ro2_ref[...]))   # (4*B, 80)
    p2 = p2 + b2_ref[...]            # conv2 bias commutes with max-pool

    # ---- collapsed FC (Linear(320,50) @ Linear(50,10)): out = b + sum_h p2_h @ W_h
    acc = bfc_ref[...] + mm(p2[0:B, :], wfc_ref[0])                # (B, 10)
    for h in range(1, 4):
        acc = acc + mm(p2[h * B:(h + 1) * B, :], wfc_ref[h])
    o_ref[...] = acc.astype(o_ref.dtype)


def _full_spec(shape):
    nd = len(shape)
    return pl.BlockSpec(shape, lambda i, _nd=nd: (0,) * _nd)


@jax.jit
def meisme_forward(x_nchw, prep):
    """x_nchw: (B, 1, 28, 28); prep: output of prepare_params(params, B)."""
    B = x_nchw.shape[0]
    x = x_nchw.reshape(B, 28, 28).astype(jnp.float32)
    # Layout plumbing only: 5 row-shifted copies of the input so the kernel
    # body is nothing but matmuls / maxima / adds.
    xs = jnp.stack([x[:, kh:kh + 24, :].reshape(B * 24, 28) for kh in range(5)],
                   axis=0)                                          # (5, B*24, 28)
    operands = (xs,) + tuple(prep)
    return pl.pallas_call(
        meisme_kernel,
        out_shape=jax.ShapeDtypeStruct((B, 10), jnp.float32),
        grid=(1,),
        in_specs=[_full_spec(op.shape) for op in operands],
        out_specs=pl.BlockSpec((B, 10), lambda i: (0, 0)),
        compiler_params=pltpu.CompilerParams(dimension_semantics=("arbitrary",)),
    )(*operands)


# -----------------------------------------------------------------------------
# One-time parameter preparation (tiny numpy glue, done once outside the kernel).
# -----------------------------------------------------------------------------
def prepare_params(params, batch_size):
    w1, b1, w2, b2, wf1, bf1, wf2, bf2 = [np.asarray(p, np.float32) for p in params]
    B = batch_size

    # conv1 folded weights: a1[kh, j+kw, j*10+o] = w1[o, 0, kh, kw]
    a1 = np.zeros((5, 28, 240), np.float32)
    for kh in range(5):
        for kw in range(5):
            for j in range(24):
                a1[kh, j + kw, j * 10:(j + 1) * 10] = w1[:, 0, kh, kw]

    # conv2 folded weights: a2[kh, (j+kw)*10+c, j*20+o] = w2[o, c, kh, kw]
    a2 = np.zeros((5, 120, 160), np.float32)
    for kh in range(5):
        for kw in range(5):
            for j in range(8):
                for c in range(10):
                    a2[kh, (j + kw) * 10 + c, j * 20:(j + 1) * 20] = w2[:, c, kh, kw]

    # Per-channel biases tiled onto the lane layouts (lane = jj*C + c).
    bias1 = np.tile(b1, 12).reshape(1, 120)
    bias2 = np.tile(b2, 4).reshape(1, 80)

    # pool1 row selection + conv2 window expansion: rows (kh, b, i) <- (b, 2(kh+i)[+1])
    se1 = np.zeros((5 * B * 8, B * 24), np.float32)
    so1 = np.zeros_like(se1)
    for kh in range(5):
        for b in range(B):
            for i in range(8):
                r = kh * B * 8 + b * 8 + i
                m = kh + i
                se1[r, b * 24 + 2 * m] = 1.0
                so1[r, b * 24 + 2 * m + 1] = 1.0

    # pool1 lane (W) selection: 240 -> 120.
    re1 = np.zeros((240, 120), np.float32)
    ro1 = np.zeros_like(re1)
    for jj in range(12):
        for o in range(10):
            re1[(2 * jj) * 10 + o, jj * 10 + o] = 1.0
            ro1[(2 * jj + 1) * 10 + o, jj * 10 + o] = 1.0

    # pool2 row selection, rows ordered (h, b) <- (b, 2h[+1]).
    se2 = np.zeros((4 * B, B * 8), np.float32)
    so2 = np.zeros_like(se2)
    for h in range(4):
        for b in range(B):
            se2[h * B + b, b * 8 + 2 * h] = 1.0
            so2[h * B + b, b * 8 + 2 * h + 1] = 1.0

    # pool2 lane (W) selection: 160 -> 80.
    re2 = np.zeros((160, 80), np.float32)
    ro2 = np.zeros_like(re2)
    for jj in range(4):
        for o in range(20):
            re2[(2 * jj) * 20 + o, jj * 20 + o] = 1.0
            ro2[(2 * jj + 1) * 20 + o, jj * 20 + o] = 1.0

    # Collapsed FC (no nonlinearity between the two Linear layers), with the
    # PyTorch NCHW flatten order (f = o*16 + h*4 + jj) folded into per-h blocks
    # laid out to match p2 lanes (jj*20 + o).
    wfc_full = wf1.T @ wf2.T                       # (320, 10)
    bfc = (bf1 @ wf2.T + bf2).reshape(1, 10)
    wfc = np.zeros((4, 80, 10), np.float32)
    for h in range(4):
        for jj in range(4):
            for o in range(20):
                wfc[h, jj * 20 + o, :] = wfc_full[o * 16 + h * 4 + jj, :]

    arrs = (a1, bias1, se1, so1, re1, ro1, a2, bias2, se2, so2, re2, ro2, wfc, bfc)
    return tuple(jnp.asarray(a, jnp.float32) for a in arrs)


# -----------------------------------------------------------------------------
# Pure-JAX reference (mirrors the PyTorch module exactly) for verification.
# -----------------------------------------------------------------------------
def reference_forward(x, params):
    w1, b1, w2, b2, wf1, bf1, wf2, bf2 = params
    dn = ("NCHW", "OIHW", "NCHW")
    hp = jax.lax.Precision.HIGHEST
    y = jax.lax.conv_general_dilated(x, w1, (1, 1), "VALID",
                                     dimension_numbers=dn, precision=hp)
    y = y + b1[None, :, None, None]
    y = jax.lax.reduce_window(y, -jnp.inf, jax.lax.max, (1, 1, 2, 2), (1, 1, 2, 2), "VALID")
    y = jax.lax.conv_general_dilated(y, w2, (1, 1), "VALID",
                                     dimension_numbers=dn, precision=hp)
    y = y + b2[None, :, None, None]
    y = jax.lax.reduce_window(y, -jnp.inf, jax.lax.max, (1, 1, 2, 2), (1, 1, 2, 2), "VALID")
    y = y.reshape(y.shape[0], -1)
    y = jnp.dot(y, wf1.T, precision=hp) + bf1
    y = jnp.dot(y, wf2.T, precision=hp) + bf2
    return y


if __name__ == "__main__":
    key = jax.random.PRNGKey(0)
    ks = jax.random.split(key, 9)

    def uinit(k, shape, fan_in):
        bound = 1.0 / (fan_in ** 0.5)
        return jax.random.uniform(k, shape, jnp.float32, -bound, bound)

    B = 8  # small batch; multiple of 8 keeps every in-kernel row slice 8-aligned
    x = jax.random.normal(ks[0], (B, 1, 28, 28), jnp.float32)

    # Deterministic parameter init (PyTorch default-style uniform bounds).
    w1 = uinit(ks[1], (10, 1, 5, 5), 1 * 5 * 5)
    b1 = uinit(ks[2], (10,), 1 * 5 * 5)
    w2 = uinit(ks[3], (20, 10, 5, 5), 10 * 5 * 5)
    b2 = uinit(ks[4], (20,), 10 * 5 * 5)
    wf1 = uinit(ks[5], (50, 320), 320)
    bf1 = uinit(ks[6], (50,), 320)
    wf2 = uinit(ks[7], (10, 50), 50)
    bf2 = uinit(ks[8], (10,), 50)
    params = (w1, b1, w2, b2, wf1, bf1, wf2, bf2)

    prep = prepare_params(params, B)

    out = jax.block_until_ready(meisme_forward(x, prep))
    ref = jax.block_until_ready(reference_forward(x, params))

    assert out.shape == (B, 10), out.shape
    if not jnp.allclose(out, ref, atol=2e-2, rtol=2e-2):
        max_err = float(jnp.max(jnp.abs(out - ref)))
        raise AssertionError(f"Pallas output mismatch, max abs err = {max_err}")

    print("KERNEL_OK")
</pallas_src>

<mosaic_0001>
module attributes {stable_mosaic.version = 11 : i64} {
  func.func @meisme_kernel(%arg0: i32, %arg1: memref<5x192x28xf32, #tpu.memory_space<vmem>>, %arg2: memref<5x28x240xf32, #tpu.memory_space<vmem>>, %arg3: memref<1x120xf32, #tpu.memory_space<vmem>>, %arg4: memref<320x192xf32, #tpu.memory_space<vmem>>, %arg5: memref<320x192xf32, #tpu.memory_space<vmem>>, %arg6: memref<240x120xf32, #tpu.memory_space<vmem>>, %arg7: memref<240x120xf32, #tpu.memory_space<vmem>>, %arg8: memref<5x120x160xf32, #tpu.memory_space<vmem>>, %arg9: memref<1x80xf32, #tpu.memory_space<vmem>>, %arg10: memref<32x64xf32, #tpu.memory_space<vmem>>, %arg11: memref<32x64xf32, #tpu.memory_space<vmem>>, %arg12: memref<160x80xf32, #tpu.memory_space<vmem>>, %arg13: memref<160x80xf32, #tpu.memory_space<vmem>>, %arg14: memref<4x80x10xf32, #tpu.memory_space<vmem>>, %arg15: memref<1x10xf32, #tpu.memory_space<vmem>>, %arg16: memref<8x10xf32, #tpu.memory_space<vmem>>) attributes {dimension_semantics = [#tpu.dimension_semantics<arbitrary>], iteration_bounds = array<i64: 1>, scalar_prefetch = 0 : i64, scratch_operands = 0 : i64, tpu.core_type = #tpu.core_type<tc>, window_params = [{pipeline_mode = #tpu.pipeline_mode<synchronous>, transform_indices = @transform_0, window_bounds = array<i64: 5, 192, 28>}, {pipeline_mode = #tpu.pipeline_mode<synchronous>, transform_indices = @transform_1, window_bounds = array<i64: 5, 28, 240>}, {pipeline_mode = #tpu.pipeline_mode<synchronous>, transform_indices = @transform_2, window_bounds = array<i64: 1, 120>}, {pipeline_mode = #tpu.pipeline_mode<synchronous>, transform_indices = @transform_3, window_bounds = array<i64: 320, 192>}, {pipeline_mode = #tpu.pipeline_mode<synchronous>, transform_indices = @transform_4, window_bounds = array<i64: 320, 192>}, {pipeline_mode = #tpu.pipeline_mode<synchronous>, transform_indices = @transform_5, window_bounds = array<i64: 240, 120>}, {pipeline_mode = #tpu.pipeline_mode<synchronous>, transform_indices = @transform_6, window_bounds = array<i64: 240, 120>}, {pipeline_mode = #tpu.pipeline_mode<synchronous>, transform_indices = @transform_7, window_bounds = array<i64: 5, 120, 160>}, {pipeline_mode = #tpu.pipeline_mode<synchronous>, transform_indices = @transform_8, window_bounds = array<i64: 1, 80>}, {pipeline_mode = #tpu.pipeline_mode<synchronous>, transform_indices = @transform_9, window_bounds = array<i64: 32, 64>}, {pipeline_mode = #tpu.pipeline_mode<synchronous>, transform_indices = @transform_10, window_bounds = array<i64: 32, 64>}, {pipeline_mode = #tpu.pipeline_mode<synchronous>, transform_indices = @transform_11, window_bounds = array<i64: 160, 80>}, {pipeline_mode = #tpu.pipeline_mode<synchronous>, transform_indices = @transform_12, window_bounds = array<i64: 160, 80>}, {pipeline_mode = #tpu.pipeline_mode<synchronous>, transform_indices = @transform_13, window_bounds = array<i64: 4, 80, 10>}, {pipeline_mode = #tpu.pipeline_mode<synchronous>, transform_indices = @transform_14, window_bounds = array<i64: 1, 10>}, {pipeline_mode = #tpu.pipeline_mode<synchronous>, transform_indices = @transform_15, window_bounds = array<i64: 8, 10>}]} {
    %c0 = arith.constant 0 : index
    %c0_0 = arith.constant 0 : index
    %c0_1 = arith.constant 0 : index
    %0 = vector.load %arg1[%c0, %c0_0, %c0_1] : memref<5x192x28xf32, #tpu.memory_space<vmem>>, vector<1x192x28xf32>
    %1 = vector.shape_cast %0 : vector<1x192x28xf32> to vector<192x28xf32>
    %c0_2 = arith.constant 0 : index
    %c0_3 = arith.constant 0 : index
    %c0_4 = arith.constant 0 : index
    %2 = vector.load %arg2[%c0_2, %c0_3, %c0_4] : memref<5x28x240xf32, #tpu.memory_space<vmem>>, vector<1x28x240xf32>
    %3 = vector.shape_cast %2 : vector<1x28x240xf32> to vector<28x240xf32>
    %cst = arith.constant dense<0.000000e+00> : vector<192x240xf32>
    %4 = tpu.matmul %1, %3, %cst {dimension_numbers = #tpu.dot_dimension_numbers<[1], [0], [0], [1], [0, 0, 1, 1], [], []>} : vector<192x28xf32>, vector<28x240xf32>, vector<192x240xf32> -> vector<192x240xf32>
    %c1 = arith.constant 1 : index
    %c0_5 = arith.constant 0 : index
    %c0_6 = arith.constant 0 : index
    %5 = vector.load %arg1[%c1, %c0_5, %c0_6] : memref<5x192x28xf32, #tpu.memory_space<vmem>>, vector<1x192x28xf32>
    %6 = vector.shape_cast %5 : vector<1x192x28xf32> to vector<192x28xf32>
    %c1_7 = arith.constant 1 : index
    %c0_8 = arith.constant 0 : index
    %c0_9 = arith.constant 0 : index
    %7 = vector.load %arg2[%c1_7, %c0_8, %c0_9] : memref<5x28x240xf32, #tpu.memory_space<vmem>>, vector<1x28x240xf32>
    %8 = vector.shape_cast %7 : vector<1x28x240xf32> to vector<28x240xf32>
    %cst_10 = arith.constant dense<0.000000e+00> : vector<192x240xf32>
    %9 = tpu.matmul %6, %8, %cst_10 {dimension_numbers = #tpu.dot_dimension_numbers<[1], [0], [0], [1], [0, 0, 1, 1], [], []>} : vector<192x28xf32>, vector<28x240xf32>, vector<192x240xf32> -> vector<192x240xf32>
    %10 = arith.addf %4, %9 : vector<192x240xf32>
    %c2 = arith.constant 2 : index
    %c0_11 = arith.constant 0 : index
    %c0_12 = arith.constant 0 : index
    %11 = vector.load %arg1[%c2, %c0_11, %c0_12] : memref<5x192x28xf32, #tpu.memory_space<vmem>>, vector<1x192x28xf32>
    %12 = vector.shape_cast %11 : vector<1x192x28xf32> to vector<192x28xf32>
    %c2_13 = arith.constant 2 : index
    %c0_14 = arith.constant 0 : index
    %c0_15 = arith.constant 0 : index
    %13 = vector.load %arg2[%c2_13, %c0_14, %c0_15] : memref<5x28x240xf32, #tpu.memory_space<vmem>>, vector<1x28x240xf32>
    %14 = vector.shape_cast %13 : vector<1x28x240xf32> to vector<28x240xf32>
    %cst_16 = arith.constant dense<0.000000e+00> : vector<192x240xf32>
    %15 = tpu.matmul %12, %14, %cst_16 {dimension_numbers = #tpu.dot_dimension_numbers<[1], [0], [0], [1], [0, 0, 1, 1], [], []>} : vector<192x28xf32>, vector<28x240xf32>, vector<192x240xf32> -> vector<192x240xf32>
    %16 = arith.addf %10, %15 : vector<192x240xf32>
    %c3 = arith.constant 3 : index
    %c0_17 = arith.constant 0 : index
    %c0_18 = arith.constant 0 : index
    %17 = vector.load %arg1[%c3, %c0_17, %c0_18] : memref<5x192x28xf32, #tpu.memory_space<vmem>>, vector<1x192x28xf32>
    %18 = vector.shape_cast %17 : vector<1x192x28xf32> to vector<192x28xf32>
    %c3_19 = arith.constant 3 : index
    %c0_20 = arith.constant 0 : index
    %c0_21 = arith.constant 0 : index
    %19 = vector.load %arg2[%c3_19, %c0_20, %c0_21] : memref<5x28x240xf32, #tpu.memory_space<vmem>>, vector<1x28x240xf32>
    %20 = vector.shape_cast %19 : vector<1x28x240xf32> to vector<28x240xf32>
    %cst_22 = arith.constant dense<0.000000e+00> : vector<192x240xf32>
    %21 = tpu.matmul %18, %20, %cst_22 {dimension_numbers = #tpu.dot_dimension_numbers<[1], [0], [0], [1], [0, 0, 1, 1], [], []>} : vector<192x28xf32>, vector<28x240xf32>, vector<192x240xf32> -> vector<192x240xf32>
    %22 = arith.addf %16, %21 : vector<192x240xf32>
    %c4 = arith.constant 4 : index
    %c0_23 = arith.constant 0 : index
    %c0_24 = arith.constant 0 : index
    %23 = vector.load %arg1[%c4, %c0_23, %c0_24] : memref<5x192x28xf32, #tpu.memory_space<vmem>>, vector<1x192x28xf32>
    %24 = vector.shape_cast %23 : vector<1x192x28xf32> to vector<192x28xf32>
    %c4_25 = arith.constant 4 : index
    %c0_26 = arith.constant 0 : index
    %c0_27 = arith.constant 0 : index
    %25 = vector.load %arg2[%c4_25, %c0_26, %c0_27] : memref<5x28x240xf32, #tpu.memory_space<vmem>>, vector<1x28x240xf32>
    %26 = vector.shape_cast %25 : vector<1x28x240xf32> to vector<28x240xf32>
    %cst_28 = arith.constant dense<0.000000e+00> : vector<192x240xf32>
    %27 = tpu.matmul %24, %26, %cst_28 {dimension_numbers = #tpu.dot_dimension_numbers<[1], [0], [0], [1], [0, 0, 1, 1], [], []>} : vector<192x28xf32>, vector<28x240xf32>, vector<192x240xf32> -> vector<192x240xf32>
    %28 = arith.addf %22, %27 : vector<192x240xf32>
    %c0_29 = arith.constant 0 : index
    %c0_30 = arith.constant 0 : index
    %29 = vector.load %arg4[%c0_29, %c0_30] : memref<320x192xf32, #tpu.memory_space<vmem>>, vector<320x192xf32>
    %cst_31 = arith.constant dense<0.000000e+00> : vector<320x240xf32>
    %30 = tpu.matmul %29, %28, %cst_31 {dimension_numbers = #tpu.dot_dimension_numbers<[1], [0], [0], [1], [0, 0, 1, 1], [], []>} : vector<320x192xf32>, vector<192x240xf32>, vector<320x240xf32> -> vector<320x240xf32>
    %c0_32 = arith.constant 0 : index
    %c0_33 = arith.constant 0 : index
    %31 = vector.load %arg5[%c0_32, %c0_33] : memref<320x192xf32, #tpu.memory_space<vmem>>, vector<320x192xf32>
    %cst_34 = arith.constant dense<0.000000e+00> : vector<320x240xf32>
    %32 = tpu.matmul %31, %28, %cst_34 {dimension_numbers = #tpu.dot_dimension_numbers<[1], [0], [0], [1], [0, 0, 1, 1], [], []>} : vector<320x192xf32>, vector<192x240xf32>, vector<320x240xf32> -> vector<320x240xf32>
    %33 = arith.maximumf %30, %32 : vector<320x240xf32>
    %c0_35 = arith.constant 0 : index
    %c0_36 = arith.constant 0 : index
    %34 = vector.load %arg6[%c0_35, %c0_36] : memref<240x120xf32, #tpu.memory_space<vmem>>, vector<240x120xf32>
    %cst_37 = arith.constant dense<0.000000e+00> : vector<320x120xf32>
    %35 = tpu.matmul %33, %34, %cst_37 {dimension_numbers = #tpu.dot_dimension_numbers<[1], [0], [0], [1], [0, 0, 1, 1], [], []>} : vector<320x240xf32>, vector<240x120xf32>, vector<320x120xf32> -> vector<320x120xf32>
    %c0_38 = arith.constant 0 : index
    %c0_39 = arith.constant 0 : index
    %36 = vector.load %arg7[%c0_38, %c0_39] : memref<240x120xf32, #tpu.memory_space<vmem>>, vector<240x120xf32>
    %cst_40 = arith.constant dense<0.000000e+00> : vector<320x120xf32>
    %37 = tpu.matmul %33, %36, %cst_40 {dimension_numbers = #tpu.dot_dimension_numbers<[1], [0], [0], [1], [0, 0, 1, 1], [], []>} : vector<320x240xf32>, vector<240x120xf32>, vector<320x120xf32> -> vector<320x120xf32>
    %38 = arith.maximumf %35, %37 : vector<320x120xf32>
    %c0_41 = arith.constant 0 : index
    %c0_42 = arith.constant 0 : index
    %39 = vector.load %arg3[%c0_41, %c0_42] : memref<1x120xf32, #tpu.memory_space<vmem>>, vector<1x120xf32>
    %40 = vector.broadcast %39 : vector<1x120xf32> to vector<320x120xf32>
    %41 = arith.addf %38, %40 : vector<320x120xf32>
    %42 = vector.extract_strided_slice %41 {offsets = [0, 0], sizes = [64, 120], strides = [1, 1]} : vector<320x120xf32> to vector<64x120xf32>
    %c0_43 = arith.constant 0 : index
    %c0_44 = arith.constant 0 : index
    %c0_45 = arith.constant 0 : index
    %43 = vector.load %arg8[%c0_43, %c0_44, %c0_45] : memref<5x120x160xf32, #tpu.memory_space<vmem>>, vector<1x120x160xf32>
    %44 = vector.shape_cast %43 : vector<1x120x160xf32> to vector<120x160xf32>
    %cst_46 = arith.constant dense<0.000000e+00> : vector<64x160xf32>
    %45 = tpu.matmul %42, %44, %cst_46 {dimension_numbers = #tpu.dot_dimension_numbers<[1], [0], [0], [1], [0, 0, 1, 1], [], []>} : vector<64x120xf32>, vector<120x160xf32>, vector<64x160xf32> -> vector<64x160xf32>
    %46 = vector.extract_strided_slice %41 {offsets = [64, 0], sizes = [64, 120], strides = [1, 1]} : vector<320x120xf32> to vector<64x120xf32>
    %c1_47 = arith.constant 1 : index
    %c0_48 = arith.constant 0 : index
    %c0_49 = arith.constant 0 : index
    %47 = vector.load %arg8[%c1_47, %c0_48, %c0_49] : memref<5x120x160xf32, #tpu.memory_space<vmem>>, vector<1x120x160xf32>
    %48 = vector.shape_cast %47 : vector<1x120x160xf32> to vector<120x160xf32>
    %cst_50 = arith.constant dense<0.000000e+00> : vector<64x160xf32>
    %49 = tpu.matmul %46, %48, %cst_50 {dimension_numbers = #tpu.dot_dimension_numbers<[1], [0], [0], [1], [0, 0, 1, 1], [], []>} : vector<64x120xf32>, vector<120x160xf32>, vector<64x160xf32> -> vector<64x160xf32>
    %50 = arith.addf %45, %49 : vector<64x160xf32>
    %51 = vector.extract_strided_slice %41 {offsets = [128, 0], sizes = [64, 120], strides = [1, 1]} : vector<320x120xf32> to vector<64x120xf32>
    %c2_51 = arith.constant 2 : index
    %c0_52 = arith.constant 0 : index
    %c0_53 = arith.constant 0 : index
    %52 = vector.load %arg8[%c2_51, %c0_52, %c0_53] : memref<5x120x160xf32, #tpu.memory_space<vmem>>, vector<1x120x160xf32>
    %53 = vector.shape_cast %52 : vector<1x120x160xf32> to vector<120x160xf32>
    %cst_54 = arith.constant dense<0.000000e+00> : vector<64x160xf32>
    %54 = tpu.matmul %51, %53, %cst_54 {dimension_numbers = #tpu.dot_dimension_numbers<[1], [0], [0], [1], [0, 0, 1, 1], [], []>} : vector<64x120xf32>, vector<120x160xf32>, vector<64x160xf32> -> vector<64x160xf32>
    %55 = arith.addf %50, %54 : vector<64x160xf32>
    %56 = vector.extract_strided_slice %41 {offsets = [192, 0], sizes = [64, 120], strides = [1, 1]} : vector<320x120xf32> to vector<64x120xf32>
    %c3_55 = arith.constant 3 : index
    %c0_56 = arith.constant 0 : index
    %c0_57 = arith.constant 0 : index
    %57 = vector.load %arg8[%c3_55, %c0_56, %c0_57] : memref<5x120x160xf32, #tpu.memory_space<vmem>>, vector<1x120x160xf32>
    %58 = vector.shape_cast %57 : vector<1x120x160xf32> to vector<120x160xf32>
    %cst_58 = arith.constant dense<0.000000e+00> : vector<64x160xf32>
    %59 = tpu.matmul %56, %58, %cst_58 {dimension_numbers = #tpu.dot_dimension_numbers<[1], [0], [0], [1], [0, 0, 1, 1], [], []>} : vector<64x120xf32>, vector<120x160xf32>, vector<64x160xf32> -> vector<64x160xf32>
    %60 = arith.addf %55, %59 : vector<64x160xf32>
    %61 = vector.extract_strided_slice %41 {offsets = [256, 0], sizes = [64, 120], strides = [1, 1]} : vector<320x120xf32> to vector<64x120xf32>
    %c4_59 = arith.constant 4 : index
    %c0_60 = arith.constant 0 : index
    %c0_61 = arith.constant 0 : index
    %62 = vector.load %arg8[%c4_59, %c0_60, %c0_61] : memref<5x120x160xf32, #tpu.memory_space<vmem>>, vector<1x120x160xf32>
    %63 = vector.shape_cast %62 : vector<1x120x160xf32> to vector<120x160xf32>
    %cst_62 = arith.constant dense<0.000000e+00> : vector<64x160xf32>
    %64 = tpu.matmul %61, %63, %cst_62 {dimension_numbers = #tpu.dot_dimension_numbers<[1], [0], [0], [1], [0, 0, 1, 1], [], []>} : vector<64x120xf32>, vector<120x160xf32>, vector<64x160xf32> -> vector<64x160xf32>
    %65 = arith.addf %60, %64 : vector<64x160xf32>
    %c0_63 = arith.constant 0 : index
    %c0_64 = arith.constant 0 : index
    %66 = vector.load %arg10[%c0_63, %c0_64] : memref<32x64xf32, #tpu.memory_space<vmem>>, vector<32x64xf32>
    %cst_65 = arith.constant dense<0.000000e+00> : vector<32x160xf32>
    %67 = tpu.matmul %66, %65, %cst_65 {dimension_numbers = #tpu.dot_dimension_numbers<[1], [0], [0], [1], [0, 0, 1, 1], [], []>} : vector<32x64xf32>, vector<64x160xf32>, vector<32x160xf32> -> vector<32x160xf32>
    %c0_66 = arith.constant 0 : index
    %c0_67 = arith.constant 0 : index
    %68 = vector.load %arg11[%c0_66, %c0_67] : memref<32x64xf32, #tpu.memory_space<vmem>>, vector<32x64xf32>
    %cst_68 = arith.constant dense<0.000000e+00> : vector<32x160xf32>
    %69 = tpu.matmul %68, %65, %cst_68 {dimension_numbers = #tpu.dot_dimension_numbers<[1], [0], [0], [1], [0, 0, 1, 1], [], []>} : vector<32x64xf32>, vector<64x160xf32>, vector<32x160xf32> -> vector<32x160xf32>
    %70 = arith.maximumf %67, %69 : vector<32x160xf32>
    %c0_69 = arith.constant 0 : index
    %c0_70 = arith.constant 0 : index
    %71 = vector.load %arg12[%c0_69, %c0_70] : memref<160x80xf32, #tpu.memory_space<vmem>>, vector<160x80xf32>
    %cst_71 = arith.constant dense<0.000000e+00> : vector<32x80xf32>
    %72 = tpu.matmul %70, %71, %cst_71 {dimension_numbers = #tpu.dot_dimension_numbers<[1], [0], [0], [1], [0, 0, 1, 1], [], []>} : vector<32x160xf32>, vector<160x80xf32>, vector<32x80xf32> -> vector<32x80xf32>
    %c0_72 = arith.constant 0 : index
    %c0_73 = arith.constant 0 : index
    %73 = vector.load %arg13[%c0_72, %c0_73] : memref<160x80xf32, #tpu.memory_space<vmem>>, vector<160x80xf32>
    %cst_74 = arith.constant dense<0.000000e+00> : vector<32x80xf32>
    %74 = tpu.matmul %70, %73, %cst_74 {dimension_numbers = #tpu.dot_dimension_numbers<[1], [0], [0], [1], [0, 0, 1, 1], [], []>} : vector<32x160xf32>, vector<160x80xf32>, vector<32x80xf32> -> vector<32x80xf32>
    %75 = arith.maximumf %72, %74 : vector<32x80xf32>
    %c0_75 = arith.constant 0 : index
    %c0_76 = arith.constant 0 : index
    %76 = vector.load %arg9[%c0_75, %c0_76] : memref<1x80xf32, #tpu.memory_space<vmem>>, vector<1x80xf32>
    %77 = vector.broadcast %76 : vector<1x80xf32> to vector<32x80xf32>
    %78 = arith.addf %75, %77 : vector<32x80xf32>
    %c0_77 = arith.constant 0 : index
    %c0_78 = arith.constant 0 : index
    %79 = vector.load %arg15[%c0_77, %c0_78] : memref<1x10xf32, #tpu.memory_space<vmem>>, vector<1x10xf32>
    %80 = vector.extract_strided_slice %78 {offsets = [0, 0], sizes = [8, 80], strides = [1, 1]} : vector<32x80xf32> to vector<8x80xf32>
    %c0_79 = arith.constant 0 : index
    %c0_80 = arith.constant 0 : index
    %c0_81 = arith.constant 0 : index
    %81 = vector.load %arg14[%c0_79, %c0_80, %c0_81] : memref<4x80x10xf32, #tpu.memory_space<vmem>>, vector<1x80x10xf32>
    %82 = vector.shape_cast %81 : vector<1x80x10xf32> to vector<80x10xf32>
    %cst_82 = arith.constant dense<0.000000e+00> : vector<8x10xf32>
    %83 = tpu.matmul %80, %82, %cst_82 {dimension_numbers = #tpu.dot_dimension_numbers<[1], [0], [0], [1], [0, 0, 1, 1], [], []>} : vector<8x80xf32>, vector<80x10xf32>, vector<8x10xf32> -> vector<8x10xf32>
    %84 = vector.broadcast %79 : vector<1x10xf32> to vector<8x10xf32>
    %85 = arith.addf %84, %83 : vector<8x10xf32>
    %86 = vector.extract_strided_slice %78 {offsets = [8, 0], sizes = [8, 80], strides = [1, 1]} : vector<32x80xf32> to vector<8x80xf32>
    %c1_83 = arith.constant 1 : index
    %c0_84 = arith.constant 0 : index
    %c0_85 = arith.constant 0 : index
    %87 = vector.load %arg14[%c1_83, %c0_84, %c0_85] : memref<4x80x10xf32, #tpu.memory_space<vmem>>, vector<1x80x10xf32>
    %88 = vector.shape_cast %87 : vector<1x80x10xf32> to vector<80x10xf32>
    %cst_86 = arith.constant dense<0.000000e+00> : vector<8x10xf32>
    %89 = tpu.matmul %86, %88, %cst_86 {dimension_numbers = #tpu.dot_dimension_numbers<[1], [0], [0], [1], [0, 0, 1, 1], [], []>} : vector<8x80xf32>, vector<80x10xf32>, vector<8x10xf32> -> vector<8x10xf32>
    %90 = arith.addf %85, %89 : vector<8x10xf32>
    %91 = vector.extract_strided_slice %78 {offsets = [16, 0], sizes = [8, 80], strides = [1, 1]} : vector<32x80xf32> to vector<8x80xf32>
    %c2_87 = arith.constant 2 : index
    %c0_88 = arith.constant 0 : index
    %c0_89 = arith.constant 0 : index
    %92 = vector.load %arg14[%c2_87, %c0_88, %c0_89] : memref<4x80x10xf32, #tpu.memory_space<vmem>>, vector<1x80x10xf32>
    %93 = vector.shape_cast %92 : vector<1x80x10xf32> to vector<80x10xf32>
    %cst_90 = arith.constant dense<0.000000e+00> : vector<8x10xf32>
    %94 = tpu.matmul %91, %93, %cst_90 {dimension_numbers = #tpu.dot_dimension_numbers<[1], [0], [0], [1], [0, 0, 1, 1], [], []>} : vector<8x80xf32>, vector<80x10xf32>, vector<8x10xf32> -> vector<8x10xf32>
    %95 = arith.addf %90, %94 : vector<8x10xf32>
    %96 = vector.extract_strided_slice %78 {offsets = [24, 0], sizes = [8, 80], strides = [1, 1]} : vector<32x80xf32> to vector<8x80xf32>
    %c3_91 = arith.constant 3 : index
    %c0_92 = arith.constant 0 : index
    %c0_93 = arith.constant 0 : index
    %97 = vector.load %arg14[%c3_91, %c0_92, %c0_93] : memref<4x80x10xf32, #tpu.memory_space<vmem>>, vector<1x80x10xf32>
    %98 = vector.shape_cast %97 : vector<1x80x10xf32> to vector<80x10xf32>
    %cst_94 = arith.constant dense<0.000000e+00> : vector<8x10xf32>
    %99 = tpu.matmul %96, %98, %cst_94 {dimension_numbers = #tpu.dot_dimension_numbers<[1], [0], [0], [1], [0, 0, 1, 1], [], []>} : vector<8x80xf32>, vector<80x10xf32>, vector<8x10xf32> -> vector<8x10xf32>
    %100 = arith.addf %95, %99 : vector<8x10xf32>
    %c0_95 = arith.constant 0 : index
    %c0_96 = arith.constant 0 : index
    %101 = vector.load %arg16[%c0_95, %c0_96] : memref<8x10xf32, #tpu.memory_space<vmem>>, vector<8x10xf32>
    tpu.vector_store %arg16[%c0_95, %c0_96], %100 {strides = array<i32>} : memref<8x10xf32, #tpu.memory_space<vmem>>, vector<8x10xf32>,
    return
  }
  func.func @transform_0(%arg0: i32) -> (i32, i32, i32) {
    %c0_i32 = arith.constant 0 : i32
    %c0_i32_0 = arith.constant 0 : i32
    %c0_i32_1 = arith.constant 0 : i32
    %c0_i32_2 = arith.constant 0 : i32
    return %c0_i32, %c0_i32_0, %c0_i32_1 : i32, i32, i32
  }
  func.func @transform_1(%arg0: i32) -> (i32, i32, i32) {
    %c0_i32 = arith.constant 0 : i32
    %c0_i32_0 = arith.constant 0 : i32
    %c0_i32_1 = arith.constant 0 : i32
    %c0_i32_2 = arith.constant 0 : i32
    return %c0_i32, %c0_i32_0, %c0_i32_1 : i32, i32, i32
  }
  func.func @transform_2(%arg0: i32) -> (i32, i32) {
    %c0_i32 = arith.constant 0 : i32
    %c0_i32_0 = arith.constant 0 : i32
    %c0_i32_1 = arith.constant 0 : i32
    return %c0_i32, %c0_i32_0 : i32, i32
  }
  func.func @transform_3(%arg0: i32) -> (i32, i32) {
    %c0_i32 = arith.constant 0 : i32
    %c0_i32_0 = arith.constant 0 : i32
    %c0_i32_1 = arith.constant 0 : i32
    return %c0_i32, %c0_i32_0 : i32, i32
  }
  func.func @transform_4(%arg0: i32) -> (i32, i32) {
    %c0_i32 = arith.constant 0 : i32
    %c0_i32_0 = arith.constant 0 : i32
    %c0_i32_1 = arith.constant 0 : i32
    return %c0_i32, %c0_i32_0 : i32, i32
  }
  func.func @transform_5(%arg0: i32) -> (i32, i32) {
    %c0_i32 = arith.constant 0 : i32
    %c0_i32_0 = arith.constant 0 : i32
    %c0_i32_1 = arith.constant 0 : i32
    return %c0_i32, %c0_i32_0 : i32, i32
  }
  func.func @transform_6(%arg0: i32) -> (i32, i32) {
    %c0_i32 = arith.constant 0 : i32
    %c0_i32_0 = arith.constant 0 : i32
    %c0_i32_1 = arith.constant 0 : i32
    return %c0_i32, %c0_i32_0 : i32, i32
  }
  func.func @transform_7(%arg0: i32) -> (i32, i32, i32) {
    %c0_i32 = arith.constant 0 : i32
    %c0_i32_0 = arith.constant 0 : i32
    %c0_i32_1 = arith.constant 0 : i32
    %c0_i32_2 = arith.constant 0 : i32
    return %c0_i32, %c0_i32_0, %c0_i32_1 : i32, i32, i32
  }
  func.func @transform_8(%arg0: i32) -> (i32, i32) {
    %c0_i32 = arith.constant 0 : i32
    %c0_i32_0 = arith.constant 0 : i32
    %c0_i32_1 = arith.constant 0 : i32
    return %c0_i32, %c0_i32_0 : i32, i32
  }
  func.func @transform_9(%arg0: i32) -> (i32, i32) {
    %c0_i32 = arith.constant 0 : i32
    %c0_i32_0 = arith.constant 0 : i32
    %c0_i32_1 = arith.constant 0 : i32
    return %c0_i32, %c0_i32_0 : i32, i32
  }
  func.func @transform_10(%arg0: i32) -> (i32, i32) {
    %c0_i32 = arith.constant 0 : i32
    %c0_i32_0 = arith.constant 0 : i32
    %c0_i32_1 = arith.constant 0 : i32
    return %c0_i32, %c0_i32_0 : i32, i32
  }
  func.func @transform_11(%arg0: i32) -> (i32, i32) {
    %c0_i32 = arith.constant 0 : i32
    %c0_i32_0 = arith.constant 0 : i32
    %c0_i32_1 = arith.constant 0 : i32
    return %c0_i32, %c0_i32_0 : i32, i32
  }
  func.func @transform_12(%arg0: i32) -> (i32, i32) {
    %c0_i32 = arith.constant 0 : i32
    %c0_i32_0 = arith.constant 0 : i32
    %c0_i32_1 = arith.constant 0 : i32
    return %c0_i32, %c0_i32_0 : i32, i32
  }
  func.func @transform_13(%arg0: i32) -> (i32, i32, i32) {
    %c0_i32 = arith.constant 0 : i32
    %c0_i32_0 = arith.constant 0 : i32
    %c0_i32_1 = arith.constant 0 : i32
    %c0_i32_2 = arith.constant 0 : i32
    return %c0_i32, %c0_i32_0, %c0_i32_1 : i32, i32, i32
  }
  func.func @transform_14(%arg0: i32) -> (i32, i32) {
    %c0_i32 = arith.constant 0 : i32
    %c0_i32_0 = arith.constant 0 : i32
    %c0_i32_1 = arith.constant 0 : i32
    return %c0_i32, %c0_i32_0 : i32, i32
  }
  func.func @transform_15(%arg0: i32) -> (i32, i32) {
    %c0_i32 = arith.constant 0 : i32
    %c0_i32_0 = arith.constant 0 : i32
    %c0_i32_1 = arith.constant 0 : i32
    return %c0_i32, %c0_i32_0 : i32, i32
  }
}

</mosaic_0001>

<llo_original>
// kernel: meisme_forward.1
$region0: #{meisme_forward.1}
  #allocation0 [shape = 'u32[]', space=smem, size = 0x4, offset = 0x4, fixed_abs, tag = 'smem constant byte address 0x4 - core index']
  #allocation1 [shape = 'u32[144,128]{1,0:T(1,128)}', space=vmem, size = 0x12000, scoped, tag = 'internal scratch']
  %s0 = inlined_call_operand.vmem [shape: f32[5,192,28], index: 0, kind: input, shape index: {}]
  %s1 = inlined_call_operand.vmem [shape: f32[5,28,240], index: 1, kind: input, shape index: {}]
  %s2 = inlined_call_operand.vmem [shape: f32[1,120], index: 2, kind: input, shape index: {}]
  %s3 = inlined_call_operand.vmem [shape: f32[320,192], index: 3, kind: input, shape index: {}]
  %s4 = inlined_call_operand.vmem [shape: f32[320,192], index: 4, kind: input, shape index: {}]
  %s5 = inlined_call_operand.vmem [shape: f32[240,120], index: 5, kind: input, shape index: {}]
  %s6 = inlined_call_operand.vmem [shape: f32[240,120], index: 6, kind: input, shape index: {}]
  %s7 = inlined_call_operand.vmem [shape: f32[5,120,160], index: 7, kind: input, shape index: {}]
  %s8 = inlined_call_operand.vmem [shape: f32[1,80], index: 8, kind: input, shape index: {}]
  %s9 = inlined_call_operand.vmem [shape: f32[32,64], index: 9, kind: input, shape index: {}]
  %s10 = inlined_call_operand.vmem [shape: f32[32,64], index: 10, kind: input, shape index: {}]
  %s11 = inlined_call_operand.vmem [shape: f32[160,80], index: 11, kind: input, shape index: {}]
  %s12 = inlined_call_operand.vmem [shape: f32[160,80], index: 12, kind: input, shape index: {}]
  %s13 = inlined_call_operand.vmem [shape: f32[4,80,10], index: 13, kind: input, shape index: {}]
  %s14 = inlined_call_operand.vmem [shape: f32[1,10], index: 14, kind: input, shape index: {}]
  %s15 = inlined_call_operand.hbm [shape: f32[8,10], index: 15, kind: output, shape index: {}]
  %s16 = sld [smem:[#allocation0]]
  $region70: #{meisme_forward.1} parent=0
    _
  %s18 = ssub.s32 1, %s16
  %s19 = scalar_select 0, %s18, %s16
  $region1: #{meisme_forward.1} parent=0
    #allocation2 [shape = 'u8[4096]{0}', space=vmem, size = 0x1000, scoped, tag = 'output window, operand 0, single buffered']
    #allocation3 [shape = 's32[1]{0}', space=sflag, size = 0x4, scoped, tag = 'scoped memory for meisme_forward.1']
    %20 = vsyncpa [#allocation3], 0
    // Predicated region
    $region2: #{meisme_forward.1} parent=1 // pred_check
      _
    $region3: #{meisme_forward.1} parent=1 // pred_check_branch
      %22 = sbr.rel (0) target = $region5
    $region4: #{meisme_forward.1} parent=1 // pred_region
      _
    $region5: #{meisme_forward.1} parent=1 // pred_fallthru
      _
    // Predicated region
    $region6: #{meisme_forward.1} parent=1 // pred_check
      _
    $region7: #{meisme_forward.1} parent=1 // pred_check_branch
      %24 = sbr.rel (0) target = $region9
    $region8: #{meisme_forward.1} parent=1 // pred_region
      _
    $region9: #{meisme_forward.1} parent=1 // pred_fallthru
      _
    // Predicated region
    $region10: #{meisme_forward.1} parent=1 // pred_check
      _
    $region11: #{meisme_forward.1} parent=1 // pred_check_branch
      %26 = sbr.rel (0) target = $region13
    $region12: #{meisme_forward.1} parent=1 // pred_region
      _
    $region13: #{meisme_forward.1} parent=1 // pred_fallthru
      _
    // Predicated region
    $region14: #{meisme_forward.1} parent=1 // pred_check
      _
    $region15: #{meisme_forward.1} parent=1 // pred_check_branch
      %28 = sbr.rel (0) target = $region17
    $region16: #{meisme_forward.1} parent=1 // pred_region
      _
    $region17: #{meisme_forward.1} parent=1 // pred_fallthru
      _
    // Predicated region
    $region18: #{meisme_forward.1} parent=1 // pred_check
      _
    $region19: #{meisme_forward.1} parent=1 // pred_check_branch
      %30 = sbr.rel (0) target = $region21
    $region20: #{meisme_forward.1} parent=1 // pred_region
      _
    $region21: #{meisme_forward.1} parent=1 // pred_fallthru
      _
    // Predicated region
    $region22: #{meisme_forward.1} parent=1 // pred_check
      _
    $region23: #{meisme_forward.1} parent=1 // pred_check_branch
      %32 = sbr.rel (0) target = $region25
    $region24: #{meisme_forward.1} parent=1 // pred_region
      _
    $region25: #{meisme_forward.1} parent=1 // pred_fallthru
      _
    // Predicated region
    $region26: #{meisme_forward.1} parent=1 // pred_check
      _
    $region27: #{meisme_forward.1} parent=1 // pred_check_branch
      %34 = sbr.rel (0) target = $region29
    $region28: #{meisme_forward.1} parent=1 // pred_region
      _
    $region29: #{meisme_forward.1} parent=1 // pred_fallthru
      _
    // Predicated region
    $region30: #{meisme_forward.1} parent=1 // pred_check
      _
    $region31: #{meisme_forward.1} parent=1 // pred_check_branch
      %36 = sbr.rel (0) target = $region33
    $region32: #{meisme_forward.1} parent=1 // pred_region
      _
    $region33: #{meisme_forward.1} parent=1 // pred_fallthru
      _
    // Predicated region
    $region34: #{meisme_forward.1} parent=1 // pred_check
      _
    $region35: #{meisme_forward.1} parent=1 // pred_check_branch
      %38 = sbr.rel (0) target = $region37
    $region36: #{meisme_forward.1} parent=1 // pred_region
      _
    $region37: #{meisme_forward.1} parent=1 // pred_fallthru
      _
    // Predicated region
    $region38: #{meisme_forward.1} parent=1 // pred_check
      _
    $region39: #{meisme_forward.1} parent=1 // pred_check_branch
      %40 = sbr.rel (0) target = $region41
    $region40: #{meisme_forward.1} parent=1 // pred_region
      _
    $region41: #{meisme_forward.1} parent=1 // pred_fallthru
      _
    // Predicated region
    $region42: #{meisme_forward.1} parent=1 // pred_check
      _
    $region43: #{meisme_forward.1} parent=1 // pred_check_branch
      %42 = sbr.rel (0) target = $region45
    $region44: #{meisme_forward.1} parent=1 // pred_region
      _
    $region45: #{meisme_forward.1} parent=1 // pred_fallthru
      _
    // Predicated region
    $region46: #{meisme_forward.1} parent=1 // pred_check
      _
    $region47: #{meisme_forward.1} parent=1 // pred_check_branch
      %44 = sbr.rel (0) target = $region49
    $region48: #{meisme_forward.1} parent=1 // pred_region
      _
    $region49: #{meisme_forward.1} parent=1 // pred_fallthru
      _
    // Predicated region
    $region50: #{meisme_forward.1} parent=1 // pred_check
      _
    $region51: #{meisme_forward.1} parent=1 // pred_check_branch
      %46 = sbr.rel (0) target = $region53
    $region52: #{meisme_forward.1} parent=1 // pred_region
      _
    $region53: #{meisme_forward.1} parent=1 // pred_fallthru
      _
    // Predicated region
    $region54: #{meisme_forward.1} parent=1 // pred_check
      _
    $region55: #{meisme_forward.1} parent=1 // pred_check_branch
      %48 = sbr.rel (0) target = $region57
    $region56: #{meisme_forward.1} parent=1 // pred_region
      _
    $region57: #{meisme_forward.1} parent=1 // pred_fallthru
      _
    // Predicated region
    $region58: #{meisme_forward.1} parent=1 // pred_check
      _
    $region59: #{meisme_forward.1} parent=1 // pred_check_branch
      %50 = sbr.rel (0) target = $region61
    $region60: #{meisme_forward.1} parent=1 // pred_region
      _
    $region61: #{meisme_forward.1} parent=1 // pred_fallthru
      _
    %v51 = vld [vmem:[%s0] sm:$0xff]
    %v52 = vld [vmem:[%s0 + $0x8] sm:$0xff]
    %v53 = vld [vmem:[%s0 + $0x10] sm:$0xff]
    %v54 = vld [vmem:[%s0 + $0x18] sm:$0xff]
    %v55 = vld [vmem:[%s0 + $0x20] sm:$0xff]
    %v56 = vld [vmem:[%s0 + $0x28] sm:$0xff]
    %v57 = vld [vmem:[%s0 + $0x30] sm:$0xff]
    %v58 = vld [vmem:[%s0 + $0x38] sm:$0xff]
    %v59 = vld [vmem:[%s0 + $0x40] sm:$0xff]
    %v60 = vld [vmem:[%s0 + $0x48] sm:$0xff]
    %v61 = vld [vmem:[%s0 + $0x50] sm:$0xff]
    %v62 = vld [vmem:[%s0 + $0x58] sm:$0xff]
    %v63 = vld [vmem:[%s0 + $0x60] sm:$0xff]
    %v64 = vld [vmem:[%s0 + $0x68] sm:$0xff]
    %v65 = vld [vmem:[%s0 + $0x70] sm:$0xff]
    %v66 = vld [vmem:[%s0 + $0x78] sm:$0xff]
    %v67 = vld [vmem:[%s0 + $0x80] sm:$0xff]
    %v68 = vld [vmem:[%s0 + $0x88] sm:$0xff]
    %v69 = vld [vmem:[%s0 + $0x90] sm:$0xff]
    %v70 = vld [vmem:[%s0 + $0x98] sm:$0xff]
    %v71 = vld [vmem:[%s0 + $0xa0] sm:$0xff]
    %v72 = vld [vmem:[%s0 + $0xa8] sm:$0xff]
    %v73 = vld [vmem:[%s0 + $0xb0] sm:$0xff]
    %v74 = vld [vmem:[%s0 + $0xb8] sm:$0xff]
    %v75 = vld [vmem:[%s1] sm:$0xff]
    %v76 = vld [vmem:[%s1 + $0x8] sm:$0xff]
    %v77 = vld [vmem:[%s1 + $0x10] sm:$0xff]
    %v78 = vld [vmem:[%s1 + $0x18] sm:$0xff]
    %v79 = vld [vmem:[%s1 + $0x20] sm:$0xff]
    %v80 = vld [vmem:[%s1 + $0x28] sm:$0xff]
    %v81 = vld [vmem:[%s1 + $0x30] sm:$0xf]
    %v82 = vld [vmem:[%s1 + $0x38] sm:$0xf]
    %s83 = scalar_lea.vmem %s0, 192
    %v84 = vld [vmem:[%s83] sm:$0xff]
    %v85 = vld [vmem:[%s83 + $0x8] sm:$0xff]
    %v86 = vld [vmem:[%s83 + $0x10] sm:$0xff]
    %v87 = vld [vmem:[%s83 + $0x18] sm:$0xff]
    %v88 = vld [vmem:[%s83 + $0x20] sm:$0xff]
    %v89 = vld [vmem:[%s83 + $0x28] sm:$0xff]
    %v90 = vld [vmem:[%s83 + $0x30] sm:$0xff]
    %v91 = vld [vmem:[%s83 + $0x38] sm:$0xff]
    %v92 = vld [vmem:[%s83 + $0x40] sm:$0xff]
    %v93 = vld [vmem:[%s83 + $0x48] sm:$0xff]
    %v94 = vld [vmem:[%s83 + $0x50] sm:$0xff]
    %v95 = vld [vmem:[%s83 + $0x58] sm:$0xff]
    %v96 = vld [vmem:[%s83 + $0x60] sm:$0xff]
    %v97 = vld [vmem:[%s83 + $0x68] sm:$0xff]
    %v98 = vld [vmem:[%s83 + $0x70] sm:$0xff]
    %v99 = vld [vmem:[%s83 + $0x78] sm:$0xff]
    %v100 = vld [vmem:[%s83 + $0x80] sm:$0xff]
    %v101 = vld [vmem:[%s83 + $0x88] sm:$0xff]
    %v102 = vld [vmem:[%s83 + $0x90] sm:$0xff]
    %v103 = vld [vmem:[%s83 + $0x98] sm:$0xff]
    %v104 = vld [vmem:[%s83 + $0xa0] sm:$0xff]
    %v105 = vld [vmem:[%s83 + $0xa8] sm:$0xff]
    %v106 = vld [vmem:[%s83 + $0xb0] sm:$0xff]
    %v107 = vld [vmem:[%s83 + $0xb8] sm:$0xff]
    %s108 = scalar_lea.vmem %s1, 64
    %v109 = vld [vmem:[%s108] sm:$0xff]
    %v110 = vld [vmem:[%s108 + $0x8] sm:$0xff]
    %v111 = vld [vmem:[%s108 + $0x10] sm:$0xff]
    %v112 = vld [vmem:[%s108 + $0x18] sm:$0xff]
    %v113 = vld [vmem:[%s108 + $0x20] sm:$0xff]
    %v114 = vld [vmem:[%s108 + $0x28] sm:$0xff]
    %v115 = vld [vmem:[%s108 + $0x30] sm:$0xf]
    %v116 = vld [vmem:[%s108 + $0x38] sm:$0xf]
    %vm117 = vcmask 228352
    %v119 = vsel %vm117, %v84, 0
    %v122 = vsel %vm117, %v85, 0
    %v125 = vsel %vm117, %v86, 0
    %v128 = vsel %vm117, %v87, 0
    %v131 = vsel %vm117, %v88, 0
    %v134 = vsel %vm117, %v89, 0
    %v137 = vsel %vm117, %v90, 0
    %v140 = vsel %vm117, %v91, 0
    %v143 = vsel %vm117, %v92, 0
    %v146 = vsel %vm117, %v93, 0
    %v149 = vsel %vm117, %v94, 0
    %v152 = vsel %vm117, %v95, 0
    %v155 = vsel %vm117, %v96, 0
    %v158 = vsel %vm117, %v97, 0
    %v161 = vsel %vm117, %v98, 0
    %v164 = vsel %vm117, %v99, 0
    %v167 = vsel %vm117, %v100, 0
    %v170 = vsel %vm117, %v101, 0
    %v173 = vsel %vm117, %v102, 0
    %v176 = vsel %vm117, %v103, 0
    %v179 = vsel %vm117, %v104, 0
    %v182 = vsel %vm117, %v105, 0
    %v185 = vsel %vm117, %v106, 0
    %v188 = vsel %vm117, %v107, 0
    %vm190 = vcmask 1043456
    %v192 = vsel %vm190, %v115, 0
    %v195 = vsel %vm190, %v116, 0
    %197 = vmatprep.subr.mxu0 %v110
    %198 = vmatpush1.msra.mxu0 %v109
    %199 = vmatprep.subr.mxu0 %v112
    %200 = vmatpush1.msra.mxu0 %v111
    %201 = vmatprep.subr.mxu0 %v114
    %202 = vmatpush1.msra.mxu0 %v113
    %203 = vmatprep.subr.mxu0 %v195
    %204 = vmatpush1.msra.mxu0 %v192
    %205 = vmatprep.subr.mxu0 0.0
    %206 = vmatpush1.msra.mxu0 0.0
    %207 = vmatprep.subr.mxu0 0.0
    %208 = vmatpush1.msra.mxu0 0.0
    %209 = vmatprep.subr.mxu0 0.0
    %210 = vmatpush1.msra.mxu0 0.0
    %211 = vmatprep.subr.mxu0 0.0
    %212 = vmatpush1.msra.mxu0 0.0
    %213 = vmatprep.subr.mxu0 0.0
    %214 = vmatpush1.msra.mxu0 0.0
    %215 = vmatprep.subr.mxu0 0.0
    %216 = vmatpush1.msra.mxu0 0.0
    %217 = vmatprep.subr.mxu0 0.0
    %218 = vmatpush1.msra.mxu0 0.0
    %219 = vmatprep.subr.mxu0 0.0
    %220 = vmatpush1.msra.mxu0 0.0
    %221 = vmatprep.subr.mxu0 0.0
    %222 = vmatpush1.msra.mxu0 0.0
    %223 = vmatprep.subr.mxu0 0.0
    %224 = vmatpush1.msra.mxu0 0.0
    %225 = vmatprep.subr.mxu0 0.0
    %226 = vmatpush1.msra.mxu0 0.0
    %227 = vmatprep.subr.mxu0 0.0
    %228 = vmatpush1.msra.mxu0 0.0
    %229 = vmatprep.subr.mxu0 0.0
    %230 = vmatpush1.msra.mxu0 0.0
    %231 = vmatprep.subr.mxu0 0.0
    %232 = vmatpush1.msra.mxu0 0.0
    %233 = vmatprep.subr.mxu0 0.0
    %234 = vmatpush1.msra.mxu0 0.0
    %235 = vmatprep.subr.mxu0 0.0
    %236 = vmatpush1.msra.mxu0 0.0
    %237 = vmatprep.subr.mxu0 0.0
    %238 = vmatpush1.msra.mxu0 0.0
    %239 = vmatprep.subr.mxu0 0.0
    %240 = vmatpush1.msra.mxu0 0.0
    %241 = vmatprep.subr.mxu0 0.0
    %242 = vmatpush1.msra.mxu0 0.0
    %243 = vmatprep.subr.mxu0 0.0
    %244 = vmatpush1.msra.mxu0 0.0
    %245 = vmatprep.subr.mxu0 0.0
    %246 = vmatpush1.msra.mxu0 0.0
    %247 = vmatprep.subr.mxu0 0.0
    %248 = vmatpush1.msra.mxu0 0.0
    %249 = vmatprep.subr.mxu0 0.0
    %250 = vmatpush1.msra.mxu0 0.0
    %251 = vmatprep.subr.mxu0 0.0
    %252 = vmatpush1.msra.mxu0 0.0
    %253 = vmatprep.subr.mxu0 0.0
    %254 = vmatpush1.msra.mxu0 0.0
    %255 = vmatprep.subr.mxu0 0.0
    %256 = vmatpush1.msra.mxu0 0.0
    %257 = vmatprep.subr.mxu0 0.0
    %258 = vmatpush1.msra.mxu0 0.0
    %259 = vmatprep.subr.mxu0 0.0
    %260 = vmatpush1.msra.mxu0 0.0
    %261 = vmatprep.mubr.f32.mxu0 0.0
    %262 = vmatmul.mubr.f32.gmra.mrb[0].mxu0 %v119
    %v263 = vpop.f32.mrb[0].mxu0
    %v264 = vadd.f32 0.0, %v263
    %v265 = vpop.f32.mrb[0].mxu0
    %v266 = vadd.f32 0.0, %v265
    %267 = vmatprep.mubr.f32.mxu0 0.0
    %268 = vmatmul.mubr.f32.gmra.mrb[0].mxu0 %v122
    %v269 = vpop.f32.mrb[0].mxu0
    %v270 = vadd.f32 0.0, %v269
    %v271 = vpop.f32.mrb[0].mxu0
    %v272 = vadd.f32 0.0, %v271
    %273 = vmatprep.mubr.f32.mxu0 0.0
    %274 = vmatmul.mubr.f32.gmra.mrb[0].mxu0 %v125
    %v275 = vpop.f32.mrb[0].mxu0
    %v276 = vadd.f32 0.0, %v275
    %v277 = vpop.f32.mrb[0].mxu0
    %v278 = vadd.f32 0.0, %v277
    %279 = vmatprep.mubr.f32.mxu0 0.0
    %280 = vmatmul.mubr.f32.gmra.mrb[0].mxu0 %v128
    %v281 = vpop.f32.mrb[0].mxu0
    %v282 = vadd.f32 0.0, %v281
    %v283 = vpop.f32.mrb[0].mxu0
    %v284 = vadd.f32 0.0, %v283
    %285 = vmatprep.mubr.f32.mxu0 0.0
    %286 = vmatmul.mubr.f32.gmra.mrb[0].mxu0 %v131
    %v287 = vpop.f32.mrb[0].mxu0
    %v288 = vadd.f32 0.0, %v287
    %v289 = vpop.f32.mrb[0].mxu0
    %v290 = vadd.f32 0.0, %v289
    %291 = vmatprep.mubr.f32.mxu0 0.0
    %292 = vmatmul.mubr.f32.gmra.mrb[0].mxu0 %v134
    %v293 = vpop.f32.mrb[0].mxu0
    %v294 = vadd.f32 0.0, %v293
    %v295 = vpop.f32.mrb[0].mxu0
    %v296 = vadd.f32 0.0, %v295
    %297 = vmatprep.mubr.f32.mxu0 0.0
    %298 = vmatmul.mubr.f32.gmra.mrb[0].mxu0 %v137
    %v299 = vpop.f32.mrb[0].mxu0
    %v300 = vadd.f32 0.0, %v299
    %v301 = vpop.f32.mrb[0].mxu0
    %v302 = vadd.f32 0.0, %v301
    %303 = vmatprep.mubr.f32.mxu0 0.0
    %304 = vmatmul.mubr.f32.gmra.mrb[0].mxu0 %v140
    %v305 = vpop.f32.mrb[0].mxu0
    %v306 = vadd.f32 0.0, %v305
    %v307 = vpop.f32.mrb[0].mxu0
    %v308 = vadd.f32 0.0, %v307
    %309 = vmatprep.mubr.f32.mxu0 0.0
    %310 = vmatmul.mubr.f32.gmra.mrb[0].mxu0 %v143
    %v311 = vpop.f32.mrb[0].mxu0
    %v312 = vadd.f32 0.0, %v311
    %v313 = vpop.f32.mrb[0].mxu0
    %v314 = vadd.f32 0.0, %v313
    %315 = vmatprep.mubr.f32.mxu0 0.0
    %316 = vmatmul.mubr.f32.gmra.mrb[0].mxu0 %v146
    %v317 = vpop.f32.mrb[0].mxu0
    %v318 = vadd.f32 0.0, %v317
    %v319 = vpop.f32.mrb[0].mxu0
    %v320 = vadd.f32 0.0, %v319
    %321 = vmatprep.mubr.f32.mxu0 0.0
    %322 = vmatmul.mubr.f32.gmra.mrb[0].mxu0 %v149
    %v323 = vpop.f32.mrb[0].mxu0
    %v324 = vadd.f32 0.0, %v323
    %v325 = vpop.f32.mrb[0].mxu0
    %v326 = vadd.f32 0.0, %v325
    %327 = vmatprep.mubr.f32.mxu0 0.0
    %328 = vmatmul.mubr.f32.gmra.mrb[0].mxu0 %v152
    %v329 = vpop.f32.mrb[0].mxu0
    %v330 = vadd.f32 0.0, %v329
    %v331 = vpop.f32.mrb[0].mxu0
    %v332 = vadd.f32 0.0, %v331
    %333 = vmatprep.mubr.f32.mxu0 0.0
    %334 = vmatmul.mubr.f32.gmra.mrb[0].mxu0 %v155
    %v335 = vpop.f32.mrb[0].mxu0
    %v336 = vadd.f32 0.0, %v335
    %v337 = vpop.f32.mrb[0].mxu0
    %v338 = vadd.f32 0.0, %v337
    %339 = vmatprep.mubr.f32.mxu0 0.0
    %340 = vmatmul.mubr.f32.gmra.mrb[0].mxu0 %v158
    %v341 = vpop.f32.mrb[0].mxu0
    %v342 = vadd.f32 0.0, %v341
    %v343 = vpop.f32.mrb[0].mxu0
    %v344 = vadd.f32 0.0, %v343
    %345 = vmatprep.mubr.f32.mxu0 0.0
    %346 = vmatmul.mubr.f32.gmra.mrb[0].mxu0 %v161
    %v347 = vpop.f32.mrb[0].mxu0
    %v348 = vadd.f32 0.0, %v347
    %v349 = vpop.f32.mrb[0].mxu0
    %v350 = vadd.f32 0.0, %v349
    %351 = vmatprep.mubr.f32.mxu0 0.0
    %352 = vmatmul.mubr.f32.gmra.mrb[0].mxu0 %v164
    %v353 = vpop.f32.mrb[0].mxu0
    %v354 = vadd.f32 0.0, %v353
    %v355 = vpop.f32.mrb[0].mxu0
    %v356 = vadd.f32 0.0, %v355
    %357 = vmatprep.mubr.f32.mxu0 0.0
    %358 = vmatmul.mubr.f32.gmra.mrb[0].mxu0 %v167
    %v359 = vpop.f32.mrb[0].mxu0
    %v360 = vadd.f32 0.0, %v359
    %v361 = vpop.f32.mrb[0].mxu0
    %v362 = vadd.f32 0.0, %v361
    %363 = vmatprep.mubr.f32.mxu0 0.0
    %364 = vmatmul.mubr.f32.gmra.mrb[0].mxu0 %v170
    %v365 = vpop.f32.mrb[0].mxu0
    %v366 = vadd.f32 0.0, %v365
    %v367 = vpop.f32.mrb[0].mxu0
    %v368 = vadd.f32 0.0, %v367
    %369 = vmatprep.mubr.f32.mxu0 0.0
    %370 = vmatmul.mubr.f32.gmra.mrb[0].mxu0 %v173
    %v371 = vpop.f32.mrb[0].mxu0
    %v372 = vadd.f32 0.0, %v371
    %v373 = vpop.f32.mrb[0].mxu0
    %v374 = vadd.f32 0.0, %v373
    %375 = vmatprep.mubr.f32.mxu0 0.0
    %376 = vmatmul.mubr.f32.gmra.mrb[0].mxu0 %v176
    %v377 = vpop.f32.mrb[0].mxu0
    %v378 = vadd.f32 0.0, %v377
    %v379 = vpop.f32.mrb[0].mxu0
    %v380 = vadd.f32 0.0, %v379
    %381 = vmatprep.mubr.f32.mxu0 0.0
    %382 = vmatmul.mubr.f32.gmra.mrb[0].mxu0 %v179
    %v383 = vpop.f32.mrb[0].mxu0
    %v384 = vadd.f32 0.0, %v383
    %v385 = vpop.f32.mrb[0].mxu0
    %v386 = vadd.f32 0.0, %v385
    %387 = vmatprep.mubr.f32.mxu0 0.0
    %388 = vmatmul.mubr.f32.gmra.mrb[0].mxu0 %v182
    %v389 = vpop.f32.mrb[0].mxu0
    %v390 = vadd.f32 0.0, %v389
    %v391 = vpop.f32.mrb[0].mxu0
    %v392 = vadd.f32 0.0, %v391
    %393 = vmatprep.mubr.f32.mxu0 0.0
    %394 = vmatmul.mubr.f32.gmra.mrb[0].mxu0 %v185
    %v395 = vpop.f32.mrb[0].mxu0
    %v396 = vadd.f32 0.0, %v395
    %v397 = vpop.f32.mrb[0].mxu0
    %v398 = vadd.f32 0.0, %v397
    %399 = vmatprep.mubr.f32.mxu0 0.0
    %400 = vmatmul.mubr.f32.gmra.mrb[0].mxu0 %v188
    %v401 = vpop.f32.mrb[0].mxu0
    %v402 = vadd.f32 0.0, %v401
    %v403 = vpop.f32.mrb[0].mxu0
    %v404 = vadd.f32 0.0, %v403
    %405 = vdwg.mxu0
    %v407 = vsel %vm117, %v51, 0
    %v410 = vsel %vm117, %v52, 0
    %v413 = vsel %vm117, %v53, 0
    %v416 = vsel %vm117, %v54, 0
    %v419 = vsel %vm117, %v55, 0
    %v422 = vsel %vm117, %v56, 0
    %v425 = vsel %vm117, %v57, 0
    %v428 = vsel %vm117, %v58, 0
    %v431 = vsel %vm117, %v59, 0
    %v434 = vsel %vm117, %v60, 0
    %v437 = vsel %vm117, %v61, 0
    %v440 = vsel %vm117, %v62, 0
    %v443 = vsel %vm117, %v63, 0
    %v446 = vsel %vm117, %v64, 0
    %v449 = vsel %vm117, %v65, 0
    %v452 = vsel %vm117, %v66, 0
    %v455 = vsel %vm117, %v67, 0
    %v458 = vsel %vm117, %v68, 0
    %v461 = vsel %vm117, %v69, 0
    %v464 = vsel %vm117, %v70, 0
    %v467 = vsel %vm117, %v71, 0
    %v470 = vsel %vm117, %v72, 0
    %v473 = vsel %vm117, %v73, 0
    %v476 = vsel %vm117, %v74, 0
    %v479 = vsel %vm190, %v81, 0
    %v482 = vsel %vm190, %v82, 0
    %484 = vmatprep.subr.mxu0 %v76
    %485 = vmatpush1.msra.mxu0 %v75
    %486 = vmatprep.subr.mxu0 %v78
    %487 = vmatpush1.msra.mxu0 %v77
    %488 = vmatprep.subr.mxu0 %v80
    %489 = vmatpush1.msra.mxu0 %v79
    %490 = vmatprep.subr.mxu0 %v482
    %491 = vmatpush1.msra.mxu0 %v479
    %492 = vmatprep.subr.mxu0 0.0
    %493 = vmatpush1.msra.mxu0 0.0
    %494 = vmatprep.subr.mxu0 0.0
    %495 = vmatpush1.msra.mxu0 0.0
    %496 = vmatprep.subr.mxu0 0.0
    %497 = vmatpush1.msra.mxu0 0.0
    %498 = vmatprep.subr.mxu0 0.0
    %499 = vmatpush1.msra.mxu0 0.0
    %500 = vmatprep.subr.mxu0 0.0
    %501 = vmatpush1.msra.mxu0 0.0
    %502 = vmatprep.subr.mxu0 0.0
    %503 = vmatpush1.msra.mxu0 0.0
    %504 = vmatprep.subr.mxu0 0.0
    %505 = vmatpush1.msra.mxu0 0.0
    %506 = vmatprep.subr.mxu0 0.0
    %507 = vmatpush1.msra.mxu0 0.0
    %508 = vmatprep.subr.mxu0 0.0
    %509 = vmatpush1.msra.mxu0 0.0
    %510 = vmatprep.subr.mxu0 0.0
    %511 = vmatpush1.msra.mxu0 0.0
    %512 = vmatprep.subr.mxu0 0.0
    %513 = vmatpush1.msra.mxu0 0.0
    %514 = vmatprep.subr.mxu0 0.0
    %515 = vmatpush1.msra.mxu0 0.0
    %516 = vmatprep.subr.mxu0 0.0
    %517 = vmatpush1.msra.mxu0 0.0
    %518 = vmatprep.subr.mxu0 0.0
    %519 = vmatpush1.msra.mxu0 0.0
    %520 = vmatprep.subr.mxu0 0.0
    %521 = vmatpush1.msra.mxu0 0.0
    %522 = vmatprep.subr.mxu0 0.0
    %523 = vmatpush1.msra.mxu0 0.0
    %524 = vmatprep.subr.mxu0 0.0
    %525 = vmatpush1.msra.mxu0 0.0
    %526 = vmatprep.subr.mxu0 0.0
    %527 = vmatpush1.msra.mxu0 0.0
    %528 = vmatprep.subr.mxu0 0.0
    %529 = vmatpush1.msra.mxu0 0.0
    %530 = vmatprep.subr.mxu0 0.0
    %531 = vmatpush1.msra.mxu0 0.0
    %532 = vmatprep.subr.mxu0 0.0
    %533 = vmatpush1.msra.mxu0 0.0
    %534 = vmatprep.subr.mxu0 0.0
    %535 = vmatpush1.msra.mxu0 0.0
    %536 = vmatprep.subr.mxu0 0.0
    %537 = vmatpush1.msra.mxu0 0.0
    %538 = vmatprep.subr.mxu0 0.0
    %539 = vmatpush1.msra.mxu0 0.0
    %540 = vmatprep.subr.mxu0 0.0
    %541 = vmatpush1.msra.mxu0 0.0
    %542 = vmatprep.subr.mxu0 0.0
    %543 = vmatpush1.msra.mxu0 0.0
    %544 = vmatprep.subr.mxu0 0.0
    %545 = vmatpush1.msra.mxu0 0.0
    %546 = vmatprep.subr.mxu0 0.0
    %547 = vmatpush1.msra.mxu0 0.0
    %548 = vmatprep.mubr.f32.mxu0 0.0
    %549 = vmatmul.mubr.f32.gmra.mrb[0].mxu0 %v407
    %v550 = vpop.f32.mrb[0].mxu0
    %v551 = vadd.f32 %v264, %v550
    %v552 = vpop.f32.mrb[0].mxu0
    %v553 = vadd.f32 %v266, %v552
    %554 = vmatprep.mubr.f32.mxu0 0.0
    %555 = vmatmul.mubr.f32.gmra.mrb[0].mxu0 %v410
    %v556 = vpop.f32.mrb[0].mxu0
    %v557 = vadd.f32 %v270, %v556
    %v558 = vpop.f32.mrb[0].mxu0
    %v559 = vadd.f32 %v272, %v558
    %560 = vmatprep.mubr.f32.mxu0 0.0
    %561 = vmatmul.mubr.f32.gmra.mrb[0].mxu0 %v413
    %v562 = vpop.f32.mrb[0].mxu0
    %v563 = vadd.f32 %v276, %v562
    %v564 = vpop.f32.mrb[0].mxu0
    %v565 = vadd.f32 %v278, %v564
    %566 = vmatprep.mubr.f32.mxu0 0.0
    %567 = vmatmul.mubr.f32.gmra.mrb[0].mxu0 %v416
    %v568 = vpop.f32.mrb[0].mxu0
    %v569 = vadd.f32 %v282, %v568
    %v570 = vpop.f32.mrb[0].mxu0
    %v571 = vadd.f32 %v284, %v570
    %572 = vmatprep.mubr.f32.mxu0 0.0
    %573 = vmatmul.mubr.f32.gmra.mrb[0].mxu0 %v419
    %v574 = vpop.f32.mrb[0].mxu0
    %v575 = vadd.f32 %v288, %v574
    %v576 = vpop.f32.mrb[0].mxu0
    %v577 = vadd.f32 %v290, %v576
    %578 = vmatprep.mubr.f32.mxu0 0.0
    %579 = vmatmul.mubr.f32.gmra.mrb[0].mxu0 %v422
    %v580 = vpop.f32.mrb[0].mxu0
    %v581 = vadd.f32 %v294, %v580
    %v582 = vpop.f32.mrb[0].mxu0
    %v583 = vadd.f32 %v296, %v582
    %584 = vmatprep.mubr.f32.mxu0 0.0
    %585 = vmatmul.mubr.f32.gmra.mrb[0].mxu0 %v425
    %v586 = vpop.f32.mrb[0].mxu0
    %v587 = vadd.f32 %v300, %v586
    %v588 = vpop.f32.mrb[0].mxu0
    %v589 = vadd.f32 %v302, %v588
    %590 = vmatprep.mubr.f32.mxu0 0.0
    %591 = vmatmul.mubr.f32.gmra.mrb[0].mxu0 %v428
    %v592 = vpop.f32.mrb[0].mxu0
    %v593 = vadd.f32 %v306, %v592
    %v594 = vpop.f32.mrb[0].mxu0
    %v595 = vadd.f32 %v308, %v594
    %596 = vmatprep.mubr.f32.mxu0 0.0
    %597 = vmatmul.mubr.f32.gmra.mrb[0].mxu0 %v431
    %v598 = vpop.f32.mrb[0].mxu0
    %v599 = vadd.f32 %v312, %v598
    %v600 = vpop.f32.mrb[0].mxu0
    %v601 = vadd.f32 %v314, %v600
    %602 = vmatprep.mubr.f32.mxu0 0.0
    %603 = vmatmul.mubr.f32.gmra.mrb[0].mxu0 %v434
    %v604 = vpop.f32.mrb[0].mxu0
    %v605 = vadd.f32 %v318, %v604
    %v606 = vpop.f32.mrb[0].mxu0
    %v607 = vadd.f32 %v320, %v606
    %608 = vmatprep.mubr.f32.mxu0 0.0
    %609 = vmatmul.mubr.f32.gmra.mrb[0].mxu0 %v437
    %v610 = vpop.f32.mrb[0].mxu0
    %v611 = vadd.f32 %v324, %v610
    %v612 = vpop.f32.mrb[0].mxu0
    %v613 = vadd.f32 %v326, %v612
    %614 = vmatprep.mubr.f32.mxu0 0.0
    %615 = vmatmul.mubr.f32.gmra.mrb[0].mxu0 %v440
    %v616 = vpop.f32.mrb[0].mxu0
    %v617 = vadd.f32 %v330, %v616
    %v618 = vpop.f32.mrb[0].mxu0
    %v619 = vadd.f32 %v332, %v618
    %620 = vmatprep.mubr.f32.mxu0 0.0
    %621 = vmatmul.mubr.f32.gmra.mrb[0].mxu0 %v443
    %v622 = vpop.f32.mrb[0].mxu0
    %v623 = vadd.f32 %v336, %v622
    %v624 = vpop.f32.mrb[0].mxu0
    %v625 = vadd.f32 %v338, %v624
    %626 = vmatprep.mubr.f32.mxu0 0.0
    %627 = vmatmul.mubr.f32.gmra.mrb[0].mxu0 %v446
    %v628 = vpop.f32.mrb[0].mxu0
    %v629 = vadd.f32 %v342, %v628
    %v630 = vpop.f32.mrb[0].mxu0
    %v631 = vadd.f32 %v344, %v630
    %632 = vmatprep.mubr.f32.mxu0 0.0
    %633 = vmatmul.mubr.f32.gmra.mrb[0].mxu0 %v449
    %v634 = vpop.f32.mrb[0].mxu0
    %v635 = vadd.f32 %v348, %v634
    %v636 = vpop.f32.mrb[0].mxu0
    %v637 = vadd.f32 %v350, %v636
    %638 = vmatprep.mubr.f32.mxu0 0.0
    %639 = vmatmul.mubr.f32.gmra.mrb[0].mxu0 %v452
    %v640 = vpop.f32.mrb[0].mxu0
    %v641 = vadd.f32 %v354, %v640
    %v642 = vpop.f32.mrb[0].mxu0
    %v643 = vadd.f32 %v356, %v642
    %644 = vmatprep.mubr.f32.mxu0 0.0
    %645 = vmatmul.mubr.f32.gmra.mrb[0].mxu0 %v455
    %v646 = vpop.f32.mrb[0].mxu0
    %v647 = vadd.f32 %v360, %v646
    %v648 = vpop.f32.mrb[0].mxu0
    %v649 = vadd.f32 %v362, %v648
    %650 = vmatprep.mubr.f32.mxu0 0.0
    %651 = vmatmul.mubr.f32.gmra.mrb[0].mxu0 %v458
    %v652 = vpop.f32.mrb[0].mxu0
    %v653 = vadd.f32 %v366, %v652
    %v654 = vpop.f32.mrb[0].mxu0
    %v655 = vadd.f32 %v368, %v654
    %656 = vmatprep.mubr.f32.mxu0 0.0
    %657 = vmatmul.mubr.f32.gmra.mrb[0].mxu0 %v461
    %v658 = vpop.f32.mrb[0].mxu0
    %v659 = vadd.f32 %v372, %v658
    %v660 = vpop.f32.mrb[0].mxu0
    %v661 = vadd.f32 %v374, %v660
    %662 = vmatprep.mubr.f32.mxu0 0.0
    %663 = vmatmul.mubr.f32.gmra.mrb[0].mxu0 %v464
    %v664 = vpop.f32.mrb[0].mxu0
    %v665 = vadd.f32 %v378, %v664
    %v666 = vpop.f32.mrb[0].mxu0
    %v667 = vadd.f32 %v380, %v666
    %668 = vmatprep.mubr.f32.mxu0 0.0
    %669 = vmatmul.mubr.f32.gmra.mrb[0].mxu0 %v467
    %v670 = vpop.f32.mrb[0].mxu0
    %v671 = vadd.f32 %v384, %v670
    %v672 = vpop.f32.mrb[0].mxu0
    %v673 = vadd.f32 %v386, %v672
    %674 = vmatprep.mubr.f32.mxu0 0.0
    %675 = vmatmul.mubr.f32.gmra.mrb[0].mxu0 %v470
    %v676 = vpop.f32.mrb[0].mxu0
    %v677 = vadd.f32 %v390, %v676
    %v678 = vpop.f32.mrb[0].mxu0
    %v679 = vadd.f32 %v392, %v678
    %680 = vmatprep.mubr.f32.mxu0 0.0
    %681 = vmatmul.mubr.f32.gmra.mrb[0].mxu0 %v473
    %v682 = vpop.f32.mrb[0].mxu0
    %v683 = vadd.f32 %v396, %v682
    %v684 = vpop.f32.mrb[0].mxu0
    %v685 = vadd.f32 %v398, %v684
    %686 = vmatprep.mubr.f32.mxu0 0.0
    %687 = vmatmul.mubr.f32.gmra.mrb[0].mxu0 %v476
    %v688 = vpop.f32.mrb[0].mxu0
    %v689 = vadd.f32 %v402, %v688
    %v690 = vpop.f32.mrb[0].mxu0
    %v691 = vadd.f32 %v404, %v690
    %692 = vdwg.mxu0
    %s693 = scalar_lea.vmem %s0, 384
    %v694 = vld [vmem:[%s693] sm:$0xff]
    %v695 = vld [vmem:[%s693 + $0x8] sm:$0xff]
    %v696 = vld [vmem:[%s693 + $0x10] sm:$0xff]
    %v697 = vld [vmem:[%s693 + $0x18] sm:$0xff]
    %v698 = vld [vmem:[%s693 + $0x20] sm:$0xff]
    %v699 = vld [vmem:[%s693 + $0x28] sm:$0xff]
    %v700 = vld [vmem:[%s693 + $0x30] sm:$0xff]
    %v701 = vld [vmem:[%s693 + $0x38] sm:$0xff]
    %v702 = vld [vmem:[%s693 + $0x40] sm:$0xff]
    %v703 = vld [vmem:[%s693 + $0x48] sm:$0xff]
    %v704 = vld [vmem:[%s693 + $0x50] sm:$0xff]
    %v705 = vld [vmem:[%s693 + $0x58] sm:$0xff]
    %v706 = vld [vmem:[%s693 + $0x60] sm:$0xff]
    %v707 = vld [vmem:[%s693 + $0x68] sm:$0xff]
    %v708 = vld [vmem:[%s693 + $0x70] sm:$0xff]
    %v709 = vld [vmem:[%s693 + $0x78] sm:$0xff]
    %v710 = vld [vmem:[%s693 + $0x80] sm:$0xff]
    %v711 = vld [vmem:[%s693 + $0x88] sm:$0xff]
    %v712 = vld [vmem:[%s693 + $0x90] sm:$0xff]
    %v713 = vld [vmem:[%s693 + $0x98] sm:$0xff]
    %v714 = vld [vmem:[%s693 + $0xa0] sm:$0xff]
    %v715 = vld [vmem:[%s693 + $0xa8] sm:$0xff]
    %v716 = vld [vmem:[%s693 + $0xb0] sm:$0xff]
    %v717 = vld [vmem:[%s693 + $0xb8] sm:$0xff]
    %s718 = scalar_lea.vmem %s1, 128
    %v719 = vld [vmem:[%s718] sm:$0xff]
    %v720 = vld [vmem:[%s718 + $0x8] sm:$0xff]
    %v721 = vld [vmem:[%s718 + $0x10] sm:$0xff]
    %v722 = vld [vmem:[%s718 + $0x18] sm:$0xff]
    %v723 = vld [vmem:[%s718 + $0x20] sm:$0xff]
    %v724 = vld [vmem:[%s718 + $0x28] sm:$0xff]
    %v725 = vld [vmem:[%s718 + $0x30] sm:$0xf]
    %v726 = vld [vmem:[%s718 + $0x38] sm:$0xf]
    %v728 = vsel %vm117, %v694, 0
    %v731 = vsel %vm117, %v695, 0
    %v734 = vsel %vm117, %v696, 0
    %v737 = vsel %vm117, %v697, 0
    %v740 = vsel %vm117, %v698, 0
    %v743 = vsel %vm117, %v699, 0
    %v746 = vsel %vm117, %v700, 0
    %v749 = vsel %vm117, %v701, 0
    %v752 = vsel %vm117, %v702, 0
    %v755 = vsel %vm117, %v703, 0
    %v758 = vsel %vm117, %v704, 0
    %v761 = vsel %vm117, %v705, 0
    %v764 = vsel %vm117, %v706, 0
    %v767 = vsel %vm117, %v707, 0
    %v770 = vsel %vm117, %v708, 0
    %v773 = vsel %vm117, %v709, 0
    %v776 = vsel %vm117, %v710, 0
    %v779 = vsel %vm117, %v711, 0
    %v782 = vsel %vm117, %v712, 0
    %v785 = vsel %vm117, %v713, 0
    %v788 = vsel %vm117, %v714, 0
    %v791 = vsel %vm117, %v715, 0
    %v794 = vsel %vm117, %v716, 0
    %v797 = vsel %vm117, %v717, 0
    %v800 = vsel %vm190, %v725, 0
    %v803 = vsel %vm190, %v726, 0
    %805 = vmatprep.subr.mxu0 %v720
    %806 = vmatpush1.msra.mxu0 %v719
    %807 = vmatprep.subr.mxu0 %v722
    %808 = vmatpush1.msra.mxu0 %v721
    %809 = vmatprep.subr.mxu0 %v724
    %810 = vmatpush1.msra.mxu0 %v723
    %811 = vmatprep.subr.mxu0 %v803
    %812 = vmatpush1.msra.mxu0 %v800
    %813 = vmatprep.subr.mxu0 0.0
    %814 = vmatpush1.msra.mxu0 0.0
    %815 = vmatprep.subr.mxu0 0.0
    %816 = vmatpush1.msra.mxu0 0.0
    %817 = vmatprep.subr.mxu0 0.0
    %818 = vmatpush1.msra.mxu0 0.0
    %819 = vmatprep.subr.mxu0 0.0
    %820 = vmatpush1.msra.mxu0 0.0
    %821 = vmatprep.subr.mxu0 0.0
    %822 = vmatpush1.msra.mxu0 0.0
    %823 = vmatprep.subr.mxu0 0.0
    %824 = vmatpush1.msra.mxu0 0.0
    %825 = vmatprep.subr.mxu0 0.0
    %826 = vmatpush1.msra.mxu0 0.0
    %827 = vmatprep.subr.mxu0 0.0
    %828 = vmatpush1.msra.mxu0 0.0
    %829 = vmatprep.subr.mxu0 0.0
    %830 = vmatpush1.msra.mxu0 0.0
    %831 = vmatprep.subr.mxu0 0.0
    %832 = vmatpush1.msra.mxu0 0.0
    %833 = vmatprep.subr.mxu0 0.0
    %834 = vmatpush1.msra.mxu0 0.0
    %835 = vmatprep.subr.mxu0 0.0
    %836 = vmatpush1.msra.mxu0 0.0
    %837 = vmatprep.subr.mxu0 0.0
    %838 = vmatpush1.msra.mxu0 0.0
    %839 = vmatprep.subr.mxu0 0.0
    %840 = vmatpush1.msra.mxu0 0.0
    %841 = vmatprep.subr.mxu0 0.0
    %842 = vmatpush1.msra.mxu0 0.0
    %843 = vmatprep.subr.mxu0 0.0
    %844 = vmatpush1.msra.mxu0 0.0
    %845 = vmatprep.subr.mxu0 0.0
    %846 = vmatpush1.msra.mxu0 0.0
    %847 = vmatprep.subr.mxu0 0.0
    %848 = vmatpush1.msra.mxu0 0.0
    %849 = vmatprep.subr.mxu0 0.0
    %850 = vmatpush1.msra.mxu0 0.0
    %851 = vmatprep.subr.mxu0 0.0
    %852 = vmatpush1.msra.mxu0 0.0
    %853 = vmatprep.subr.mxu0 0.0
    %854 = vmatpush1.msra.mxu0 0.0
    %855 = vmatprep.subr.mxu0 0.0
    %856 = vmatpush1.msra.mxu0 0.0
    %857 = vmatprep.subr.mxu0 0.0
    %858 = vmatpush1.msra.mxu0 0.0
    %859 = vmatprep.subr.mxu0 0.0
    %860 = vmatpush1.msra.mxu0 0.0
    %861 = vmatprep.subr.mxu0 0.0
    %862 = vmatpush1.msra.mxu0 0.0
    %863 = vmatprep.subr.mxu0 0.0
    %864 = vmatpush1.msra.mxu0 0.0
    %865 = vmatprep.subr.mxu0 0.0
    %866 = vmatpush1.msra.mxu0 0.0
    %867 = vmatprep.subr.mxu0 0.0
    %868 = vmatpush1.msra.mxu0 0.0
    %869 = vmatprep.mubr.f32.mxu0 0.0
    %870 = vmatmul.mubr.f32.gmra.mrb[0].mxu0 %v728
    %v871 = vpop.f32.mrb[0].mxu0
    %v872 = vadd.f32 0.0, %v871
    %v873 = vpop.f32.mrb[0].mxu0
    %v874 = vadd.f32 0.0, %v873
    %875 = vmatprep.mubr.f32.mxu0 0.0
    %876 = vmatmul.mubr.f32.gmra.mrb[0].mxu0 %v731
    %v877 = vpop.f32.mrb[0].mxu0
    %v878 = vadd.f32 0.0, %v877
    %v879 = vpop.f32.mrb[0].mxu0
    %v880 = vadd.f32 0.0, %v879
    %881 = vmatprep.mubr.f32.mxu0 0.0
    %882 = vmatmul.mubr.f32.gmra.mrb[0].mxu0 %v734
    %v883 = vpop.f32.mrb[0].mxu0
    %v884 = vadd.f32 0.0, %v883
    %v885 = vpop.f32.mrb[0].mxu0
    %v886 = vadd.f32 0.0, %v885
    %887 = vmatprep.mubr.f32.mxu0 0.0
    %888 = vmatmul.mubr.f32.gmra.mrb[0].mxu0 %v737
    %v889 = vpop.f32.mrb[0].mxu0
    %v890 = vadd.f32 0.0, %v889
    %v891 = vpop.f32.mrb[0].mxu0
    %v892 = vadd.f32 0.0, %v891
    %893 = vmatprep.mubr.f32.mxu0 0.0
    %894 = vmatmul.mubr.f32.gmra.mrb[0].mxu0 %v740
    %v895 = vpop.f32.mrb[0].mxu0
    %v896 = vadd.f32 0.0, %v895
    %v897 = vpop.f32.mrb[0].mxu0
    %v898 = vadd.f32 0.0, %v897
    %899 = vmatprep.mubr.f32.mxu0 0.0
    %900 = vmatmul.mubr.f32.gmra.mrb[0].mxu0 %v743
    %v901 = vpop.f32.mrb[0].mxu0
    %v902 = vadd.f32 0.0, %v901
    %v903 = vpop.f32.mrb[0].mxu0
    %v904 = vadd.f32 0.0, %v903
    %905 = vmatprep.mubr.f32.mxu0 0.0
    %906 = vmatmul.mubr.f32.gmra.mrb[0].mxu0 %v746
    %v907 = vpop.f32.mrb[0].mxu0
    %v908 = vadd.f32 0.0, %v907
    %v909 = vpop.f32.mrb[0].mxu0
    %v910 = vadd.f32 0.0, %v909
    %911 = vmatprep.mubr.f32.mxu0 0.0
    %912 = vmatmul.mubr.f32.gmra.mrb[0].mxu0 %v749
    %v913 = vpop.f32.mrb[0].mxu0
    %v914 = vadd.f32 0.0, %v913
    %v915 = vpop.f32.mrb[0].mxu0
    %v916 = vadd.f32 0.0, %v915
    %917 = vmatprep.mubr.f32.mxu0 0.0
    %918 = vmatmul.mubr.f32.gmra.mrb[0].mxu0 %v752
    %v919 = vpop.f32.mrb[0].mxu0
    %v920 = vadd.f32 0.0, %v919
    %v921 = vpop.f32.mrb[0].mxu0
    %v922 = vadd.f32 0.0, %v921
    %923 = vmatprep.mubr.f32.mxu0 0.0
    %924 = vmatmul.mubr.f32.gmra.mrb[0].mxu0 %v755
    %v925 = vpop.f32.mrb[0].mxu0
    %v926 = vadd.f32 0.0, %v925
    %v927 = vpop.f32.mrb[0].mxu0
    %v928 = vadd.f32 0.0, %v927
    %929 = vmatprep.mubr.f32.mxu0 0.0
    %930 = vmatmul.mubr.f32.gmra.mrb[0].mxu0 %v758
    %v931 = vpop.f32.mrb[0].mxu0
    %v932 = vadd.f32 0.0, %v931
    %v933 = vpop.f32.mrb[0].mxu0
    %v934 = vadd.f32 0.0, %v933
    %935 = vmatprep.mubr.f32.mxu0 0.0
    %936 = vmatmul.mubr.f32.gmra.mrb[0].mxu0 %v761
    %v937 = vpop.f32.mrb[0].mxu0
    %v938 = vadd.f32 0.0, %v937
    %v939 = vpop.f32.mrb[0].mxu0
    %v940 = vadd.f32 0.0, %v939
    %941 = vmatprep.mubr.f32.mxu0 0.0
    %942 = vmatmul.mubr.f32.gmra.mrb[0].mxu0 %v764
    %v943 = vpop.f32.mrb[0].mxu0
    %v944 = vadd.f32 0.0, %v943
    %v945 = vpop.f32.mrb[0].mxu0
    %v946 = vadd.f32 0.0, %v945
    %947 = vmatprep.mubr.f32.mxu0 0.0
    %948 = vmatmul.mubr.f32.gmra.mrb[0].mxu0 %v767
    %v949 = vpop.f32.mrb[0].mxu0
    %v950 = vadd.f32 0.0, %v949
    %v951 = vpop.f32.mrb[0].mxu0
    %v952 = vadd.f32 0.0, %v951
    %953 = vmatprep.mubr.f32.mxu0 0.0
    %954 = vmatmul.mubr.f32.gmra.mrb[0].mxu0 %v770
    %v955 = vpop.f32.mrb[0].mxu0
    %v956 = vadd.f32 0.0, %v955
    %v957 = vpop.f32.mrb[0].mxu0
    %v958 = vadd.f32 0.0, %v957
    %959 = vmatprep.mubr.f32.mxu0 0.0
    %960 = vmatmul.mubr.f32.gmra.mrb[0].mxu0 %v773
    %v961 = vpop.f32.mrb[0].mxu0
    %v962 = vadd.f32 0.0, %v961
    %v963 = vpop.f32.mrb[0].mxu0
    %v964 = vadd.f32 0.0, %v963
    %965 = vmatprep.mubr.f32.mxu0 0.0
    %966 = vmatmul.mubr.f32.gmra.mrb[0].mxu0 %v776
    %v967 = vpop.f32.mrb[0].mxu0
    %v968 = vadd.f32 0.0, %v967
    %v969 = vpop.f32.mrb[0].mxu0
    %v970 = vadd.f32 0.0, %v969
    %971 = vmatprep.mubr.f32.mxu0 0.0
    %972 = vmatmul.mubr.f32.gmra.mrb[0].mxu0 %v779
    %v973 = vpop.f32.mrb[0].mxu0
    %v974 = vadd.f32 0.0, %v973
    %v975 = vpop.f32.mrb[0].mxu0
    %v976 = vadd.f32 0.0, %v975
    %977 = vmatprep.mubr.f32.mxu0 0.0
    %978 = vmatmul.mubr.f32.gmra.mrb[0].mxu0 %v782
    %v979 = vpop.f32.mrb[0].mxu0
    %v980 = vadd.f32 0.0, %v979
    %v981 = vpop.f32.mrb[0].mxu0
    %v982 = vadd.f32 0.0, %v981
    %983 = vmatprep.mubr.f32.mxu0 0.0
    %984 = vmatmul.mubr.f32.gmra.mrb[0].mxu0 %v785
    %v985 = vpop.f32.mrb[0].mxu0
    %v986 = vadd.f32 0.0, %v985
    %v987 = vpop.f32.mrb[0].mxu0
    %v988 = vadd.f32 0.0, %v987
    %989 = vmatprep.mubr.f32.mxu0 0.0
    %990 = vmatmul.mubr.f32.gmra.mrb[0].mxu0 %v788
    %v991 = vpop.f32.mrb[0].mxu0
    %v992 = vadd.f32 0.0, %v991
    %v993 = vpop.f32.mrb[0].mxu0
    %v994 = vadd.f32 0.0, %v993
    %995 = vmatprep.mubr.f32.mxu0 0.0
    %996 = vmatmul.mubr.f32.gmra.mrb[0].mxu0 %v791
    %v997 = vpop.f32.mrb[0].mxu0
    %v998 = vadd.f32 0.0, %v997
    %v999 = vpop.f32.mrb[0].mxu0
    %v1000 = vadd.f32 0.0, %v999
    %1001 = vmatprep.mubr.f32.mxu0 0.0
    %1002 = vmatmul.mubr.f32.gmra.mrb[0].mxu0 %v794
    %v1003 = vpop.f32.mrb[0].mxu0
    %v1004 = vadd.f32 0.0, %v1003
    %v1005 = vpop.f32.mrb[0].mxu0
    %v1006 = vadd.f32 0.0, %v1005
    %1007 = vmatprep.mubr.f32.mxu0 0.0
    %1008 = vmatmul.mubr.f32.gmra.mrb[0].mxu0 %v797
    %v1009 = vpop.f32.mrb[0].mxu0
    %v1010 = vadd.f32 0.0, %v1009
    %v1011 = vpop.f32.mrb[0].mxu0
    %v1012 = vadd.f32 0.0, %v1011
    %1013 = vdwg.mxu0
    %v1014 = vadd.f32 %v551, %v872
    %v1015 = vadd.f32 %v553, %v874
    %v1016 = vadd.f32 %v557, %v878
    %v1017 = vadd.f32 %v559, %v880
    %v1018 = vadd.f32 %v563, %v884
    %v1019 = vadd.f32 %v565, %v886
    %v1020 = vadd.f32 %v569, %v890
    %v1021 = vadd.f32 %v571, %v892
    %v1022 = vadd.f32 %v575, %v896
    %v1023 = vadd.f32 %v577, %v898
    %v1024 = vadd.f32 %v581, %v902
    %v1025 = vadd.f32 %v583, %v904
    %v1026 = vadd.f32 %v587, %v908
    %v1027 = vadd.f32 %v589, %v910
    %v1028 = vadd.f32 %v593, %v914
    %v1029 = vadd.f32 %v595, %v916
    %v1030 = vadd.f32 %v599, %v920
    %v1031 = vadd.f32 %v601, %v922
    %v1032 = vadd.f32 %v605, %v926
    %v1033 = vadd.f32 %v607, %v928
    %v1034 = vadd.f32 %v611, %v932
    %v1035 = vadd.f32 %v613, %v934
    %v1036 = vadd.f32 %v617, %v938
    %v1037 = vadd.f32 %v619, %v940
    %v1038 = vadd.f32 %v623, %v944
    %v1039 = vadd.f32 %v625, %v946
    %v1040 = vadd.f32 %v629, %v950
    %v1041 = vadd.f32 %v631, %v952
    %v1042 = vadd.f32 %v635, %v956
    %v1043 = vadd.f32 %v637, %v958
    %v1044 = vadd.f32 %v641, %v962
    %v1045 = vadd.f32 %v643, %v964
    %v1046 = vadd.f32 %v647, %v968
    %v1047 = vadd.f32 %v649, %v970
    %v1048 = vadd.f32 %v653, %v974
    %v1049 = vadd.f32 %v655, %v976
    %v1050 = vadd.f32 %v659, %v980
    %v1051 = vadd.f32 %v661, %v982
    %v1052 = vadd.f32 %v665, %v986
    %v1053 = vadd.f32 %v667, %v988
    %v1054 = vadd.f32 %v671, %v992
    %v1055 = vadd.f32 %v673, %v994
    %v1056 = vadd.f32 %v677, %v998
    %v1057 = vadd.f32 %v679, %v1000
    %v1058 = vadd.f32 %v683, %v1004
    %v1059 = vadd.f32 %v685, %v1006
    %v1060 = vadd.f32 %v689, %v1010
    %v1061 = vadd.f32 %v691, %v1012
    %s1062 = scalar_lea.vmem %s0, 576
    %v1063 = vld [vmem:[%s1062] sm:$0xff]
    %v1064 = vld [vmem:[%s1062 + $0x8] sm:$0xff]
    %v1065 = vld [vmem:[%s1062 + $0x10] sm:$0xff]
    %v1066 = vld [vmem:[%s1062 + $0x18] sm:$0xff]
    %v1067 = vld [vmem:[%s1062 + $0x20] sm:$0xff]
    %v1068 = vld [vmem:[%s1062 + $0x28] sm:$0xff]
    %v1069 = vld [vmem:[%s1062 + $0x30] sm:$0xff]
    %v1070 = vld [vmem:[%s1062 + $0x38] sm:$0xff]
    %v1071 = vld [vmem:[%s1062 + $0x40] sm:$0xff]
    %v1072 = vld [vmem:[%s1062 + $0x48] sm:$0xff]
    %v1073 = vld [vmem:[%s1062 + $0x50] sm:$0xff]
    %v1074 = vld [vmem:[%s1062 + $0x58] sm:$0xff]
    %v1075 = vld [vmem:[%s1062 + $0x60] sm:$0xff]
    %v1076 = vld [vmem:[%s1062 + $0x68] sm:$0xff]
    %v1077 = vld [vmem:[%s1062 + $0x70] sm:$0xff]
    %v1078 = vld [vmem:[%s1062 + $0x78] sm:$0xff]
    %v1079 = vld [vmem:[%s1062 + $0x80] sm:$0xff]
    %v1080 = vld [vmem:[%s1062 + $0x88] sm:$0xff]
    %v1081 = vld [vmem:[%s1062 + $0x90] sm:$0xff]
    %v1082 = vld [vmem:[%s1062 + $0x98] sm:$0xff]
    %v1083 = vld [vmem:[%s1062 + $0xa0] sm:$0xff]
    %v1084 = vld [vmem:[%s1062 + $0xa8] sm:$0xff]
    %v1085 = vld [vmem:[%s1062 + $0xb0] sm:$0xff]
    %v1086 = vld [vmem:[%s1062 + $0xb8] sm:$0xff]
    %s1087 = scalar_lea.vmem %s1, 192
    %v1088 = vld [vmem:[%s1087] sm:$0xff]
    %v1089 = vld [vmem:[%s1087 + $0x8] sm:$0xff]
    %v1090 = vld [vmem:[%s1087 + $0x10] sm:$0xff]
    %v1091 = vld [vmem:[%s1087 + $0x18] sm:$0xff]
    %v1092 = vld [vmem:[%s1087 + $0x20] sm:$0xff]
    %v1093 = vld [vmem:[%s1087 + $0x28] sm:$0xff]
    %v1094 = vld [vmem:[%s1087 + $0x30] sm:$0xf]
    %v1095 = vld [vmem:[%s1087 + $0x38] sm:$0xf]
    %v1097 = vsel %vm117, %v1063, 0
    %v1100 = vsel %vm117, %v1064, 0
    %v1103 = vsel %vm117, %v1065, 0
    %v1106 = vsel %vm117, %v1066, 0
    %v1109 = vsel %vm117, %v1067, 0
    %v1112 = vsel %vm117, %v1068, 0
    %v1115 = vsel %vm117, %v1069, 0
    %v1118 = vsel %vm117, %v1070, 0
    %v1121 = vsel %vm117, %v1071, 0
    %v1124 = vsel %vm117, %v1072, 0
    %v1127 = vsel %vm117, %v1073, 0
    %v1130 = vsel %vm117, %v1074, 0
    %v1133 = vsel %vm117, %v1075, 0
    %v1136 = vsel %vm117, %v1076, 0
    %v1139 = vsel %vm117, %v1077, 0
    %v1142 = vsel %vm117, %v1078, 0
    %v1145 = vsel %vm117, %v1079, 0
    %v1148 = vsel %vm117, %v1080, 0
    %v1151 = vsel %vm117, %v1081, 0
    %v1154 = vsel %vm117, %v1082, 0
    %v1157 = vsel %vm117, %v1083, 0
    %v1160 = vsel %vm117, %v1084, 0
    %v1163 = vsel %vm117, %v1085, 0
    %v1166 = vsel %vm117, %v1086, 0
    %v1169 = vsel %vm190, %v1094, 0
    %v1172 = vsel %vm190, %v1095, 0
    %1174 = vmatprep.subr.mxu0 %v1089
    %1175 = vmatpush1.msra.mxu0 %v1088
    %1176 = vmatprep.subr.mxu0 %v1091
    %1177 = vmatpush1.msra.mxu0 %v1090
    %1178 = vmatprep.subr.mxu0 %v1093
    %1179 = vmatpush1.msra.mxu0 %v1092
    %1180 = vmatprep.subr.mxu0 %v1172
    %1181 = vmatpush1.msra.mxu0 %v1169
    %1182 = vmatprep.subr.mxu0 0.0
    %1183 = vmatpush1.msra.mxu0 0.0
    %1184 = vmatprep.subr.mxu0 0.0
    %1185 = vmatpush1.msra.mxu0 0.0
    %1186 = vmatprep.subr.mxu0 0.0
    %1187 = vmatpush1.msra.mxu0 0.0
    %1188 = vmatprep.subr.mxu0 0.0
    %1189 = vmatpush1.msra.mxu0 0.0
    %1190 = vmatprep.subr.mxu0 0.0
    %1191 = vmatpush1.msra.mxu0 0.0
    %1192 = vmatprep.subr.mxu0 0.0
    %1193 = vmatpush1.msra.mxu0 0.0
    %1194 = vmatprep.subr.mxu0 0.0
    %1195 = vmatpush1.msra.mxu0 0.0
    %1196 = vmatprep.subr.mxu0 0.0
    %1197 = vmatpush1.msra.mxu0 0.0
    %1198 = vmatprep.subr.mxu0 0.0
    %1199 = vmatpush1.msra.mxu0 0.0
    %1200 = vmatprep.subr.mxu0 0.0
    %1201 = vmatpush1.msra.mxu0 0.0
    %1202 = vmatprep.subr.mxu0 0.0
    %1203 = vmatpush1.msra.mxu0 0.0
    %1204 = vmatprep.subr.mxu0 0.0
    %1205 = vmatpush1.msra.mxu0 0.0
    %1206 = vmatprep.subr.mxu0 0.0
    %1207 = vmatpush1.msra.mxu0 0.0
    %1208 = vmatprep.subr.mxu0 0.0
    %1209 = vmatpush1.msra.mxu0 0.0
    %1210 = vmatprep.subr.mxu0 0.0
    %1211 = vmatpush1.msra.mxu0 0.0
    %1212 = vmatprep.subr.mxu0 0.0
    %1213 = vmatpush1.msra.mxu0 0.0
    %1214 = vmatprep.subr.mxu0 0.0
    %1215 = vmatpush1.msra.mxu0 0.0
    %1216 = vmatprep.subr.mxu0 0.0
    %1217 = vmatpush1.msra.mxu0 0.0
    %1218 = vmatprep.subr.mxu0 0.0
    %1219 = vmatpush1.msra.mxu0 0.0
    %1220 = vmatprep.subr.mxu0 0.0
    %1221 = vmatpush1.msra.mxu0 0.0
    %1222 = vmatprep.subr.mxu0 0.0
    %1223 = vmatpush1.msra.mxu0 0.0
    %1224 = vmatprep.subr.mxu0 0.0
    %1225 = vmatpush1.msra.mxu0 0.0
    %1226 = vmatprep.subr.mxu0 0.0
    %1227 = vmatpush1.msra.mxu0 0.0
    %1228 = vmatprep.subr.mxu0 0.0
    %1229 = vmatpush1.msra.mxu0 0.0
    %1230 = vmatprep.subr.mxu0 0.0
    %1231 = vmatpush1.msra.mxu0 0.0
    %1232 = vmatprep.subr.mxu0 0.0
    %1233 = vmatpush1.msra.mxu0 0.0
    %1234 = vmatprep.subr.mxu0 0.0
    %1235 = vmatpush1.msra.mxu0 0.0
    %1236 = vmatprep.subr.mxu0 0.0
    %1237 = vmatpush1.msra.mxu0 0.0
    %1238 = vmatprep.mubr.f32.mxu0 0.0
    %1239 = vmatmul.mubr.f32.gmra.mrb[0].mxu0 %v1097
    %v1240 = vpop.f32.mrb[0].mxu0
    %v1241 = vadd.f32 0.0, %v1240
    %v1242 = vpop.f32.mrb[0].mxu0
    %v1243 = vadd.f32 0.0, %v1242
    %1244 = vmatprep.mubr.f32.mxu0 0.0
    %1245 = vmatmul.mubr.f32.gmra.mrb[0].mxu0 %v1100
    %v1246 = vpop.f32.mrb[0].mxu0
    %v1247 = vadd.f32 0.0, %v1246
    %v1248 = vpop.f32.mrb[0].mxu0
    %v1249 = vadd.f32 0.0, %v1248
    %1250 = vmatprep.mubr.f32.mxu0 0.0
    %1251 = vmatmul.mubr.f32.gmra.mrb[0].mxu0 %v1103
    %v1252 = vpop.f32.mrb[0].mxu0
    %v1253 = vadd.f32 0.0, %v1252
    %v1254 = vpop.f32.mrb[0].mxu0
    %v1255 = vadd.f32 0.0, %v1254
    %1256 = vmatprep.mubr.f32.mxu0 0.0
    %1257 = vmatmul.mubr.f32.gmra.mrb[0].mxu0 %v1106
    %v1258 = vpop.f32.mrb[0].mxu0
    %v1259 = vadd.f32 0.0, %v1258
    %v1260 = vpop.f32.mrb[0].mxu0
    %v1261 = vadd.f32 0.0, %v1260
    %1262 = vmatprep.mubr.f32.mxu0 0.0
    %1263 = vmatmul.mubr.f32.gmra.mrb[0].mxu0 %v1109
    %v1264 = vpop.f32.mrb[0].mxu0
    %v1265 = vadd.f32 0.0, %v1264
    %v1266 = vpop.f32.mrb[0].mxu0
    %v1267 = vadd.f32 0.0, %v1266
    %1268 = vmatprep.mubr.f32.mxu0 0.0
    %1269 = vmatmul.mubr.f32.gmra.mrb[0].mxu0 %v1112
    %v1270 = vpop.f32.mrb[0].mxu0
    %v1271 = vadd.f32 0.0, %v1270
    %v1272 = vpop.f32.mrb[0].mxu0
    %v1273 = vadd.f32 0.0, %v1272
    %1274 = vmatprep.mubr.f32.mxu0 0.0
    %1275 = vmatmul.mubr.f32.gmra.mrb[0].mxu0 %v1115
    %v1276 = vpop.f32.mrb[0].mxu0
    %v1277 = vadd.f32 0.0, %v1276
    %v1278 = vpop.f32.mrb[0].mxu0
    %v1279 = vadd.f32 0.0, %v1278
    %1280 = vmatprep.mubr.f32.mxu0 0.0
    %1281 = vmatmul.mubr.f32.gmra.mrb[0].mxu0 %v1118
    %v1282 = vpop.f32.mrb[0].mxu0
    %v1283 = vadd.f32 0.0, %v1282
    %v1284 = vpop.f32.mrb[0].mxu0
    %v1285 = vadd.f32 0.0, %v1284
    %1286 = vmatprep.mubr.f32.mxu0 0.0
    %1287 = vmatmul.mubr.f32.gmra.mrb[0].mxu0 %v1121
    %v1288 = vpop.f32.mrb[0].mxu0
    %v1289 = vadd.f32 0.0, %v1288
    %v1290 = vpop.f32.mrb[0].mxu0
    %v1291 = vadd.f32 0.0, %v1290
    %1292 = vmatprep.mubr.f32.mxu0 0.0
    %1293 = vmatmul.mubr.f32.gmra.mrb[0].mxu0 %v1124
    %v1294 = vpop.f32.mrb[0].mxu0
    %v1295 = vadd.f32 0.0, %v1294
    %v1296 = vpop.f32.mrb[0].mxu0
    %v1297 = vadd.f32 0.0, %v1296
    %1298 = vmatprep.mubr.f32.mxu0 0.0
    %1299 = vmatmul.mubr.f32.gmra.mrb[0].mxu0 %v1127
    %v1300 = vpop.f32.mrb[0].mxu0
    %v1301 = vadd.f32 0.0, %v1300
    %v1302 = vpop.f32.mrb[0].mxu0
    %v1303 = vadd.f32 0.0, %v1302
    %1304 = vmatprep.mubr.f32.mxu0 0.0
    %1305 = vmatmul.mubr.f32.gmra.mrb[0].mxu0 %v1130
    %v1306 = vpop.f32.mrb[0].mxu0
    %v1307 = vadd.f32 0.0, %v1306
    %v1308 = vpop.f32.mrb[0].mxu0
    %v1309 = vadd.f32 0.0, %v1308
    %1310 = vmatprep.mubr.f32.mxu0 0.0
    %1311 = vmatmul.mubr.f32.gmra.mrb[0].mxu0 %v1133
    %v1312 = vpop.f32.mrb[0].mxu0
    %v1313 = vadd.f32 0.0, %v1312
    %v1314 = vpop.f32.mrb[0].mxu0
    %v1315 = vadd.f32 0.0, %v1314
    %1316 = vmatprep.mubr.f32.mxu0 0.0
    %1317 = vmatmul.mubr.f32.gmra.mrb[0].mxu0 %v1136
    %v1318 = vpop.f32.mrb[0].mxu0
    %v1319 = vadd.f32 0.0, %v1318
    %v1320 = vpop.f32.mrb[0].mxu0
    %v1321 = vadd.f32 0.0, %v1320
    %1322 = vmatprep.mubr.f32.mxu0 0.0
    %1323 = vmatmul.mubr.f32.gmra.mrb[0].mxu0 %v1139
    %v1324 = vpop.f32.mrb[0].mxu0
    %v1325 = vadd.f32 0.0, %v1324
    %v1326 = vpop.f32.mrb[0].mxu0
    %v1327 = vadd.f32 0.0, %v1326
    %1328 = vmatprep.mubr.f32.mxu0 0.0
    %1329 = vmatmul.mubr.f32.gmra.mrb[0].mxu0 %v1142
    %v1330 = vpop.f32.mrb[0].mxu0
    %v1331 = vadd.f32 0.0, %v1330
    %v1332 = vpop.f32.mrb[0].mxu0
    %v1333 = vadd.f32 0.0, %v1332
    %1334 = vmatprep.mubr.f32.mxu0 0.0
    %1335 = vmatmul.mubr.f32.gmra.mrb[0].mxu0 %v1145
    %v1336 = vpop.f32.mrb[0].mxu0
    %v1337 = vadd.f32 0.0, %v1336
    %v1338 = vpop.f32.mrb[0].mxu0
    %v1339 = vadd.f32 0.0, %v1338
    %1340 = vmatprep.mubr.f32.mxu0 0.0
    %1341 = vmatmul.mubr.f32.gmra.mrb[0].mxu0 %v1148
    %v1342 = vpop.f32.mrb[0].mxu0
    %v1343 = vadd.f32 0.0, %v1342
    %v1344 = vpop.f32.mrb[0].mxu0
    %v1345 = vadd.f32 0.0, %v1344
    %1346 = vmatprep.mubr.f32.mxu0 0.0
    %1347 = vmatmul.mubr.f32.gmra.mrb[0].mxu0 %v1151
    %v1348 = vpop.f32.mrb[0].mxu0
    %v1349 = vadd.f32 0.0, %v1348
    %v1350 = vpop.f32.mrb[0].mxu0
    %v1351 = vadd.f32 0.0, %v1350
    %1352 = vmatprep.mubr.f32.mxu0 0.0
    %1353 = vmatmul.mubr.f32.gmra.mrb[0].mxu0 %v1154
    %v1354 = vpop.f32.mrb[0].mxu0
    %v1355 = vadd.f32 0.0, %v1354
    %v1356 = vpop.f32.mrb[0].mxu0
    %v1357 = vadd.f32 0.0, %v1356
    %1358 = vmatprep.mubr.f32.mxu0 0.0
    %1359 = vmatmul.mubr.f32.gmra.mrb[0].mxu0 %v1157
    %v1360 = vpop.f32.mrb[0].mxu0
    %v1361 = vadd.f32 0.0, %v1360
    %v1362 = vpop.f32.mrb[0].mxu0
    %v1363 = vadd.f32 0.0, %v1362
    %1364 = vmatprep.mubr.f32.mxu0 0.0
    %1365 = vmatmul.mubr.f32.gmra.mrb[0].mxu0 %v1160
    %v1366 = vpop.f32.mrb[0].mxu0
    %v1367 = vadd.f32 0.0, %v1366
    %v1368 = vpop.f32.mrb[0].mxu0
    %v1369 = vadd.f32 0.0, %v1368
    %1370 = vmatprep.mubr.f32.mxu0 0.0
    %1371 = vmatmul.mubr.f32.gmra.mrb[0].mxu0 %v1163
    %v1372 = vpop.f32.mrb[0].mxu0
    %v1373 = vadd.f32 0.0, %v1372
    %v1374 = vpop.f32.mrb[0].mxu0
    %v1375 = vadd.f32 0.0, %v1374
    %1376 = vmatprep.mubr.f32.mxu0 0.0
    %1377 = vmatmul.mubr.f32.gmra.mrb[0].mxu0 %v1166
    %v1378 = vpop.f32.mrb[0].mxu0
    %v1379 = vadd.f32 0.0, %v1378
    %v1380 = vpop.f32.mrb[0].mxu0
    %v1381 = vadd.f32 0.0, %v1380
    %1382 = vdwg.mxu0
    %v1383 = vadd.f32 %v1014, %v1241
    %v1384 = vadd.f32 %v1015, %v1243
    %v1385 = vadd.f32 %v1016, %v1247
    %v1386 = vadd.f32 %v1017, %v1249
    %v1387 = vadd.f32 %v1018, %v1253
    %v1388 = vadd.f32 %v1019, %v1255
    %v1389 = vadd.f32 %v1020, %v1259
    %v1390 = vadd.f32 %v1021, %v1261
    %v1391 = vadd.f32 %v1022, %v1265
    %v1392 = vadd.f32 %v1023, %v1267
    %v1393 = vadd.f32 %v1024, %v1271
    %v1394 = vadd.f32 %v1025, %v1273
    %v1395 = vadd.f32 %v1026, %v1277
    %v1396 = vadd.f32 %v1027, %v1279
    %v1397 = vadd.f32 %v1028, %v1283
    %v1398 = vadd.f32 %v1029, %v1285
    %v1399 = vadd.f32 %v1030, %v1289
    %v1400 = vadd.f32 %v1031, %v1291
    %v1401 = vadd.f32 %v1032, %v1295
    %v1402 = vadd.f32 %v1033, %v1297
    %v1403 = vadd.f32 %v1034, %v1301
    %v1404 = vadd.f32 %v1035, %v1303
    %v1405 = vadd.f32 %v1036, %v1307
    %v1406 = vadd.f32 %v1037, %v1309
    %v1407 = vadd.f32 %v1038, %v1313
    %v1408 = vadd.f32 %v1039, %v1315
    %v1409 = vadd.f32 %v1040, %v1319
    %v1410 = vadd.f32 %v1041, %v1321
    %v1411 = vadd.f32 %v1042, %v1325
    %v1412 = vadd.f32 %v1043, %v1327
    %v1413 = vadd.f32 %v1044, %v1331
    %v1414 = vadd.f32 %v1045, %v1333
    %v1415 = vadd.f32 %v1046, %v1337
    %v1416 = vadd.f32 %v1047, %v1339
    %v1417 = vadd.f32 %v1048, %v1343
    %v1418 = vadd.f32 %v1049, %v1345
    %v1419 = vadd.f32 %v1050, %v1349
    %v1420 = vadd.f32 %v1051, %v1351
    %v1421 = vadd.f32 %v1052, %v1355
    %v1422 = vadd.f32 %v1053, %v1357
    %v1423 = vadd.f32 %v1054, %v1361
    %v1424 = vadd.f32 %v1055, %v1363
    %v1425 = vadd.f32 %v1056, %v1367
    %v1426 = vadd.f32 %v1057, %v1369
    %v1427 = vadd.f32 %v1058, %v1373
    %v1428 = vadd.f32 %v1059, %v1375
    %v1429 = vadd.f32 %v1060, %v1379
    %v1430 = vadd.f32 %v1061, %v1381
    %s1431 = scalar_lea.vmem %s0, 768
    %v1432 = vld [vmem:[%s1431] sm:$0xff]
    %v1433 = vld [vmem:[%s1431 + $0x8] sm:$0xff]
    %v1434 = vld [vmem:[%s1431 + $0x10] sm:$0xff]
    %v1435 = vld [vmem:[%s1431 + $0x18] sm:$0xff]
    %v1436 = vld [vmem:[%s1431 + $0x20] sm:$0xff]
    %v1437 = vld [vmem:[%s1431 + $0x28] sm:$0xff]
    %v1438 = vld [vmem:[%s1431 + $0x30] sm:$0xff]
    %v1439 = vld [vmem:[%s1431 + $0x38] sm:$0xff]
    %v1440 = vld [vmem:[%s1431 + $0x40] sm:$0xff]
    %v1441 = vld [vmem:[%s1431 + $0x48] sm:$0xff]
    %v1442 = vld [vmem:[%s1431 + $0x50] sm:$0xff]
    %v1443 = vld [vmem:[%s1431 + $0x58] sm:$0xff]
    %v1444 = vld [vmem:[%s1431 + $0x60] sm:$0xff]
    %v1445 = vld [vmem:[%s1431 + $0x68] sm:$0xff]
    %v1446 = vld [vmem:[%s1431 + $0x70] sm:$0xff]
    %v1447 = vld [vmem:[%s1431 + $0x78] sm:$0xff]
    %v1448 = vld [vmem:[%s1431 + $0x80] sm:$0xff]
    %v1449 = vld [vmem:[%s1431 + $0x88] sm:$0xff]
    %v1450 = vld [vmem:[%s1431 + $0x90] sm:$0xff]
    %v1451 = vld [vmem:[%s1431 + $0x98] sm:$0xff]
    %v1452 = vld [vmem:[%s1431 + $0xa0] sm:$0xff]
    %v1453 = vld [vmem:[%s1431 + $0xa8] sm:$0xff]
    %v1454 = vld [vmem:[%s1431 + $0xb0] sm:$0xff]
    %v1455 = vld [vmem:[%s1431 + $0xb8] sm:$0xff]
    %s1456 = scalar_lea.vmem %s1, 256
    %v1457 = vld [vmem:[%s1456] sm:$0xff]
    %v1458 = vld [vmem:[%s1456 + $0x8] sm:$0xff]
    %v1459 = vld [vmem:[%s1456 + $0x10] sm:$0xff]
    %v1460 = vld [vmem:[%s1456 + $0x18] sm:$0xff]
    %v1461 = vld [vmem:[%s1456 + $0x20] sm:$0xff]
    %v1462 = vld [vmem:[%s1456 + $0x28] sm:$0xff]
    %v1463 = vld [vmem:[%s1456 + $0x30] sm:$0xf]
    %v1464 = vld [vmem:[%s1456 + $0x38] sm:$0xf]
    %v1466 = vsel %vm117, %v1432, 0
    %v1469 = vsel %vm117, %v1433, 0
    %v1472 = vsel %vm117, %v1434, 0
    %v1475 = vsel %vm117, %v1435, 0
    %v1478 = vsel %vm117, %v1436, 0
    %v1481 = vsel %vm117, %v1437, 0
    %v1484 = vsel %vm117, %v1438, 0
    %v1487 = vsel %vm117, %v1439, 0
    %v1490 = vsel %vm117, %v1440, 0
    %v1493 = vsel %vm117, %v1441, 0
    %v1496 = vsel %vm117, %v1442, 0
    %v1499 = vsel %vm117, %v1443, 0
    %v1502 = vsel %vm117, %v1444, 0
    %v1505 = vsel %vm117, %v1445, 0
    %v1508 = vsel %vm117, %v1446, 0
    %v1511 = vsel %vm117, %v1447, 0
    %v1514 = vsel %vm117, %v1448, 0
    %v1517 = vsel %vm117, %v1449, 0
    %v1520 = vsel %vm117, %v1450, 0
    %v1523 = vsel %vm117, %v1451, 0
    %v1526 = vsel %vm117, %v1452, 0
    %v1529 = vsel %vm117, %v1453, 0
    %v1532 = vsel %vm117, %v1454, 0
    %v1535 = vsel %vm117, %v1455, 0
    %v1538 = vsel %vm190, %v1463, 0
    %v1541 = vsel %vm190, %v1464, 0
    %1543 = vmatprep.subr.mxu0 %v1458
    %1544 = vmatpush1.msra.mxu0 %v1457
    %1545 = vmatprep.subr.mxu0 %v1460
    %1546 = vmatpush1.msra.mxu0 %v1459
    %1547 = vmatprep.subr.mxu0 %v1462
    %1548 = vmatpush1.msra.mxu0 %v1461
    %1549 = vmatprep.subr.mxu0 %v1541
    %1550 = vmatpush1.msra.mxu0 %v1538
    %1551 = vmatprep.subr.mxu0 0.0
    %1552 = vmatpush1.msra.mxu0 0.0
    %1553 = vmatprep.subr.mxu0 0.0
    %1554 = vmatpush1.msra.mxu0 0.0
    %1555 = vmatprep.subr.mxu0 0.0
    %1556 = vmatpush1.msra.mxu0 0.0
    %1557 = vmatprep.subr.mxu0 0.0
    %1558 = vmatpush1.msra.mxu0 0.0
    %1559 = vmatprep.subr.mxu0 0.0
    %1560 = vmatpush1.msra.mxu0 0.0
    %1561 = vmatprep.subr.mxu0 0.0
    %1562 = vmatpush1.msra.mxu0 0.0
    %1563 = vmatprep.subr.mxu0 0.0
    %1564 = vmatpush1.msra.mxu0 0.0
    %1565 = vmatprep.subr.mxu0 0.0
    %1566 = vmatpush1.msra.mxu0 0.0
    %1567 = vmatprep.subr.mxu0 0.0
    %1568 = vmatpush1.msra.mxu0 0.0
    %1569 = vmatprep.subr.mxu0 0.0
    %1570 = vmatpush1.msra.mxu0 0.0
    %1571 = vmatprep.subr.mxu0 0.0
    %1572 = vmatpush1.msra.mxu0 0.0
    %1573 = vmatprep.subr.mxu0 0.0
    %1574 = vmatpush1.msra.mxu0 0.0
    %1575 = vmatprep.subr.mxu0 0.0
    %1576 = vmatpush1.msra.mxu0 0.0
    %1577 = vmatprep.subr.mxu0 0.0
    %1578 = vmatpush1.msra.mxu0 0.0
    %1579 = vmatprep.subr.mxu0 0.0
    %1580 = vmatpush1.msra.mxu0 0.0
    %1581 = vmatprep.subr.mxu0 0.0
    %1582 = vmatpush1.msra.mxu0 0.0
    %1583 = vmatprep.subr.mxu0 0.0
    %1584 = vmatpush1.msra.mxu0 0.0
    %1585 = vmatprep.subr.mxu0 0.0
    %1586 = vmatpush1.msra.mxu0 0.0
    %1587 = vmatprep.subr.mxu0 0.0
    %1588 = vmatpush1.msra.mxu0 0.0
    %1589 = vmatprep.subr.mxu0 0.0
    %1590 = vmatpush1.msra.mxu0 0.0
    %1591 = vmatprep.subr.mxu0 0.0
    %1592 = vmatpush1.msra.mxu0 0.0
    %1593 = vmatprep.subr.mxu0 0.0
    %1594 = vmatpush1.msra.mxu0 0.0
    %1595 = vmatprep.subr.mxu0 0.0
    %1596 = vmatpush1.msra.mxu0 0.0
    %1597 = vmatprep.subr.mxu0 0.0
    %1598 = vmatpush1.msra.mxu0 0.0
    %1599 = vmatprep.subr.mxu0 0.0
    %1600 = vmatpush1.msra.mxu0 0.0
    %1601 = vmatprep.subr.mxu0 0.0
    %1602 = vmatpush1.msra.mxu0 0.0
    %1603 = vmatprep.subr.mxu0 0.0
    %1604 = vmatpush1.msra.mxu0 0.0
    %1605 = vmatprep.subr.mxu0 0.0
    %1606 = vmatpush1.msra.mxu0 0.0
    %1607 = vmatprep.mubr.f32.mxu0 0.0
    %1608 = vmatmul.mubr.f32.gmra.mrb[0].mxu0 %v1466
    %v1609 = vpop.f32.mrb[0].mxu0
    %v1610 = vadd.f32 0.0, %v1609
    %v1611 = vpop.f32.mrb[0].mxu0
    %v1612 = vadd.f32 0.0, %v1611
    %1613 = vmatprep.mubr.f32.mxu0 0.0
    %1614 = vmatmul.mubr.f32.gmra.mrb[0].mxu0 %v1469
    %v1615 = vpop.f32.mrb[0].mxu0
    %v1616 = vadd.f32 0.0, %v1615
    %v1617 = vpop.f32.mrb[0].mxu0
    %v1618 = vadd.f32 0.0, %v1617
    %1619 = vmatprep.mubr.f32.mxu0 0.0
    %1620 = vmatmul.mubr.f32.gmra.mrb[0].mxu0 %v1472
    %v1621 = vpop.f32.mrb[0].mxu0
    %v1622 = vadd.f32 0.0, %v1621
    %v1623 = vpop.f32.mrb[0].mxu0
    %v1624 = vadd.f32 0.0, %v1623
    %1625 = vmatprep.mubr.f32.mxu0 0.0
    %1626 = vmatmul.mubr.f32.gmra.mrb[0].mxu0 %v1475
    %v1627 = vpop.f32.mrb[0].mxu0
    %v1628 = vadd.f32 0.0, %v1627
    %v1629 = vpop.f32.mrb[0].mxu0
    %v1630 = vadd.f32 0.0, %v1629
    %1631 = vmatprep.mubr.f32.mxu0 0.0
    %1632 = vmatmul.mubr.f32.gmra.mrb[0].mxu0 %v1478
    %v1633 = vpop.f32.mrb[0].mxu0
    %v1634 = vadd.f32 0.0, %v1633
    %v1635 = vpop.f32.mrb[0].mxu0
    %v1636 = vadd.f32 0.0, %v1635
    %1637 = vmatprep.mubr.f32.mxu0 0.0
    %1638 = vmatmul.mubr.f32.gmra.mrb[0].mxu0 %v1481
    %v1639 = vpop.f32.mrb[0].mxu0
    %v1640 = vadd.f32 0.0, %v1639
    %v1641 = vpop.f32.mrb[0].mxu0
    %v1642 = vadd.f32 0.0, %v1641
    %1643 = vmatprep.mubr.f32.mxu0 0.0
    %1644 = vmatmul.mubr.f32.gmra.mrb[0].mxu0 %v1484
    %v1645 = vpop.f32.mrb[0].mxu0
    %v1646 = vadd.f32 0.0, %v1645
    %v1647 = vpop.f32.mrb[0].mxu0
    %v1648 = vadd.f32 0.0, %v1647
    %1649 = vmatprep.mubr.f32.mxu0 0.0
    %1650 = vmatmul.mubr.f32.gmra.mrb[0].mxu0 %v1487
    %v1651 = vpop.f32.mrb[0].mxu0
    %v1652 = vadd.f32 0.0, %v1651
    %v1653 = vpop.f32.mrb[0].mxu0
    %v1654 = vadd.f32 0.0, %v1653
    %1655 = vmatprep.mubr.f32.mxu0 0.0
    %1656 = vmatmul.mubr.f32.gmra.mrb[0].mxu0 %v1490
    %v1657 = vpop.f32.mrb[0].mxu0
    %v1658 = vadd.f32 0.0, %v1657
    %v1659 = vpop.f32.mrb[0].mxu0
    %v1660 = vadd.f32 0.0, %v1659
    %1661 = vmatprep.mubr.f32.mxu0 0.0
    %1662 = vmatmul.mubr.f32.gmra.mrb[0].mxu0 %v1493
    %v1663 = vpop.f32.mrb[0].mxu0
    %v1664 = vadd.f32 0.0, %v1663
    %v1665 = vpop.f32.mrb[0].mxu0
    %v1666 = vadd.f32 0.0, %v1665
    %1667 = vmatprep.mubr.f32.mxu0 0.0
    %1668 = vmatmul.mubr.f32.gmra.mrb[0].mxu0 %v1496
    %v1669 = vpop.f32.mrb[0].mxu0
    %v1670 = vadd.f32 0.0, %v1669
    %v1671 = vpop.f32.mrb[0].mxu0
    %v1672 = vadd.f32 0.0, %v1671
    %1673 = vmatprep.mubr.f32.mxu0 0.0
    %1674 = vmatmul.mubr.f32.gmra.mrb[0].mxu0 %v1499
    %v1675 = vpop.f32.mrb[0].mxu0
    %v1676 = vadd.f32 0.0, %v1675
    %v1677 = vpop.f32.mrb[0].mxu0
    %v1678 = vadd.f32 0.0, %v1677
    %1679 = vmatprep.mubr.f32.mxu0 0.0
    %1680 = vmatmul.mubr.f32.gmra.mrb[0].mxu0 %v1502
    %v1681 = vpop.f32.mrb[0].mxu0
    %v1682 = vadd.f32 0.0, %v1681
    %v1683 = vpop.f32.mrb[0].mxu0
    %v1684 = vadd.f32 0.0, %v1683
    %1685 = vmatprep.mubr.f32.mxu0 0.0
    %1686 = vmatmul.mubr.f32.gmra.mrb[0].mxu0 %v1505
    %v1687 = vpop.f32.mrb[0].mxu0
    %v1688 = vadd.f32 0.0, %v1687
    %v1689 = vpop.f32.mrb[0].mxu0
    %v1690 = vadd.f32 0.0, %v1689
    %1691 = vmatprep.mubr.f32.mxu0 0.0
    %1692 = vmatmul.mubr.f32.gmra.mrb[0].mxu0 %v1508
    %v1693 = vpop.f32.mrb[0].mxu0
    %v1694 = vadd.f32 0.0, %v1693
    %v1695 = vpop.f32.mrb[0].mxu0
    %v1696 = vadd.f32 0.0, %v1695
    %1697 = vmatprep.mubr.f32.mxu0 0.0
    %1698 = vmatmul.mubr.f32.gmra.mrb[0].mxu0 %v1511
    %v1699 = vpop.f32.mrb[0].mxu0
    %v1700 = vadd.f32 0.0, %v1699
    %v1701 = vpop.f32.mrb[0].mxu0
    %v1702 = vadd.f32 0.0, %v1701
    %1703 = vmatprep.mubr.f32.mxu0 0.0
    %1704 = vmatmul.mubr.f32.gmra.mrb[0].mxu0 %v1514
    %v1705 = vpop.f32.mrb[0].mxu0
    %v1706 = vadd.f32 0.0, %v1705
    %v1707 = vpop.f32.mrb[0].mxu0
    %v1708 = vadd.f32 0.0, %v1707
    %1709 = vmatprep.mubr.f32.mxu0 0.0
    %1710 = vmatmul.mubr.f32.gmra.mrb[0].mxu0 %v1517
    %v1711 = vpop.f32.mrb[0].mxu0
    %v1712 = vadd.f32 0.0, %v1711
    %v1713 = vpop.f32.mrb[0].mxu0
    %v1714 = vadd.f32 0.0, %v1713
    %1715 = vmatprep.mubr.f32.mxu0 0.0
    %1716 = vmatmul.mubr.f32.gmra.mrb[0].mxu0 %v1520
    %v1717 = vpop.f32.mrb[0].mxu0
    %v1718 = vadd.f32 0.0, %v1717
    %v1719 = vpop.f32.mrb[0].mxu0
    %v1720 = vadd.f32 0.0, %v1719
    %1721 = vmatprep.mubr.f32.mxu0 0.0
    %1722 = vmatmul.mubr.f32.gmra.mrb[0].mxu0 %v1523
    %v1723 = vpop.f32.mrb[0].mxu0
    %v1724 = vadd.f32 0.0, %v1723
    %v1725 = vpop.f32.mrb[0].mxu0
    %v1726 = vadd.f32 0.0, %v1725
    %1727 = vmatprep.mubr.f32.mxu0 0.0
    %1728 = vmatmul.mubr.f32.gmra.mrb[0].mxu0 %v1526
    %v1729 = vpop.f32.mrb[0].mxu0
    %v1730 = vadd.f32 0.0, %v1729
    %v1731 = vpop.f32.mrb[0].mxu0
    %v1732 = vadd.f32 0.0, %v1731
    %1733 = vmatprep.mubr.f32.mxu0 0.0
    %1734 = vmatmul.mubr.f32.gmra.mrb[0].mxu0 %v1529
    %v1735 = vpop.f32.mrb[0].mxu0
    %v1736 = vadd.f32 0.0, %v1735
    %v1737 = vpop.f32.mrb[0].mxu0
    %v1738 = vadd.f32 0.0, %v1737
    %1739 = vmatprep.mubr.f32.mxu0 0.0
    %1740 = vmatmul.mubr.f32.gmra.mrb[0].mxu0 %v1532
    %v1741 = vpop.f32.mrb[0].mxu0
    %v1742 = vadd.f32 0.0, %v1741
    %v1743 = vpop.f32.mrb[0].mxu0
    %v1744 = vadd.f32 0.0, %v1743
    %1745 = vmatprep.mubr.f32.mxu0 0.0
    %1746 = vmatmul.mubr.f32.gmra.mrb[0].mxu0 %v1535
    %v1747 = vpop.f32.mrb[0].mxu0
    %v1748 = vadd.f32 0.0, %v1747
    %v1749 = vpop.f32.mrb[0].mxu0
    %v1750 = vadd.f32 0.0, %v1749
    %1751 = vdwg.mxu0
    %v1752 = vadd.f32 %v1383, %v1610
    %v1753 = vadd.f32 %v1384, %v1612
    %v1754 = vadd.f32 %v1385, %v1616
    %v1755 = vadd.f32 %v1386, %v1618
    %v1756 = vadd.f32 %v1387, %v1622
    %v1757 = vadd.f32 %v1388, %v1624
    %v1758 = vadd.f32 %v1389, %v1628
    %v1759 = vadd.f32 %v1390, %v1630
    %v1760 = vadd.f32 %v1391, %v1634
    %v1761 = vadd.f32 %v1392, %v1636
    %v1762 = vadd.f32 %v1393, %v1640
    %v1763 = vadd.f32 %v1394, %v1642
    %v1764 = vadd.f32 %v1395, %v1646
    %v1765 = vadd.f32 %v1396, %v1648
    %v1766 = vadd.f32 %v1397, %v1652
    %v1767 = vadd.f32 %v1398, %v1654
    %v1768 = vadd.f32 %v1399, %v1658
    %v1769 = vadd.f32 %v1400, %v1660
    %v1770 = vadd.f32 %v1401, %v1664
    %v1771 = vadd.f32 %v1402, %v1666
    %v1772 = vadd.f32 %v1403, %v1670
    %v1773 = vadd.f32 %v1404, %v1672
    %v1774 = vadd.f32 %v1405, %v1676
    %v1775 = vadd.f32 %v1406, %v1678
    %v1776 = vadd.f32 %v1407, %v1682
    %v1777 = vadd.f32 %v1408, %v1684
    %v1778 = vadd.f32 %v1409, %v1688
    %v1779 = vadd.f32 %v1410, %v1690
    %v1780 = vadd.f32 %v1411, %v1694
    %v1781 = vadd.f32 %v1412, %v1696
    %v1782 = vadd.f32 %v1413, %v1700
    %v1783 = vadd.f32 %v1414, %v1702
    %v1784 = vadd.f32 %v1415, %v1706
    %v1785 = vadd.f32 %v1416, %v1708
    %v1786 = vadd.f32 %v1417, %v1712
    %v1787 = vadd.f32 %v1418, %v1714
    %v1788 = vadd.f32 %v1419, %v1718
    %v1789 = vadd.f32 %v1420, %v1720
    %v1790 = vadd.f32 %v1421, %v1724
    %v1791 = vadd.f32 %v1422, %v1726
    %v1792 = vadd.f32 %v1423, %v1730
    %v1793 = vadd.f32 %v1424, %v1732
    %v1794 = vadd.f32 %v1425, %v1736
    %v1795 = vadd.f32 %v1426, %v1738
    %v1796 = vadd.f32 %v1427, %v1742
    %v1797 = vadd.f32 %v1428, %v1744
    %v1798 = vadd.f32 %v1429, %v1748
    %v1799 = vadd.f32 %v1430, %v1750
    %v1800 = vld [vmem:[%s3] sm:$0xff]
    %v1801 = vld [vmem:[%s3 + $0x8] sm:$0xff]
    %v1802 = vld [vmem:[%s3 + $0x10] sm:$0xff]
    %v1803 = vld [vmem:[%s3 + $0x18] sm:$0xff]
    %v1804 = vld [vmem:[%s3 + $0x20] sm:$0xff]
    %v1805 = vld [vmem:[%s3 + $0x28] sm:$0xff]
    %v1806 = vld [vmem:[%s3 + $0x30] sm:$0xff]
    %v1807 = vld [vmem:[%s3 + $0x38] sm:$0xff]
    %v1808 = vld [vmem:[%s3 + $0x40] sm:$0xff]
    %v1809 = vld [vmem:[%s3 + $0x48] sm:$0xff]
    %v1810 = vld [vmem:[%s3 + $0x50] sm:$0xff]
    %v1811 = vld [vmem:[%s3 + $0x58] sm:$0xff]
    %v1812 = vld [vmem:[%s3 + $0x60] sm:$0xff]
    %v1813 = vld [vmem:[%s3 + $0x68] sm:$0xff]
    %v1814 = vld [vmem:[%s3 + $0x70] sm:$0xff]
    %v1815 = vld [vmem:[%s3 + $0x78] sm:$0xff]
    %v1816 = vld [vmem:[%s3 + $0x80] sm:$0xff]
    %v1817 = vld [vmem:[%s3 + $0x88] sm:$0xff]
    %v1818 = vld [vmem:[%s3 + $0x90] sm:$0xff]
    %v1819 = vld [vmem:[%s3 + $0x98] sm:$0xff]
    %v1820 = vld [vmem:[%s3 + $0xa0] sm:$0xff]
    %v1821 = vld [vmem:[%s3 + $0xa8] sm:$0xff]
    %v1822 = vld [vmem:[%s3 + $0xb0] sm:$0xff]
    %v1823 = vld [vmem:[%s3 + $0xb8] sm:$0xff]
    %v1824 = vld [vmem:[%s3 + $0xc0] sm:$0xff]
    %v1825 = vld [vmem:[%s3 + $0xc8] sm:$0xff]
    %v1826 = vld [vmem:[%s3 + $0xd0] sm:$0xff]
    %v1827 = vld [vmem:[%s3 + $0xd8] sm:$0xff]
    %v1828 = vld [vmem:[%s3 + $0xe0] sm:$0xff]
    %v1829 = vld [vmem:[%s3 + $0xe8] sm:$0xff]
    %v1830 = vld [vmem:[%s3 + $0xf0] sm:$0xff]
    %v1831 = vld [vmem:[%s3 + $0xf8] sm:$0xff]
    %v1832 = vld [vmem:[%s3 + $0x100] sm:$0xff]
    %v1833 = vld [vmem:[%s3 + $0x108] sm:$0xff]
    %v1834 = vld [vmem:[%s3 + $0x110] sm:$0xff]
    %v1835 = vld [vmem:[%s3 + $0x118] sm:$0xff]
    %v1836 = vld [vmem:[%s3 + $0x120] sm:$0xff]
    %v1837 = vld [vmem:[%s3 + $0x128] sm:$0xff]
    %v1838 = vld [vmem:[%s3 + $0x130] sm:$0xff]
    %v1839 = vld [vmem:[%s3 + $0x138] sm:$0xff]
    %v1840 = vld [vmem:[%s3 + $0x140] sm:$0xff]
    %v1841 = vld [vmem:[%s3 + $0x148] sm:$0xff]
    %v1842 = vld [vmem:[%s3 + $0x150] sm:$0xff]
    %v1843 = vld [vmem:[%s3 + $0x158] sm:$0xff]
    %v1844 = vld [vmem:[%s3 + $0x160] sm:$0xff]
    %v1845 = vld [vmem:[%s3 + $0x168] sm:$0xff]
    %v1846 = vld [vmem:[%s3 + $0x170] sm:$0xff]
    %v1847 = vld [vmem:[%s3 + $0x178] sm:$0xff]
    %v1848 = vld [vmem:[%s3 + $0x180] sm:$0xff]
    %v1849 = vld [vmem:[%s3 + $0x188] sm:$0xff]
    %v1850 = vld [vmem:[%s3 + $0x190] sm:$0xff]
    %v1851 = vld [vmem:[%s3 + $0x198] sm:$0xff]
    %v1852 = vld [vmem:[%s3 + $0x1a0] sm:$0xff]
    %v1853 = vld [vmem:[%s3 + $0x1a8] sm:$0xff]
    %v1854 = vld [vmem:[%s3 + $0x1b0] sm:$0xff]
    %v1855 = vld [vmem:[%s3 + $0x1b8] sm:$0xff]
    %v1856 = vld [vmem:[%s3 + $0x1c0] sm:$0xff]
    %v1857 = vld [vmem:[%s3 + $0x1c8] sm:$0xff]
    %v1858 = vld [vmem:[%s3 + $0x1d0] sm:$0xff]
    %v1859 = vld [vmem:[%s3 + $0x1d8] sm:$0xff]
    %v1860 = vld [vmem:[%s3 + $0x1e0] sm:$0xff]
    %v1861 = vld [vmem:[%s3 + $0x1e8] sm:$0xff]
    %v1862 = vld [vmem:[%s3 + $0x1f0] sm:$0xff]
    %v1863 = vld [vmem:[%s3 + $0x1f8] sm:$0xff]
    %v1864 = vld [vmem:[%s3 + $0x200] sm:$0xff]
    %v1865 = vld [vmem:[%s3 + $0x208] sm:$0xff]
    %v1866 = vld [vmem:[%s3 + $0x210] sm:$0xff]
    %v1867 = vld [vmem:[%s3 + $0x218] sm:$0xff]
    %v1868 = vld [vmem:[%s3 + $0x220] sm:$0xff]
    %v1869 = vld [vmem:[%s3 + $0x228] sm:$0xff]
    %v1870 = vld [vmem:[%s3 + $0x230] sm:$0xff]
    %v1871 = vld [vmem:[%s3 + $0x238] sm:$0xff]
    %v1872 = vld [vmem:[%s3 + $0x240] sm:$0xff]
    %v1873 = vld [vmem:[%s3 + $0x248] sm:$0xff]
    %v1874 = vld [vmem:[%s3 + $0x250] sm:$0xff]
    %v1875 = vld [vmem:[%s3 + $0x258] sm:$0xff]
    %v1876 = vld [vmem:[%s3 + $0x260] sm:$0xff]
    %v1877 = vld [vmem:[%s3 + $0x268] sm:$0xff]
    %v1878 = vld [vmem:[%s3 + $0x270] sm:$0xff]
    %v1879 = vld [vmem:[%s3 + $0x278] sm:$0xff]
    %vm1880 = vcmask 523264
    %v1882 = vsel %vm1880, %v1801, 0
    %v1885 = vsel %vm1880, %v1803, 0
    %v1888 = vsel %vm1880, %v1805, 0
    %v1891 = vsel %vm1880, %v1807, 0
    %v1894 = vsel %vm1880, %v1809, 0
    %v1897 = vsel %vm1880, %v1811, 0
    %v1900 = vsel %vm1880, %v1813, 0
    %v1903 = vsel %vm1880, %v1815, 0
    %v1906 = vsel %vm1880, %v1817, 0
    %v1909 = vsel %vm1880, %v1819, 0
    %v1912 = vsel %vm1880, %v1821, 0
    %v1915 = vsel %vm1880, %v1823, 0
    %v1918 = vsel %vm1880, %v1825, 0
    %v1921 = vsel %vm1880, %v1827, 0
    %v1924 = vsel %vm1880, %v1829, 0
    %v1927 = vsel %vm1880, %v1831, 0
    %v1930 = vsel %vm1880, %v1833, 0
    %v1933 = vsel %vm1880, %v1835, 0
    %v1936 = vsel %vm1880, %v1837, 0
    %v1939 = vsel %vm1880, %v1839, 0
    %v1942 = vsel %vm1880, %v1841, 0
    %v1945 = vsel %vm1880, %v1843, 0
    %v1948 = vsel %vm1880, %v1845, 0
    %v1951 = vsel %vm1880, %v1847, 0
    %v1954 = vsel %vm1880, %v1849, 0
    %v1957 = vsel %vm1880, %v1851, 0
    %v1960 = vsel %vm1880, %v1853, 0
    %v1963 = vsel %vm1880, %v1855, 0
    %v1966 = vsel %vm1880, %v1857, 0
    %v1969 = vsel %vm1880, %v1859, 0
    %v1972 = vsel %vm1880, %v1861, 0
    %v1975 = vsel %vm1880, %v1863, 0
    %v1978 = vsel %vm1880, %v1865, 0
    %v1981 = vsel %vm1880, %v1867, 0
    %v1984 = vsel %vm1880, %v1869, 0
    %v1987 = vsel %vm1880, %v1871, 0
    %v1990 = vsel %vm1880, %v1873, 0
    %v1993 = vsel %vm1880, %v1875, 0
    %v1996 = vsel %vm1880, %v1877, 0
    %v1999 = vsel %vm1880, %v1879, 0
    %2001 = vmatprep.subr.mxu0 %v1753
    %2002 = vmatpush1.msra.mxu0 %v1752
    %2003 = vmatprep.subr.mxu0 %v1755
    %2004 = vmatpush1.msra.mxu0 %v1754
    %2005 = vmatprep.subr.mxu0 %v1757
    %2006 = vmatpush1.msra.mxu0 %v1756
    %2007 = vmatprep.subr.mxu0 %v1759
    %2008 = vmatpush1.msra.mxu0 %v1758
    %2009 = vmatprep.subr.mxu0 %v1761
    %2010 = vmatpush1.msra.mxu0 %v1760
    %2011 = vmatprep.subr.mxu0 %v1763
    %2012 = vmatpush1.msra.mxu0 %v1762
    %2013 = vmatprep.subr.mxu0 %v1765
    %2014 = vmatpush1.msra.mxu0 %v1764
    %2015 = vmatprep.subr.mxu0 %v1767
    %2016 = vmatpush1.msra.mxu0 %v1766
    %2017 = vmatprep.subr.mxu0 %v1769
    %2018 = vmatpush1.msra.mxu0 %v1768
    %2019 = vmatprep.subr.mxu0 %v1771
    %2020 = vmatpush1.msra.mxu0 %v1770
    %2021 = vmatprep.subr.mxu0 %v1773
    %2022 = vmatpush1.msra.mxu0 %v1772
    %2023 = vmatprep.subr.mxu0 %v1775
    %2024 = vmatpush1.msra.mxu0 %v1774
    %2025 = vmatprep.subr.mxu0 %v1777
    %2026 = vmatpush1.msra.mxu0 %v1776
    %2027 = vmatprep.subr.mxu0 %v1779
    %2028 = vmatpush1.msra.mxu0 %v1778
    %2029 = vmatprep.subr.mxu0 %v1781
    %2030 = vmatpush1.msra.mxu0 %v1780
    %2031 = vmatprep.subr.mxu0 %v1783
    %2032 = vmatpush1.msra.mxu0 %v1782
    %2033 = vmatprep.subr.mxu0 %v1785
    %2034 = vmatpush1.msra.mxu0 %v1784
    %2035 = vmatprep.subr.mxu0 %v1787
    %2036 = vmatpush1.msra.mxu0 %v1786
    %2037 = vmatprep.subr.mxu0 %v1789
    %2038 = vmatpush1.msra.mxu0 %v1788
    %2039 = vmatprep.subr.mxu0 %v1791
    %2040 = vmatpush1.msra.mxu0 %v1790
    %2041 = vmatprep.subr.mxu0 %v1793
    %2042 = vmatpush1.msra.mxu0 %v1792
    %2043 = vmatprep.subr.mxu0 %v1795
    %2044 = vmatpush1.msra.mxu0 %v1794
    %2045 = vmatprep.subr.mxu0 %v1797
    %2046 = vmatpush1.msra.mxu0 %v1796
    %2047 = vmatprep.subr.mxu0 %v1799
    %2048 = vmatpush1.msra.mxu0 %v1798
    %2049 = vmatprep.subr.mxu0 0.0
    %2050 = vmatpush1.msra.mxu0 0.0
    %2051 = vmatprep.subr.mxu0 0.0
    %2052 = vmatpush1.msra.mxu0 0.0
    %2053 = vmatprep.subr.mxu0 0.0
    %2054 = vmatpush1.msra.mxu0 0.0
    %2055 = vmatprep.subr.mxu0 0.0
    %2056 = vmatpush1.msra.mxu0 0.0
    %2057 = vmatprep.subr.mxu0 0.0
    %2058 = vmatpush1.msra.mxu0 0.0
    %2059 = vmatprep.subr.mxu0 0.0
    %2060 = vmatpush1.msra.mxu0 0.0
    %2061 = vmatprep.subr.mxu0 0.0
    %2062 = vmatpush1.msra.mxu0 0.0
    %2063 = vmatprep.subr.mxu0 0.0
    %2064 = vmatpush1.msra.mxu0 0.0
    %2065 = vmatprep.mubr.f32.mxu0 %v1882
    %2066 = vmatmul.mubr.f32.gmra.mrb[0].mxu0 %v1800
    %v2067 = vpop.f32.mrb[0].mxu0
    %v2068 = vadd.f32 0.0, %v2067
    %v2069 = vpop.f32.mrb[0].mxu0
    %v2070 = vadd.f32 0.0, %v2069
    %2071 = vmatprep.mubr.f32.mxu0 %v1885
    %2072 = vmatmul.mubr.f32.gmra.mrb[0].mxu0 %v1802
    %v2073 = vpop.f32.mrb[0].mxu0
    %v2074 = vadd.f32 0.0, %v2073
    %v2075 = vpop.f32.mrb[0].mxu0
    %v2076 = vadd.f32 0.0, %v2075
    %2077 = vmatprep.mubr.f32.mxu0 %v1888
    %2078 = vmatmul.mubr.f32.gmra.mrb[0].mxu0 %v1804
    %v2079 = vpop.f32.mrb[0].mxu0
    %v2080 = vadd.f32 0.0, %v2079
    %v2081 = vpop.f32.mrb[0].mxu0
    %v2082 = vadd.f32 0.0, %v2081
    %2083 = vmatprep.mubr.f32.mxu0 %v1891
    %2084 = vmatmul.mubr.f32.gmra.mrb[0].mxu0 %v1806
    %v2085 = vpop.f32.mrb[0].mxu0
    %v2086 = vadd.f32 0.0, %v2085
    %v2087 = vpop.f32.mrb[0].mxu0
    %v2088 = vadd.f32 0.0, %v2087
    %2089 = vmatprep.mubr.f32.mxu0 %v1894
    %2090 = vmatmul.mubr.f32.gmra.mrb[0].mxu0 %v1808
    %v2091 = vpop.f32.mrb[0].mxu0
    %v2092 = vadd.f32 0.0, %v2091
    %v2093 = vpop.f32.mrb[0].mxu0
    %v2094 = vadd.f32 0.0, %v2093
    %2095 = vmatprep.mubr.f32.mxu0 %v1897
    %2096 = vmatmul.mubr.f32.gmra.mrb[0].mxu0 %v1810
    %v2097 = vpop.f32.mrb[0].mxu0
    %v2098 = vadd.f32 0.0, %v2097
    %v2099 = vpop.f32.mrb[0].mxu0
    %v2100 = vadd.f32 0.0, %v2099
    %2101 = vmatprep.mubr.f32.mxu0 %v1900
    %2102 = vmatmul.mubr.f32.gmra.mrb[0].mxu0 %v1812
    %v2103 = vpop.f32.mrb[0].mxu0
    %v2104 = vadd.f32 0.0, %v2103
    %v2105 = vpop.f32.mrb[0].mxu0
    %v2106 = vadd.f32 0.0, %v2105
    %2107 = vmatprep.mubr.f32.mxu0 %v1903
    %2108 = vmatmul.mubr.f32.gmra.mrb[0].mxu0 %v1814
    %v2109 = vpop.f32.mrb[0].mxu0
    %v2110 = vadd.f32 0.0, %v2109
    %v2111 = vpop.f32.mrb[0].mxu0
    %v2112 = vadd.f32 0.0, %v2111
    %2113 = vmatprep.mubr.f32.mxu0 %v1906
    %2114 = vmatmul.mubr.f32.gmra.mrb[0].mxu0 %v1816
    %v2115 = vpop.f32.mrb[0].mxu0
    %v2116 = vadd.f32 0.0, %v2115
    %v2117 = vpop.f32.mrb[0].mxu0
    %v2118 = vadd.f32 0.0, %v2117
    %2119 = vmatprep.mubr.f32.mxu0 %v1909
    %2120 = vmatmul.mubr.f32.gmra.mrb[0].mxu0 %v1818
    %v2121 = vpop.f32.mrb[0].mxu0
    %v2122 = vadd.f32 0.0, %v2121
    %v2123 = vpop.f32.mrb[0].mxu0
    %v2124 = vadd.f32 0.0, %v2123
    %2125 = vmatprep.mubr.f32.mxu0 %v1912
    %2126 = vmatmul.mubr.f32.gmra.mrb[0].mxu0 %v1820
    %v2127 = vpop.f32.mrb[0].mxu0
    %v2128 = vadd.f32 0.0, %v2127
    %v2129 = vpop.f32.mrb[0].mxu0
    %v2130 = vadd.f32 0.0, %v2129
    %2131 = vmatprep.mubr.f32.mxu0 %v1915
    %2132 = vmatmul.mubr.f32.gmra.mrb[0].mxu0 %v1822
    %v2133 = vpop.f32.mrb[0].mxu0
    %v2134 = vadd.f32 0.0, %v2133
    %v2135 = vpop.f32.mrb[0].mxu0
    %v2136 = vadd.f32 0.0, %v2135
    %2137 = vmatprep.mubr.f32.mxu0 %v1918
    %2138 = vmatmul.mubr.f32.gmra.mrb[0].mxu0 %v1824
    %v2139 = vpop.f32.mrb[0].mxu0
    %v2140 = vadd.f32 0.0, %v2139
    %v2141 = vpop.f32.mrb[0].mxu0
    %v2142 = vadd.f32 0.0, %v2141
    %2143 = vmatprep.mubr.f32.mxu0 %v1921
    %2144 = vmatmul.mubr.f32.gmra.mrb[0].mxu0 %v1826
    %v2145 = vpop.f32.mrb[0].mxu0
    %v2146 = vadd.f32 0.0, %v2145
    %v2147 = vpop.f32.mrb[0].mxu0
    %v2148 = vadd.f32 0.0, %v2147
    %2149 = vmatprep.mubr.f32.mxu0 %v1924
    %2150 = vmatmul.mubr.f32.gmra.mrb[0].mxu0 %v1828
    %v2151 = vpop.f32.mrb[0].mxu0
    %v2152 = vadd.f32 0.0, %v2151
    %v2153 = vpop.f32.mrb[0].mxu0
    %v2154 = vadd.f32 0.0, %v2153
    %2155 = vmatprep.mubr.f32.mxu0 %v1927
    %2156 = vmatmul.mubr.f32.gmra.mrb[0].mxu0 %v1830
    %v2157 = vpop.f32.mrb[0].mxu0
    %v2158 = vadd.f32 0.0, %v2157
    %v2159 = vpop.f32.mrb[0].mxu0
    %v2160 = vadd.f32 0.0, %v2159
    %2161 = vmatprep.mubr.f32.mxu0 %v1930
    %2162 = vmatmul.mubr.f32.gmra.mrb[0].mxu0 %v1832
    %v2163 = vpop.f32.mrb[0].mxu0
    %v2164 = vadd.f32 0.0, %v2163
    %v2165 = vpop.f32.mrb[0].mxu0
    %v2166 = vadd.f32 0.0, %v2165
    %2167 = vmatprep.mubr.f32.mxu0 %v1933
    %2168 = vmatmul.mubr.f32.gmra.mrb[0].mxu0 %v1834
    %v2169 = vpop.f32.mrb[0].mxu0
    %v2170 = vadd.f32 0.0, %v2169
    %v2171 = vpop.f32.mrb[0].mxu0
    %v2172 = vadd.f32 0.0, %v2171
    %2173 = vmatprep.mubr.f32.mxu0 %v1936
    %2174 = vmatmul.mubr.f32.gmra.mrb[0].mxu0 %v1836
    %v2175 = vpop.f32.mrb[0].mxu0
    %v2176 = vadd.f32 0.0, %v2175
    %v2177 = vpop.f32.mrb[0].mxu0
    %v2178 = vadd.f32 0.0, %v2177
    %2179 = vmatprep.mubr.f32.mxu0 %v1939
    %2180 = vmatmul.mubr.f32.gmra.mrb[0].mxu0 %v1838
    %v2181 = vpop.f32.mrb[0].mxu0
    %v2182 = vadd.f32 0.0, %v2181
    %v2183 = vpop.f32.mrb[0].mxu0
    %v2184 = vadd.f32 0.0, %v2183
    %2185 = vmatprep.mubr.f32.mxu0 %v1942
    %2186 = vmatmul.mubr.f32.gmra.mrb[0].mxu0 %v1840
    %v2187 = vpop.f32.mrb[0].mxu0
    %v2188 = vadd.f32 0.0, %v2187
    %v2189 = vpop.f32.mrb[0].mxu0
    %v2190 = vadd.f32 0.0, %v2189
    %2191 = vmatprep.mubr.f32.mxu0 %v1945
    %2192 = vmatmul.mubr.f32.gmra.mrb[0].mxu0 %v1842
    %v2193 = vpop.f32.mrb[0].mxu0
    %v2194 = vadd.f32 0.0, %v2193
    %v2195 = vpop.f32.mrb[0].mxu0
    %v2196 = vadd.f32 0.0, %v2195
    %2197 = vmatprep.mubr.f32.mxu0 %v1948
    %2198 = vmatmul.mubr.f32.gmra.mrb[0].mxu0 %v1844
    %v2199 = vpop.f32.mrb[0].mxu0
    %v2200 = vadd.f32 0.0, %v2199
    %v2201 = vpop.f32.mrb[0].mxu0
    %v2202 = vadd.f32 0.0, %v2201
    %2203 = vmatprep.mubr.f32.mxu0 %v1951
    %2204 = vmatmul.mubr.f32.gmra.mrb[0].mxu0 %v1846
    %v2205 = vpop.f32.mrb[0].mxu0
    %v2206 = vadd.f32 0.0, %v2205
    %v2207 = vpop.f32.mrb[0].mxu0
    %v2208 = vadd.f32 0.0, %v2207
    %2209 = vmatprep.mubr.f32.mxu0 %v1954
    %2210 = vmatmul.mubr.f32.gmra.mrb[0].mxu0 %v1848
    %v2211 = vpop.f32.mrb[0].mxu0
    %v2212 = vadd.f32 0.0, %v2211
    %v2213 = vpop.f32.mrb[0].mxu0
    %v2214 = vadd.f32 0.0, %v2213
    %2215 = vmatprep.mubr.f32.mxu0 %v1957
    %2216 = vmatmul.mubr.f32.gmra.mrb[0].mxu0 %v1850
    %v2217 = vpop.f32.mrb[0].mxu0
    %v2218 = vadd.f32 0.0, %v2217
    %v2219 = vpop.f32.mrb[0].mxu0
    %v2220 = vadd.f32 0.0, %v2219
    %2221 = vmatprep.mubr.f32.mxu0 %v1960
    %2222 = vmatmul.mubr.f32.gmra.mrb[0].mxu0 %v1852
    %v2223 = vpop.f32.mrb[0].mxu0
    %v2224 = vadd.f32 0.0, %v2223
    %v2225 = vpop.f32.mrb[0].mxu0
    %v2226 = vadd.f32 0.0, %v2225
    %2227 = vmatprep.mubr.f32.mxu0 %v1963
    %2228 = vmatmul.mubr.f32.gmra.mrb[0].mxu0 %v1854
    %v2229 = vpop.f32.mrb[0].mxu0
    %v2230 = vadd.f32 0.0, %v2229
    %v2231 = vpop.f32.mrb[0].mxu0
    %v2232 = vadd.f32 0.0, %v2231
    %2233 = vmatprep.mubr.f32.mxu0 %v1966
    %2234 = vmatmul.mubr.f32.gmra.mrb[0].mxu0 %v1856
    %v2235 = vpop.f32.mrb[0].mxu0
    %v2236 = vadd.f32 0.0, %v2235
    %v2237 = vpop.f32.mrb[0].mxu0
    %v2238 = vadd.f32 0.0, %v2237
    %2239 = vmatprep.mubr.f32.mxu0 %v1969
    %2240 = vmatmul.mubr.f32.gmra.mrb[0].mxu0 %v1858
    %v2241 = vpop.f32.mrb[0].mxu0
    %v2242 = vadd.f32 0.0, %v2241
    %v2243 = vpop.f32.mrb[0].mxu0
    %v2244 = vadd.f32 0.0, %v2243
    %2245 = vmatprep.mubr.f32.mxu0 %v1972
    %2246 = vmatmul.mubr.f32.gmra.mrb[0].mxu0 %v1860
    %v2247 = vpop.f32.mrb[0].mxu0
    %v2248 = vadd.f32 0.0, %v2247
    %v2249 = vpop.f32.mrb[0].mxu0
    %v2250 = vadd.f32 0.0, %v2249
    %2251 = vmatprep.mubr.f32.mxu0 %v1975
    %2252 = vmatmul.mubr.f32.gmra.mrb[0].mxu0 %v1862
    %v2253 = vpop.f32.mrb[0].mxu0
    %v2254 = vadd.f32 0.0, %v2253
    %v2255 = vpop.f32.mrb[0].mxu0
    %v2256 = vadd.f32 0.0, %v2255
    %2257 = vmatprep.mubr.f32.mxu0 %v1978
    %2258 = vmatmul.mubr.f32.gmra.mrb[0].mxu0 %v1864
    %v2259 = vpop.f32.mrb[0].mxu0
    %v2260 = vadd.f32 0.0, %v2259
    %v2261 = vpop.f32.mrb[0].mxu0
    %v2262 = vadd.f32 0.0, %v2261
    %2263 = vmatprep.mubr.f32.mxu0 %v1981
    %2264 = vmatmul.mubr.f32.gmra.mrb[0].mxu0 %v1866
    %v2265 = vpop.f32.mrb[0].mxu0
    %v2266 = vadd.f32 0.0, %v2265
    %v2267 = vpop.f32.mrb[0].mxu0
    %v2268 = vadd.f32 0.0, %v2267
    %2269 = vmatprep.mubr.f32.mxu0 %v1984
    %2270 = vmatmul.mubr.f32.gmra.mrb[0].mxu0 %v1868
    %v2271 = vpop.f32.mrb[0].mxu0
    %v2272 = vadd.f32 0.0, %v2271
    %v2273 = vpop.f32.mrb[0].mxu0
    %v2274 = vadd.f32 0.0, %v2273
    %2275 = vmatprep.mubr.f32.mxu0 %v1987
    %2276 = vmatmul.mubr.f32.gmra.mrb[0].mxu0 %v1870
    %v2277 = vpop.f32.mrb[0].mxu0
    %v2278 = vadd.f32 0.0, %v2277
    %v2279 = vpop.f32.mrb[0].mxu0
    %v2280 = vadd.f32 0.0, %v2279
    %2281 = vmatprep.mubr.f32.mxu0 %v1990
    %2282 = vmatmul.mubr.f32.gmra.mrb[0].mxu0 %v1872
    %v2283 = vpop.f32.mrb[0].mxu0
    %v2284 = vadd.f32 0.0, %v2283
    %v2285 = vpop.f32.mrb[0].mxu0
    %v2286 = vadd.f32 0.0, %v2285
    %2287 = vmatprep.mubr.f32.mxu0 %v1993
    %2288 = vmatmul.mubr.f32.gmra.mrb[0].mxu0 %v1874
    %v2289 = vpop.f32.mrb[0].mxu0
    %v2290 = vadd.f32 0.0, %v2289
    %v2291 = vpop.f32.mrb[0].mxu0
    %v2292 = vadd.f32 0.0, %v2291
    %2293 = vmatprep.mubr.f32.mxu0 %v1996
    %2294 = vmatmul.mubr.f32.gmra.mrb[0].mxu0 %v1876
    %v2295 = vpop.f32.mrb[0].mxu0
    %v2296 = vadd.f32 0.0, %v2295
    %v2297 = vpop.f32.mrb[0].mxu0
    %v2298 = vadd.f32 0.0, %v2297
    %2299 = vmatprep.mubr.f32.mxu0 %v1999
    %2300 = vmatmul.mubr.f32.gmra.mrb[0].mxu0 %v1878
    %v2301 = vpop.f32.mrb[0].mxu0
    %v2302 = vadd.f32 0.0, %v2301
    %v2303 = vpop.f32.mrb[0].mxu0
    %v2304 = vadd.f32 0.0, %v2303
    %2305 = vdwg.mxu0
    %v2306 = vld [vmem:[%s4] sm:$0xff]
    %v2307 = vld [vmem:[%s4 + $0x8] sm:$0xff]
    %v2308 = vld [vmem:[%s4 + $0x10] sm:$0xff]
    %v2309 = vld [vmem:[%s4 + $0x18] sm:$0xff]
    %v2310 = vld [vmem:[%s4 + $0x20] sm:$0xff]
    %v2311 = vld [vmem:[%s4 + $0x28] sm:$0xff]
    %v2312 = vld [vmem:[%s4 + $0x30] sm:$0xff]
    %v2313 = vld [vmem:[%s4 + $0x38] sm:$0xff]
    %v2314 = vld [vmem:[%s4 + $0x40] sm:$0xff]
    %v2315 = vld [vmem:[%s4 + $0x48] sm:$0xff]
    %v2316 = vld [vmem:[%s4 + $0x50] sm:$0xff]
    %v2317 = vld [vmem:[%s4 + $0x58] sm:$0xff]
    %v2318 = vld [vmem:[%s4 + $0x60] sm:$0xff]
    %v2319 = vld [vmem:[%s4 + $0x68] sm:$0xff]
    %v2320 = vld [vmem:[%s4 + $0x70] sm:$0xff]
    %v2321 = vld [vmem:[%s4 + $0x78] sm:$0xff]
    %v2322 = vld [vmem:[%s4 + $0x80] sm:$0xff]
    %v2323 = vld [vmem:[%s4 + $0x88] sm:$0xff]
    %v2324 = vld [vmem:[%s4 + $0x90] sm:$0xff]
    %v2325 = vld [vmem:[%s4 + $0x98] sm:$0xff]
    %v2326 = vld [vmem:[%s4 + $0xa0] sm:$0xff]
    %v2327 = vld [vmem:[%s4 + $0xa8] sm:$0xff]
    %v2328 = vld [vmem:[%s4 + $0xb0] sm:$0xff]
    %v2329 = vld [vmem:[%s4 + $0xb8] sm:$0xff]
    %v2330 = vld [vmem:[%s4 + $0xc0] sm:$0xff]
    %v2331 = vld [vmem:[%s4 + $0xc8] sm:$0xff]
    %v2332 = vld [vmem:[%s4 + $0xd0] sm:$0xff]
    %v2333 = vld [vmem:[%s4 + $0xd8] sm:$0xff]
    %v2334 = vld [vmem:[%s4 + $0xe0] sm:$0xff]
    %v2335 = vld [vmem:[%s4 + $0xe8] sm:$0xff]
    %v2336 = vld [vmem:[%s4 + $0xf0] sm:$0xff]
    %v2337 = vld [vmem:[%s4 + $0xf8] sm:$0xff]
    %v2338 = vld [vmem:[%s4 + $0x100] sm:$0xff]
    %v2339 = vld [vmem:[%s4 + $0x108] sm:$0xff]
    %v2340 = vld [vmem:[%s4 + $0x110] sm:$0xff]
    %v2341 = vld [vmem:[%s4 + $0x118] sm:$0xff]
    %v2342 = vld [vmem:[%s4 + $0x120] sm:$0xff]
    %v2343 = vld [vmem:[%s4 + $0x128] sm:$0xff]
    %v2344 = vld [vmem:[%s4 + $0x130] sm:$0xff]
    %v2345 = vld [vmem:[%s4 + $0x138] sm:$0xff]
    %v2346 = vld [vmem:[%s4 + $0x140] sm:$0xff]
    %v2347 = vld [vmem:[%s4 + $0x148] sm:$0xff]
    %v2348 = vld [vmem:[%s4 + $0x150] sm:$0xff]
    %v2349 = vld [vmem:[%s4 + $0x158] sm:$0xff]
    %v2350 = vld [vmem:[%s4 + $0x160] sm:$0xff]
    %v2351 = vld [vmem:[%s4 + $0x168] sm:$0xff]
    %v2352 = vld [vmem:[%s4 + $0x170] sm:$0xff]
    %v2353 = vld [vmem:[%s4 + $0x178] sm:$0xff]
    %v2354 = vld [vmem:[%s4 + $0x180] sm:$0xff]
    %v2355 = vld [vmem:[%s4 + $0x188] sm:$0xff]
    %v2356 = vld [vmem:[%s4 + $0x190] sm:$0xff]
    %v2357 = vld [vmem:[%s4 + $0x198] sm:$0xff]
    %v2358 = vld [vmem:[%s4 + $0x1a0] sm:$0xff]
    %v2359 = vld [vmem:[%s4 + $0x1a8] sm:$0xff]
    %v2360 = vld [vmem:[%s4 + $0x1b0] sm:$0xff]
    %v2361 = vld [vmem:[%s4 + $0x1b8] sm:$0xff]
    %v2362 = vld [vmem:[%s4 + $0x1c0] sm:$0xff]
    %v2363 = vld [vmem:[%s4 + $0x1c8] sm:$0xff]
    %v2364 = vld [vmem:[%s4 + $0x1d0] sm:$0xff]
    %v2365 = vld [vmem:[%s4 + $0x1d8] sm:$0xff]
    %v2366 = vld [vmem:[%s4 + $0x1e0] sm:$0xff]
    %v2367 = vld [vmem:[%s4 + $0x1e8] sm:$0xff]
    %v2368 = vld [vmem:[%s4 + $0x1f0] sm:$0xff]
    %v2369 = vld [vmem:[%s4 + $0x1f8] sm:$0xff]
    %v2370 = vld [vmem:[%s4 + $0x200] sm:$0xff]
    %v2371 = vld [vmem:[%s4 + $0x208] sm:$0xff]
    %v2372 = vld [vmem:[%s4 + $0x210] sm:$0xff]
    %v2373 = vld [vmem:[%s4 + $0x218] sm:$0xff]
    %v2374 = vld [vmem:[%s4 + $0x220] sm:$0xff]
    %v2375 = vld [vmem:[%s4 + $0x228] sm:$0xff]
    %v2376 = vld [vmem:[%s4 + $0x230] sm:$0xff]
    %v2377 = vld [vmem:[%s4 + $0x238] sm:$0xff]
    %v2378 = vld [vmem:[%s4 + $0x240] sm:$0xff]
    %v2379 = vld [vmem:[%s4 + $0x248] sm:$0xff]
    %v2380 = vld [vmem:[%s4 + $0x250] sm:$0xff]
    %v2381 = vld [vmem:[%s4 + $0x258] sm:$0xff]
    %v2382 = vld [vmem:[%s4 + $0x260] sm:$0xff]
    %v2383 = vld [vmem:[%s4 + $0x268] sm:$0xff]
    %v2384 = vld [vmem:[%s4 + $0x270] sm:$0xff]
    %v2385 = vld [vmem:[%s4 + $0x278] sm:$0xff]
    %v2387 = vsel %vm1880, %v2307, 0
    %v2390 = vsel %vm1880, %v2309, 0
    %v2393 = vsel %vm1880, %v2311, 0
    %v2396 = vsel %vm1880, %v2313, 0
    %v2399 = vsel %vm1880, %v2315, 0
    %v2402 = vsel %vm1880, %v2317, 0
    %v2405 = vsel %vm1880, %v2319, 0
    %v2408 = vsel %vm1880, %v2321, 0
    %v2411 = vsel %vm1880, %v2323, 0
    %v2414 = vsel %vm1880, %v2325, 0
    %v2417 = vsel %vm1880, %v2327, 0
    %v2420 = vsel %vm1880, %v2329, 0
    %v2423 = vsel %vm1880, %v2331, 0
    %v2426 = vsel %vm1880, %v2333, 0
    %v2429 = vsel %vm1880, %v2335, 0
    %v2432 = vsel %vm1880, %v2337, 0
    %v2435 = vsel %vm1880, %v2339, 0
    %v2438 = vsel %vm1880, %v2341, 0
    %v2441 = vsel %vm1880, %v2343, 0
    %v2444 = vsel %vm1880, %v2345, 0
    %v2447 = vsel %vm1880, %v2347, 0
    %v2450 = vsel %vm1880, %v2349, 0
    %v2453 = vsel %vm1880, %v2351, 0
    %v2456 = vsel %vm1880, %v2353, 0
    %v2459 = vsel %vm1880, %v2355, 0
    %v2462 = vsel %vm1880, %v2357, 0
    %v2465 = vsel %vm1880, %v2359, 0
    %v2468 = vsel %vm1880, %v2361, 0
    %v2471 = vsel %vm1880, %v2363, 0
    %v2474 = vsel %vm1880, %v2365, 0
    %v2477 = vsel %vm1880, %v2367, 0
    %v2480 = vsel %vm1880, %v2369, 0
    %v2483 = vsel %vm1880, %v2371, 0
    %v2486 = vsel %vm1880, %v2373, 0
    %v2489 = vsel %vm1880, %v2375, 0
    %v2492 = vsel %vm1880, %v2377, 0
    %v2495 = vsel %vm1880, %v2379, 0
    %v2498 = vsel %vm1880, %v2381, 0
    %v2501 = vsel %vm1880, %v2383, 0
    %v2504 = vsel %vm1880, %v2385, 0
    %2506 = vmatprep.subr.mxu0 %v1753
    %2507 = vmatpush1.msra.mxu0 %v1752
    %2508 = vmatprep.subr.mxu0 %v1755
    %2509 = vmatpush1.msra.mxu0 %v1754
    %2510 = vmatprep.subr.mxu0 %v1757
    %2511 = vmatpush1.msra.mxu0 %v1756
    %2512 = vmatprep.subr.mxu0 %v1759
    %2513 = vmatpush1.msra.mxu0 %v1758
    %2514 = vmatprep.subr.mxu0 %v1761
    %2515 = vmatpush1.msra.mxu0 %v1760
    %2516 = vmatprep.subr.mxu0 %v1763
    %2517 = vmatpush1.msra.mxu0 %v1762
    %2518 = vmatprep.subr.mxu0 %v1765
    %2519 = vmatpush1.msra.mxu0 %v1764
    %2520 = vmatprep.subr.mxu0 %v1767
    %2521 = vmatpush1.msra.mxu0 %v1766
    %2522 = vmatprep.subr.mxu0 %v1769
    %2523 = vmatpush1.msra.mxu0 %v1768
    %2524 = vmatprep.subr.mxu0 %v1771
    %2525 = vmatpush1.msra.mxu0 %v1770
    %2526 = vmatprep.subr.mxu0 %v1773
    %2527 = vmatpush1.msra.mxu0 %v1772
    %2528 = vmatprep.subr.mxu0 %v1775
    %2529 = vmatpush1.msra.mxu0 %v1774
    %2530 = vmatprep.subr.mxu0 %v1777
    %2531 = vmatpush1.msra.mxu0 %v1776
    %2532 = vmatprep.subr.mxu0 %v1779
    %2533 = vmatpush1.msra.mxu0 %v1778
    %2534 = vmatprep.subr.mxu0 %v1781
    %2535 = vmatpush1.msra.mxu0 %v1780
    %2536 = vmatprep.subr.mxu0 %v1783
    %2537 = vmatpush1.msra.mxu0 %v1782
    %2538 = vmatprep.subr.mxu0 %v1785
    %2539 = vmatpush1.msra.mxu0 %v1784
    %2540 = vmatprep.subr.mxu0 %v1787
    %2541 = vmatpush1.msra.mxu0 %v1786
    %2542 = vmatprep.subr.mxu0 %v1789
    %2543 = vmatpush1.msra.mxu0 %v1788
    %2544 = vmatprep.subr.mxu0 %v1791
    %2545 = vmatpush1.msra.mxu0 %v1790
    %2546 = vmatprep.subr.mxu0 %v1793
    %2547 = vmatpush1.msra.mxu0 %v1792
    %2548 = vmatprep.subr.mxu0 %v1795
    %2549 = vmatpush1.msra.mxu0 %v1794
    %2550 = vmatprep.subr.mxu0 %v1797
    %2551 = vmatpush1.msra.mxu0 %v1796
    %2552 = vmatprep.subr.mxu0 %v1799
    %2553 = vmatpush1.msra.mxu0 %v1798
    %2554 = vmatprep.subr.mxu0 0.0
    %2555 = vmatpush1.msra.mxu0 0.0
    %2556 = vmatprep.subr.mxu0 0.0
    %2557 = vmatpush1.msra.mxu0 0.0
    %2558 = vmatprep.subr.mxu0 0.0
    %2559 = vmatpush1.msra.mxu0 0.0
    %2560 = vmatprep.subr.mxu0 0.0
    %2561 = vmatpush1.msra.mxu0 0.0
    %2562 = vmatprep.subr.mxu0 0.0
    %2563 = vmatpush1.msra.mxu0 0.0
    %2564 = vmatprep.subr.mxu0 0.0
    %2565 = vmatpush1.msra.mxu0 0.0
    %2566 = vmatprep.subr.mxu0 0.0
    %2567 = vmatpush1.msra.mxu0 0.0
    %2568 = vmatprep.subr.mxu0 0.0
    %2569 = vmatpush1.msra.mxu0 0.0
    %2570 = vmatprep.mubr.f32.mxu0 %v2387
    %2571 = vmatmul.mubr.f32.gmra.mrb[0].mxu0 %v2306
    %v2572 = vpop.f32.mrb[0].mxu0
    %v2573 = vadd.f32 0.0, %v2572
    %v2574 = vpop.f32.mrb[0].mxu0
    %v2575 = vadd.f32 0.0, %v2574
    %2576 = vmatprep.mubr.f32.mxu0 %v2390
    %2577 = vmatmul.mubr.f32.gmra.mrb[0].mxu0 %v2308
    %v2578 = vpop.f32.mrb[0].mxu0
    %v2579 = vadd.f32 0.0, %v2578
    %v2580 = vpop.f32.mrb[0].mxu0
    %v2581 = vadd.f32 0.0, %v2580
    %2582 = vmatprep.mubr.f32.mxu0 %v2393
    %2583 = vmatmul.mubr.f32.gmra.mrb[0].mxu0 %v2310
    %v2584 = vpop.f32.mrb[0].mxu0
    %v2585 = vadd.f32 0.0, %v2584
    %v2586 = vpop.f32.mrb[0].mxu0
    %v2587 = vadd.f32 0.0, %v2586
    %2588 = vmatprep.mubr.f32.mxu0 %v2396
    %2589 = vmatmul.mubr.f32.gmra.mrb[0].mxu0 %v2312
    %v2590 = vpop.f32.mrb[0].mxu0
    %v2591 = vadd.f32 0.0, %v2590
    %v2592 = vpop.f32.mrb[0].mxu0
    %v2593 = vadd.f32 0.0, %v2592
    %2594 = vmatprep.mubr.f32.mxu0 %v2399
    %2595 = vmatmul.mubr.f32.gmra.mrb[0].mxu0 %v2314
    %v2596 = vpop.f32.mrb[0].mxu0
    %v2597 = vadd.f32 0.0, %v2596
    %v2598 = vpop.f32.mrb[0].mxu0
    %v2599 = vadd.f32 0.0, %v2598
    %2600 = vmatprep.mubr.f32.mxu0 %v2402
    %2601 = vmatmul.mubr.f32.gmra.mrb[0].mxu0 %v2316
    %v2602 = vpop.f32.mrb[0].mxu0
    %v2603 = vadd.f32 0.0, %v2602
    %v2604 = vpop.f32.mrb[0].mxu0
    %v2605 = vadd.f32 0.0, %v2604
    %2606 = vmatprep.mubr.f32.mxu0 %v2405
    %2607 = vmatmul.mubr.f32.gmra.mrb[0].mxu0 %v2318
    %v2608 = vpop.f32.mrb[0].mxu0
    %v2609 = vadd.f32 0.0, %v2608
    %v2610 = vpop.f32.mrb[0].mxu0
    %v2611 = vadd.f32 0.0, %v2610
    %2612 = vmatprep.mubr.f32.mxu0 %v2408
    %2613 = vmatmul.mubr.f32.gmra.mrb[0].mxu0 %v2320
    %v2614 = vpop.f32.mrb[0].mxu0
    %v2615 = vadd.f32 0.0, %v2614
    %v2616 = vpop.f32.mrb[0].mxu0
    %v2617 = vadd.f32 0.0, %v2616
    %2618 = vmatprep.mubr.f32.mxu0 %v2411
    %2619 = vmatmul.mubr.f32.gmra.mrb[0].mxu0 %v2322
    %v2620 = vpop.f32.mrb[0].mxu0
    %v2621 = vadd.f32 0.0, %v2620
    %v2622 = vpop.f32.mrb[0].mxu0
    %v2623 = vadd.f32 0.0, %v2622
    %2624 = vmatprep.mubr.f32.mxu0 %v2414
    %2625 = vmatmul.mubr.f32.gmra.mrb[0].mxu0 %v2324
    %v2626 = vpop.f32.mrb[0].mxu0
    %v2627 = vadd.f32 0.0, %v2626
    %v2628 = vpop.f32.mrb[0].mxu0
    %v2629 = vadd.f32 0.0, %v2628
    %2630 = vmatprep.mubr.f32.mxu0 %v2417
    %2631 = vmatmul.mubr.f32.gmra.mrb[0].mxu0 %v2326
    %v2632 = vpop.f32.mrb[0].mxu0
    %v2633 = vadd.f32 0.0, %v2632
    %v2634 = vpop.f32.mrb[0].mxu0
    %v2635 = vadd.f32 0.0, %v2634
    %2636 = vmatprep.mubr.f32.mxu0 %v2420
    %2637 = vmatmul.mubr.f32.gmra.mrb[0].mxu0 %v2328
    %v2638 = vpop.f32.mrb[0].mxu0
    %v2639 = vadd.f32 0.0, %v2638
    %v2640 = vpop.f32.mrb[0].mxu0
    %v2641 = vadd.f32 0.0, %v2640
    %2642 = vmatprep.mubr.f32.mxu0 %v2423
    %2643 = vmatmul.mubr.f32.gmra.mrb[0].mxu0 %v2330
    %v2644 = vpop.f32.mrb[0].mxu0
    %v2645 = vadd.f32 0.0, %v2644
    %v2646 = vpop.f32.mrb[0].mxu0
    %v2647 = vadd.f32 0.0, %v2646
    %2648 = vmatprep.mubr.f32.mxu0 %v2426
    %2649 = vmatmul.mubr.f32.gmra.mrb[0].mxu0 %v2332
    %v2650 = vpop.f32.mrb[0].mxu0
    %v2651 = vadd.f32 0.0, %v2650
    %v2652 = vpop.f32.mrb[0].mxu0
    %v2653 = vadd.f32 0.0, %v2652
    %2654 = vmatprep.mubr.f32.mxu0 %v2429
    %2655 = vmatmul.mubr.f32.gmra.mrb[0].mxu0 %v2334
    %v2656 = vpop.f32.mrb[0].mxu0
    %v2657 = vadd.f32 0.0, %v2656
    %v2658 = vpop.f32.mrb[0].mxu0
    %v2659 = vadd.f32 0.0, %v2658
    %2660 = vmatprep.mubr.f32.mxu0 %v2432
    %2661 = vmatmul.mubr.f32.gmra.mrb[0].mxu0 %v2336
    %v2662 = vpop.f32.mrb[0].mxu0
    %v2663 = vadd.f32 0.0, %v2662
    %v2664 = vpop.f32.mrb[0].mxu0
    %v2665 = vadd.f32 0.0, %v2664
    %2666 = vmatprep.mubr.f32.mxu0 %v2435
    %2667 = vmatmul.mubr.f32.gmra.mrb[0].mxu0 %v2338
    %v2668 = vpop.f32.mrb[0].mxu0
    %v2669 = vadd.f32 0.0, %v2668
    %v2670 = vpop.f32.mrb[0].mxu0
    %v2671 = vadd.f32 0.0, %v2670
    %2672 = vmatprep.mubr.f32.mxu0 %v2438
    %2673 = vmatmul.mubr.f32.gmra.mrb[0].mxu0 %v2340
    %v2674 = vpop.f32.mrb[0].mxu0
    %v2675 = vadd.f32 0.0, %v2674
    %v2676 = vpop.f32.mrb[0].mxu0
    %v2677 = vadd.f32 0.0, %v2676
    %2678 = vmatprep.mubr.f32.mxu0 %v2441
    %2679 = vmatmul.mubr.f32.gmra.mrb[0].mxu0 %v2342
    %v2680 = vpop.f32.mrb[0].mxu0
    %v2681 = vadd.f32 0.0, %v2680
    %v2682 = vpop.f32.mrb[0].mxu0
    %v2683 = vadd.f32 0.0, %v2682
    %2684 = vmatprep.mubr.f32.mxu0 %v2444
    %2685 = vmatmul.mubr.f32.gmra.mrb[0].mxu0 %v2344
    %v2686 = vpop.f32.mrb[0].mxu0
    %v2687 = vadd.f32 0.0, %v2686
    %v2688 = vpop.f32.mrb[0].mxu0
    %v2689 = vadd.f32 0.0, %v2688
    %2690 = vmatprep.mubr.f32.mxu0 %v2447
    %2691 = vmatmul.mubr.f32.gmra.mrb[0].mxu0 %v2346
    %v2692 = vpop.f32.mrb[0].mxu0
    %v2693 = vadd.f32 0.0, %v2692
    %v2694 = vpop.f32.mrb[0].mxu0
    %v2695 = vadd.f32 0.0, %v2694
    %2696 = vmatprep.mubr.f32.mxu0 %v2450
    %2697 = vmatmul.mubr.f32.gmra.mrb[0].mxu0 %v2348
    %v2698 = vpop.f32.mrb[0].mxu0
    %v2699 = vadd.f32 0.0, %v2698
    %v2700 = vpop.f32.mrb[0].mxu0
    %v2701 = vadd.f32 0.0, %v2700
    %2702 = vmatprep.mubr.f32.mxu0 %v2453
    %2703 = vmatmul.mubr.f32.gmra.mrb[0].mxu0 %v2350
    %v2704 = vpop.f32.mrb[0].mxu0
    %v2705 = vadd.f32 0.0, %v2704
    %v2706 = vpop.f32.mrb[0].mxu0
    %v2707 = vadd.f32 0.0, %v2706
    %2708 = vmatprep.mubr.f32.mxu0 %v2456
    %2709 = vmatmul.mubr.f32.gmra.mrb[0].mxu0 %v2352
    %v2710 = vpop.f32.mrb[0].mxu0
    %v2711 = vadd.f32 0.0, %v2710
    %v2712 = vpop.f32.mrb[0].mxu0
    %v2713 = vadd.f32 0.0, %v2712
    %2714 = vmatprep.mubr.f32.mxu0 %v2459
    %2715 = vmatmul.mubr.f32.gmra.mrb[0].mxu0 %v2354
    %v2716 = vpop.f32.mrb[0].mxu0
    %v2717 = vadd.f32 0.0, %v2716
    %v2718 = vpop.f32.mrb[0].mxu0
    %v2719 = vadd.f32 0.0, %v2718
    %2720 = vmatprep.mubr.f32.mxu0 %v2462
    %2721 = vmatmul.mubr.f32.gmra.mrb[0].mxu0 %v2356
    %v2722 = vpop.f32.mrb[0].mxu0
    %v2723 = vadd.f32 0.0, %v2722
    %v2724 = vpop.f32.mrb[0].mxu0
    %v2725 = vadd.f32 0.0, %v2724
    %2726 = vmatprep.mubr.f32.mxu0 %v2465
    %2727 = vmatmul.mubr.f32.gmra.mrb[0].mxu0 %v2358
    %v2728 = vpop.f32.mrb[0].mxu0
    %v2729 = vadd.f32 0.0, %v2728
    %v2730 = vpop.f32.mrb[0].mxu0
    %v2731 = vadd.f32 0.0, %v2730
    %2732 = vmatprep.mubr.f32.mxu0 %v2468
    %2733 = vmatmul.mubr.f32.gmra.mrb[0].mxu0 %v2360
    %v2734 = vpop.f32.mrb[0].mxu0
    %v2735 = vadd.f32 0.0, %v2734
    %v2736 = vpop.f32.mrb[0].mxu0
    %v2737 = vadd.f32 0.0, %v2736
    %2738 = vmatprep.mubr.f32.mxu0 %v2471
    %2739 = vmatmul.mubr.f32.gmra.mrb[0].mxu0 %v2362
    %v2740 = vpop.f32.mrb[0].mxu0
    %v2741 = vadd.f32 0.0, %v2740
    %v2742 = vpop.f32.mrb[0].mxu0
    %v2743 = vadd.f32 0.0, %v2742
    %2744 = vmatprep.mubr.f32.mxu0 %v2474
    %2745 = vmatmul.mubr.f32.gmra.mrb[0].mxu0 %v2364
    %v2746 = vpop.f32.mrb[0].mxu0
    %v2747 = vadd.f32 0.0, %v2746
    %v2748 = vpop.f32.mrb[0].mxu0
    %v2749 = vadd.f32 0.0, %v2748
    %2750 = vmatprep.mubr.f32.mxu0 %v2477
    %2751 = vmatmul.mubr.f32.gmra.mrb[0].mxu0 %v2366
    %v2752 = vpop.f32.mrb[0].mxu0
    %v2753 = vadd.f32 0.0, %v2752
    %v2754 = vpop.f32.mrb[0].mxu0
    %v2755 = vadd.f32 0.0, %v2754
    %2756 = vmatprep.mubr.f32.mxu0 %v2480
    %2757 = vmatmul.mubr.f32.gmra.mrb[0].mxu0 %v2368
    %v2758 = vpop.f32.mrb[0].mxu0
    %v2759 = vadd.f32 0.0, %v2758
    %v2760 = vpop.f32.mrb[0].mxu0
    %v2761 = vadd.f32 0.0, %v2760
    %2762 = vmatprep.mubr.f32.mxu0 %v2483
    %2763 = vmatmul.mubr.f32.gmra.mrb[0].mxu0 %v2370
    %v2764 = vpop.f32.mrb[0].mxu0
    %v2765 = vadd.f32 0.0, %v2764
    %v2766 = vpop.f32.mrb[0].mxu0
    %v2767 = vadd.f32 0.0, %v2766
    %2768 = vmatprep.mubr.f32.mxu0 %v2486
    %2769 = vmatmul.mubr.f32.gmra.mrb[0].mxu0 %v2372
    %v2770 = vpop.f32.mrb[0].mxu0
    %v2771 = vadd.f32 0.0, %v2770
    %v2772 = vpop.f32.mrb[0].mxu0
    %v2773 = vadd.f32 0.0, %v2772
    %2774 = vmatprep.mubr.f32.mxu0 %v2489
    %2775 = vmatmul.mubr.f32.gmra.mrb[0].mxu0 %v2374
    %v2776 = vpop.f32.mrb[0].mxu0
    %v2777 = vadd.f32 0.0, %v2776
    %v2778 = vpop.f32.mrb[0].mxu0
    %v2779 = vadd.f32 0.0, %v2778
    %2780 = vmatprep.mubr.f32.mxu0 %v2492
    %2781 = vmatmul.mubr.f32.gmra.mrb[0].mxu0 %v2376
    %v2782 = vpop.f32.mrb[0].mxu0
    %v2783 = vadd.f32 0.0, %v2782
    %v2784 = vpop.f32.mrb[0].mxu0
    %v2785 = vadd.f32 0.0, %v2784
    %2786 = vmatprep.mubr.f32.mxu0 %v2495
    %2787 = vmatmul.mubr.f32.gmra.mrb[0].mxu0 %v2378
    %v2788 = vpop.f32.mrb[0].mxu0
    %v2789 = vadd.f32 0.0, %v2788
    %v2790 = vpop.f32.mrb[0].mxu0
    %v2791 = vadd.f32 0.0, %v2790
    %2792 = vmatprep.mubr.f32.mxu0 %v2498
    %2793 = vmatmul.mubr.f32.gmra.mrb[0].mxu0 %v2380
    %v2794 = vpop.f32.mrb[0].mxu0
    %v2795 = vadd.f32 0.0, %v2794
    %v2796 = vpop.f32.mrb[0].mxu0
    %v2797 = vadd.f32 0.0, %v2796
    %2798 = vmatprep.mubr.f32.mxu0 %v2501
    %2799 = vmatmul.mubr.f32.gmra.mrb[0].mxu0 %v2382
    %v2800 = vpop.f32.mrb[0].mxu0
    %v2801 = vadd.f32 0.0, %v2800
    %v2802 = vpop.f32.mrb[0].mxu0
    %v2803 = vadd.f32 0.0, %v2802
    %2804 = vmatprep.mubr.f32.mxu0 %v2504
    %2805 = vmatmul.mubr.f32.gmra.mrb[0].mxu0 %v2384
    %v2806 = vpop.f32.mrb[0].mxu0
    %v2807 = vadd.f32 0.0, %v2806
    %v2808 = vpop.f32.mrb[0].mxu0
    %v2809 = vadd.f32 0.0, %v2808
    %2810 = vdwg.mxu0
    %v2811 = vmax.f32 %v2068, %v2573
    %v2812 = vmax.f32 %v2070, %v2575
    %v2813 = vmax.f32 %v2074, %v2579
    %v2814 = vmax.f32 %v2076, %v2581
    %v2815 = vmax.f32 %v2080, %v2585
    %v2816 = vmax.f32 %v2082, %v2587
    %v2817 = vmax.f32 %v2086, %v2591
    %v2818 = vmax.f32 %v2088, %v2593
    %v2819 = vmax.f32 %v2092, %v2597
    %v2820 = vmax.f32 %v2094, %v2599
    %v2821 = vmax.f32 %v2098, %v2603
    %v2822 = vmax.f32 %v2100, %v2605
    %v2823 = vmax.f32 %v2104, %v2609
    %v2824 = vmax.f32 %v2106, %v2611
    %v2825 = vmax.f32 %v2110, %v2615
    %v2826 = vmax.f32 %v2112, %v2617
    %v2827 = vmax.f32 %v2116, %v2621
    %v2828 = vmax.f32 %v2118, %v2623
    %v2829 = vmax.f32 %v2122, %v2627
    %v2830 = vmax.f32 %v2124, %v2629
    %v2831 = vmax.f32 %v2128, %v2633
    %v2832 = vmax.f32 %v2130, %v2635
    %v2833 = vmax.f32 %v2134, %v2639
    %v2834 = vmax.f32 %v2136, %v2641
    %v2835 = vmax.f32 %v2140, %v2645
    %v2836 = vmax.f32 %v2142, %v2647
    %v2837 = vmax.f32 %v2146, %v2651
    %v2838 = vmax.f32 %v2148, %v2653
    %v2839 = vmax.f32 %v2152, %v2657
    %v2840 = vmax.f32 %v2154, %v2659
    %v2841 = vmax.f32 %v2158, %v2663
    %v2842 = vmax.f32 %v2160, %v2665
    %v2843 = vmax.f32 %v2164, %v2669
    %v2844 = vmax.f32 %v2166, %v2671
    %v2845 = vmax.f32 %v2170, %v2675
    %v2846 = vmax.f32 %v2172, %v2677
    %v2847 = vmax.f32 %v2176, %v2681
    %v2848 = vmax.f32 %v2178, %v2683
    %v2849 = vmax.f32 %v2182, %v2687
    %v2850 = vmax.f32 %v2184, %v2689
    %v2851 = vmax.f32 %v2188, %v2693
    %v2852 = vmax.f32 %v2190, %v2695
    %v2853 = vmax.f32 %v2194, %v2699
    %v2854 = vmax.f32 %v2196, %v2701
    %v2855 = vmax.f32 %v2200, %v2705
    %v2856 = vmax.f32 %v2202, %v2707
    %v2857 = vmax.f32 %v2206, %v2711
    %v2858 = vmax.f32 %v2208, %v2713
    %v2859 = vmax.f32 %v2212, %v2717
    %v2860 = vmax.f32 %v2214, %v2719
    %v2861 = vmax.f32 %v2218, %v2723
    %v2862 = vmax.f32 %v2220, %v2725
    %v2863 = vmax.f32 %v2224, %v2729
    %v2864 = vmax.f32 %v2226, %v2731
    %v2865 = vmax.f32 %v2230, %v2735
    %v2866 = vmax.f32 %v2232, %v2737
    %v2867 = vmax.f32 %v2236, %v2741
    %v2868 = vmax.f32 %v2238, %v2743
    %v2869 = vmax.f32 %v2242, %v2747
    %v2870 = vmax.f32 %v2244, %v2749
    %v2871 = vmax.f32 %v2248, %v2753
    %v2872 = vmax.f32 %v2250, %v2755
    %v2873 = vmax.f32 %v2254, %v2759
    %v2874 = vmax.f32 %v2256, %v2761
    %v2875 = vmax.f32 %v2260, %v2765
    %v2876 = vmax.f32 %v2262, %v2767
    %v2877 = vmax.f32 %v2266, %v2771
    %v2878 = vmax.f32 %v2268, %v2773
    %v2879 = vmax.f32 %v2272, %v2777
    %v2880 = vmax.f32 %v2274, %v2779
    %v2881 = vmax.f32 %v2278, %v2783
    %v2882 = vmax.f32 %v2280, %v2785
    %v2883 = vmax.f32 %v2284, %v2789
    %v2884 = vmax.f32 %v2286, %v2791
    %v2885 = vmax.f32 %v2290, %v2795
    %v2886 = vmax.f32 %v2292, %v2797
    %v2887 = vmax.f32 %v2296, %v2801
    %v2888 = vmax.f32 %v2298, %v2803
    %v2889 = vmax.f32 %v2302, %v2807
    %v2890 = vmax.f32 %v2304, %v2809
    %v2891 = vld [vmem:[%s5] sm:$0xff]
    %v2892 = vld [vmem:[%s5 + $0x8] sm:$0xff]
    %v2893 = vld [vmem:[%s5 + $0x10] sm:$0xff]
    %v2894 = vld [vmem:[%s5 + $0x18] sm:$0xff]
    %v2895 = vld [vmem:[%s5 + $0x20] sm:$0xff]
    %v2896 = vld [vmem:[%s5 + $0x28] sm:$0xff]
    %v2897 = vld [vmem:[%s5 + $0x30] sm:$0xff]
    %v2898 = vld [vmem:[%s5 + $0x38] sm:$0xff]
    %v2899 = vld [vmem:[%s5 + $0x40] sm:$0xff]
    %v2900 = vld [vmem:[%s5 + $0x48] sm:$0xff]
    %v2901 = vld [vmem:[%s5 + $0x50] sm:$0xff]
    %v2902 = vld [vmem:[%s5 + $0x58] sm:$0xff]
    %v2903 = vld [vmem:[%s5 + $0x60] sm:$0xff]
    %v2904 = vld [vmem:[%s5 + $0x68] sm:$0xff]
    %v2905 = vld [vmem:[%s5 + $0x70] sm:$0xff]
    %v2906 = vld [vmem:[%s5 + $0x78] sm:$0xff]
    %v2907 = vld [vmem:[%s5 + $0x80] sm:$0xff]
    %v2908 = vld [vmem:[%s5 + $0x88] sm:$0xff]
    %v2909 = vld [vmem:[%s5 + $0x90] sm:$0xff]
    %v2910 = vld [vmem:[%s5 + $0x98] sm:$0xff]
    %v2911 = vld [vmem:[%s5 + $0xa0] sm:$0xff]
    %v2912 = vld [vmem:[%s5 + $0xa8] sm:$0xff]
    %v2913 = vld [vmem:[%s5 + $0xb0] sm:$0xff]
    %v2914 = vld [vmem:[%s5 + $0xb8] sm:$0xff]
    %v2915 = vld [vmem:[%s5 + $0xc0] sm:$0xff]
    %v2916 = vld [vmem:[%s5 + $0xc8] sm:$0xff]
    %v2917 = vld [vmem:[%s5 + $0xd0] sm:$0xff]
    %v2918 = vld [vmem:[%s5 + $0xd8] sm:$0xff]
    %v2919 = vld [vmem:[%s5 + $0xe0] sm:$0xff]
    %v2920 = vld [vmem:[%s5 + $0xe8] sm:$0xff]
    %vm2921 = vcmask 916480
    %v2923 = vsel %vm2921, %v2812, 0
    %v2926 = vsel %vm2921, %v2814, 0
    %v2929 = vsel %vm2921, %v2816, 0
    %v2932 = vsel %vm2921, %v2818, 0
    %v2935 = vsel %vm2921, %v2820, 0
    %v2938 = vsel %vm2921, %v2822, 0
    %v2941 = vsel %vm2921, %v2824, 0
    %v2944 = vsel %vm2921, %v2826, 0
    %v2947 = vsel %vm2921, %v2828, 0
    %v2950 = vsel %vm2921, %v2830, 0
    %v2953 = vsel %vm2921, %v2832, 0
    %v2956 = vsel %vm2921, %v2834, 0
    %v2959 = vsel %vm2921, %v2836, 0
    %v2962 = vsel %vm2921, %v2838, 0
    %v2965 = vsel %vm2921, %v2840, 0
    %v2968 = vsel %vm2921, %v2842, 0
    %v2971 = vsel %vm2921, %v2844, 0
    %v2974 = vsel %vm2921, %v2846, 0
    %v2977 = vsel %vm2921, %v2848, 0
    %v2980 = vsel %vm2921, %v2850, 0
    %v2983 = vsel %vm2921, %v2852, 0
    %v2986 = vsel %vm2921, %v2854, 0
    %v2989 = vsel %vm2921, %v2856, 0
    %v2992 = vsel %vm2921, %v2858, 0
    %v2995 = vsel %vm2921, %v2860, 0
    %v2998 = vsel %vm2921, %v2862, 0
    %v3001 = vsel %vm2921, %v2864, 0
    %v3004 = vsel %vm2921, %v2866, 0
    %v3007 = vsel %vm2921, %v2868, 0
    %v3010 = vsel %vm2921, %v2870, 0
    %v3013 = vsel %vm2921, %v2872, 0
    %v3016 = vsel %vm2921, %v2874, 0
    %v3019 = vsel %vm2921, %v2876, 0
    %v3022 = vsel %vm2921, %v2878, 0
    %v3025 = vsel %vm2921, %v2880, 0
    %v3028 = vsel %vm2921, %v2882, 0
    %v3031 = vsel %vm2921, %v2884, 0
    %v3034 = vsel %vm2921, %v2886, 0
    %v3037 = vsel %vm2921, %v2888, 0
    %v3040 = vsel %vm2921, %v2890, 0
    %3042 = vmatprep.subr.mxu0 0.0
    %3043 = vmatpush1.msra.mxu0 %v2891
    %3044 = vmatprep.subr.mxu0 0.0
    %3045 = vmatpush1.msra.mxu0 %v2892
    %3046 = vmatprep.subr.mxu0 0.0
    %3047 = vmatpush1.msra.mxu0 %v2893
    %3048 = vmatprep.subr.mxu0 0.0
    %3049 = vmatpush1.msra.mxu0 %v2894
    %3050 = vmatprep.subr.mxu0 0.0
    %3051 = vmatpush1.msra.mxu0 %v2895
    %3052 = vmatprep.subr.mxu0 0.0
    %3053 = vmatpush1.msra.mxu0 %v2896
    %3054 = vmatprep.subr.mxu0 0.0
    %3055 = vmatpush1.msra.mxu0 %v2897
    %3056 = vmatprep.subr.mxu0 0.0
    %3057 = vmatpush1.msra.mxu0 %v2898
    %3058 = vmatprep.subr.mxu0 0.0
    %3059 = vmatpush1.msra.mxu0 %v2899
    %3060 = vmatprep.subr.mxu0 0.0
    %3061 = vmatpush1.msra.mxu0 %v2900
    %3062 = vmatprep.subr.mxu0 0.0
    %3063 = vmatpush1.msra.mxu0 %v2901
    %3064 = vmatprep.subr.mxu0 0.0
    %3065 = vmatpush1.msra.mxu0 %v2902
    %3066 = vmatprep.subr.mxu0 0.0
    %3067 = vmatpush1.msra.mxu0 %v2903
    %3068 = vmatprep.subr.mxu0 0.0
    %3069 = vmatpush1.msra.mxu0 %v2904
    %3070 = vmatprep.subr.mxu0 0.0
    %3071 = vmatpush1.msra.mxu0 %v2905
    %3072 = vmatprep.subr.mxu0 0.0
    %3073 = vmatpush1.msra.mxu0 %v2906
    %3074 = vmatprep.subr.mxu0 0.0
    %3075 = vmatpush1.msra.mxu0 %v2907
    %3076 = vmatprep.subr.mxu0 0.0
    %3077 = vmatpush1.msra.mxu0 %v2908
    %3078 = vmatprep.subr.mxu0 0.0
    %3079 = vmatpush1.msra.mxu0 %v2909
    %3080 = vmatprep.subr.mxu0 0.0
    %3081 = vmatpush1.msra.mxu0 %v2910
    %3082 = vmatprep.subr.mxu0 0.0
    %3083 = vmatpush1.msra.mxu0 %v2911
    %3084 = vmatprep.subr.mxu0 0.0
    %3085 = vmatpush1.msra.mxu0 %v2912
    %3086 = vmatprep.subr.mxu0 0.0
    %3087 = vmatpush1.msra.mxu0 %v2913
    %3088 = vmatprep.subr.mxu0 0.0
    %3089 = vmatpush1.msra.mxu0 %v2914
    %3090 = vmatprep.subr.mxu0 0.0
    %3091 = vmatpush1.msra.mxu0 %v2915
    %3092 = vmatprep.subr.mxu0 0.0
    %3093 = vmatpush1.msra.mxu0 %v2916
    %3094 = vmatprep.subr.mxu0 0.0
    %3095 = vmatpush1.msra.mxu0 %v2917
    %3096 = vmatprep.subr.mxu0 0.0
    %3097 = vmatpush1.msra.mxu0 %v2918
    %3098 = vmatprep.subr.mxu0 0.0
    %3099 = vmatpush1.msra.mxu0 %v2919
    %3100 = vmatprep.subr.mxu0 0.0
    %3101 = vmatpush1.msra.mxu0 %v2920
    %3102 = vmatprep.subr.mxu0 0.0
    %3103 = vmatpush1.msra.mxu0 0.0
    %3104 = vmatprep.subr.mxu0 0.0
    %3105 = vmatpush1.msra.mxu0 0.0
    %3106 = vmatprep.mubr.f32.mxu0 %v2923
    %3107 = vmatmul.mubr.f32.gmra.mrb[0].mxu0 %v2811
    %v3108 = vpop.f32.mrb[0].mxu0
    %v3109 = vadd.f32 0.0, %v3108
    %v3110 = vpop.f32.mrb[0].mxu0
    %3111 = vmatprep.mubr.f32.mxu0 %v2926
    %3112 = vmatmul.mubr.f32.gmra.mrb[0].mxu0 %v2813
    %v3113 = vpop.f32.mrb[0].mxu0
    %v3114 = vadd.f32 0.0, %v3113
    %v3115 = vpop.f32.mrb[0].mxu0
    %3116 = vmatprep.mubr.f32.mxu0 %v2929
    %3117 = vmatmul.mubr.f32.gmra.mrb[0].mxu0 %v2815
    %v3118 = vpop.f32.mrb[0].mxu0
    %v3119 = vadd.f32 0.0, %v3118
    %v3120 = vpop.f32.mrb[0].mxu0
    %3121 = vmatprep.mubr.f32.mxu0 %v2932
    %3122 = vmatmul.mubr.f32.gmra.mrb[0].mxu0 %v2817
    %v3123 = vpop.f32.mrb[0].mxu0
    %v3124 = vadd.f32 0.0, %v3123
    %v3125 = vpop.f32.mrb[0].mxu0
    %3126 = vmatprep.mubr.f32.mxu0 %v2935
    %3127 = vmatmul.mubr.f32.gmra.mrb[0].mxu0 %v2819
    %v3128 = vpop.f32.mrb[0].mxu0
    %v3129 = vadd.f32 0.0, %v3128
    %v3130 = vpop.f32.mrb[0].mxu0
    %3131 = vmatprep.mubr.f32.mxu0 %v2938
    %3132 = vmatmul.mubr.f32.gmra.mrb[0].mxu0 %v2821
    %v3133 = vpop.f32.mrb[0].mxu0
    %v3134 = vadd.f32 0.0, %v3133
    %v3135 = vpop.f32.mrb[0].mxu0
    %3136 = vmatprep.mubr.f32.mxu0 %v2941
    %3137 = vmatmul.mubr.f32.gmra.mrb[0].mxu0 %v2823
    %v3138 = vpop.f32.mrb[0].mxu0
    %v3139 = vadd.f32 0.0, %v3138
    %v3140 = vpop.f32.mrb[0].mxu0
    %3141 = vmatprep.mubr.f32.mxu0 %v2944
    %3142 = vmatmul.mubr.f32.gmra.mrb[0].mxu0 %v2825
    %v3143 = vpop.f32.mrb[0].mxu0
    %v3144 = vadd.f32 0.0, %v3143
    %v3145 = vpop.f32.mrb[0].mxu0
    %3146 = vmatprep.mubr.f32.mxu0 %v2947
    %3147 = vmatmul.mubr.f32.gmra.mrb[0].mxu0 %v2827
    %v3148 = vpop.f32.mrb[0].mxu0
    %v3149 = vadd.f32 0.0, %v3148
    %v3150 = vpop.f32.mrb[0].mxu0
    %3151 = vmatprep.mubr.f32.mxu0 %v2950
    %3152 = vmatmul.mubr.f32.gmra.mrb[0].mxu0 %v2829
    %v3153 = vpop.f32.mrb[0].mxu0
    %v3154 = vadd.f32 0.0, %v3153
    %v3155 = vpop.f32.mrb[0].mxu0
    %3156 = vmatprep.mubr.f32.mxu0 %v2953
    %3157 = vmatmul.mubr.f32.gmra.mrb[0].mxu0 %v2831
    %v3158 = vpop.f32.mrb[0].mxu0
    %v3159 = vadd.f32 0.0, %v3158
    %v3160 = vpop.f32.mrb[0].mxu0
    %3161 = vmatprep.mubr.f32.mxu0 %v2956
    %3162 = vmatmul.mubr.f32.gmra.mrb[0].mxu0 %v2833
    %v3163 = vpop.f32.mrb[0].mxu0
    %v3164 = vadd.f32 0.0, %v3163
    %v3165 = vpop.f32.mrb[0].mxu0
    %3166 = vmatprep.mubr.f32.mxu0 %v2959
    %3167 = vmatmul.mubr.f32.gmra.mrb[0].mxu0 %v2835
    %v3168 = vpop.f32.mrb[0].mxu0
    %v3169 = vadd.f32 0.0, %v3168
    %v3170 = vpop.f32.mrb[0].mxu0
    %3171 = vmatprep.mubr.f32.mxu0 %v2962
    %3172 = vmatmul.mubr.f32.gmra.mrb[0].mxu0 %v2837
    %v3173 = vpop.f32.mrb[0].mxu0
    %v3174 = vadd.f32 0.0, %v3173
    %v3175 = vpop.f32.mrb[0].mxu0
    %3176 = vmatprep.mubr.f32.mxu0 %v2965
    %3177 = vmatmul.mubr.f32.gmra.mrb[0].mxu0 %v2839
    %v3178 = vpop.f32.mrb[0].mxu0
    %v3179 = vadd.f32 0.0, %v3178
    %v3180 = vpop.f32.mrb[0].mxu0
    %3181 = vmatprep.mubr.f32.mxu0 %v2968
    %3182 = vmatmul.mubr.f32.gmra.mrb[0].mxu0 %v2841
    %v3183 = vpop.f32.mrb[0].mxu0
    %v3184 = vadd.f32 0.0, %v3183
    %v3185 = vpop.f32.mrb[0].mxu0
    %3186 = vmatprep.mubr.f32.mxu0 %v2971
    %3187 = vmatmul.mubr.f32.gmra.mrb[0].mxu0 %v2843
    %v3188 = vpop.f32.mrb[0].mxu0
    %v3189 = vadd.f32 0.0, %v3188
    %v3190 = vpop.f32.mrb[0].mxu0
    %3191 = vmatprep.mubr.f32.mxu0 %v2974
    %3192 = vmatmul.mubr.f32.gmra.mrb[0].mxu0 %v2845
    %v3193 = vpop.f32.mrb[0].mxu0
    %v3194 = vadd.f32 0.0, %v3193
    %v3195 = vpop.f32.mrb[0].mxu0
    %3196 = vmatprep.mubr.f32.mxu0 %v2977
    %3197 = vmatmul.mubr.f32.gmra.mrb[0].mxu0 %v2847
    %v3198 = vpop.f32.mrb[0].mxu0
    %v3199 = vadd.f32 0.0, %v3198
    %v3200 = vpop.f32.mrb[0].mxu0
    %3201 = vmatprep.mubr.f32.mxu0 %v2980
    %3202 = vmatmul.mubr.f32.gmra.mrb[0].mxu0 %v2849
    %v3203 = vpop.f32.mrb[0].mxu0
    %v3204 = vadd.f32 0.0, %v3203
    %v3205 = vpop.f32.mrb[0].mxu0
    %3206 = vmatprep.mubr.f32.mxu0 %v2983
    %3207 = vmatmul.mubr.f32.gmra.mrb[0].mxu0 %v2851
    %v3208 = vpop.f32.mrb[0].mxu0
    %v3209 = vadd.f32 0.0, %v3208
    %v3210 = vpop.f32.mrb[0].mxu0
    %3211 = vmatprep.mubr.f32.mxu0 %v2986
    %3212 = vmatmul.mubr.f32.gmra.mrb[0].mxu0 %v2853
    %v3213 = vpop.f32.mrb[0].mxu0
    %v3214 = vadd.f32 0.0, %v3213
    %v3215 = vpop.f32.mrb[0].mxu0
    %3216 = vmatprep.mubr.f32.mxu0 %v2989
    %3217 = vmatmul.mubr.f32.gmra.mrb[0].mxu0 %v2855
    %v3218 = vpop.f32.mrb[0].mxu0
    %v3219 = vadd.f32 0.0, %v3218
    %v3220 = vpop.f32.mrb[0].mxu0
    %3221 = vmatprep.mubr.f32.mxu0 %v2992
    %3222 = vmatmul.mubr.f32.gmra.mrb[0].mxu0 %v2857
    %v3223 = vpop.f32.mrb[0].mxu0
    %v3224 = vadd.f32 0.0, %v3223
    %v3225 = vpop.f32.mrb[0].mxu0
    %3226 = vmatprep.mubr.f32.mxu0 %v2995
    %3227 = vmatmul.mubr.f32.gmra.mrb[0].mxu0 %v2859
    %v3228 = vpop.f32.mrb[0].mxu0
    %v3229 = vadd.f32 0.0, %v3228
    %v3230 = vpop.f32.mrb[0].mxu0
    %3231 = vmatprep.mubr.f32.mxu0 %v2998
    %3232 = vmatmul.mubr.f32.gmra.mrb[0].mxu0 %v2861
    %v3233 = vpop.f32.mrb[0].mxu0
    %v3234 = vadd.f32 0.0, %v3233
    %v3235 = vpop.f32.mrb[0].mxu0
    %3236 = vmatprep.mubr.f32.mxu0 %v3001
    %3237 = vmatmul.mubr.f32.gmra.mrb[0].mxu0 %v2863
    %v3238 = vpop.f32.mrb[0].mxu0
    %v3239 = vadd.f32 0.0, %v3238
    %v3240 = vpop.f32.mrb[0].mxu0
    %3241 = vmatprep.mubr.f32.mxu0 %v3004
    %3242 = vmatmul.mubr.f32.gmra.mrb[0].mxu0 %v2865
    %v3243 = vpop.f32.mrb[0].mxu0
    %v3244 = vadd.f32 0.0, %v3243
    %v3245 = vpop.f32.mrb[0].mxu0
    %3246 = vmatprep.mubr.f32.mxu0 %v3007
    %3247 = vmatmul.mubr.f32.gmra.mrb[0].mxu0 %v2867
    %v3248 = vpop.f32.mrb[0].mxu0
    %v3249 = vadd.f32 0.0, %v3248
    %v3250 = vpop.f32.mrb[0].mxu0
    %3251 = vmatprep.mubr.f32.mxu0 %v3010
    %3252 = vmatmul.mubr.f32.gmra.mrb[0].mxu0 %v2869
    %v3253 = vpop.f32.mrb[0].mxu0
    %v3254 = vadd.f32 0.0, %v3253
    %v3255 = vpop.f32.mrb[0].mxu0
    %3256 = vmatprep.mubr.f32.mxu0 %v3013
    %3257 = vmatmul.mubr.f32.gmra.mrb[0].mxu0 %v2871
    %v3258 = vpop.f32.mrb[0].mxu0
    %v3259 = vadd.f32 0.0, %v3258
    %v3260 = vpop.f32.mrb[0].mxu0
    %3261 = vmatprep.mubr.f32.mxu0 %v3016
    %3262 = vmatmul.mubr.f32.gmra.mrb[0].mxu0 %v2873
    %v3263 = vpop.f32.mrb[0].mxu0
    %v3264 = vadd.f32 0.0, %v3263
    %v3265 = vpop.f32.mrb[0].mxu0
    %3266 = vmatprep.mubr.f32.mxu0 %v3019
    %3267 = vmatmul.mubr.f32.gmra.mrb[0].mxu0 %v2875
    %v3268 = vpop.f32.mrb[0].mxu0
    %v3269 = vadd.f32 0.0, %v3268
    %v3270 = vpop.f32.mrb[0].mxu0
    %3271 = vmatprep.mubr.f32.mxu0 %v3022
    %3272 = vmatmul.mubr.f32.gmra.mrb[0].mxu0 %v2877
    %v3273 = vpop.f32.mrb[0].mxu0
    %v3274 = vadd.f32 0.0, %v3273
    %v3275 = vpop.f32.mrb[0].mxu0
    %3276 = vmatprep.mubr.f32.mxu0 %v3025
    %3277 = vmatmul.mubr.f32.gmra.mrb[0].mxu0 %v2879
    %v3278 = vpop.f32.mrb[0].mxu0
    %v3279 = vadd.f32 0.0, %v3278
    %v3280 = vpop.f32.mrb[0].mxu0
    %3281 = vmatprep.mubr.f32.mxu0 %v3028
    %3282 = vmatmul.mubr.f32.gmra.mrb[0].mxu0 %v2881
    %v3283 = vpop.f32.mrb[0].mxu0
    %v3284 = vadd.f32 0.0, %v3283
    %v3285 = vpop.f32.mrb[0].mxu0
    %3286 = vmatprep.mubr.f32.mxu0 %v3031
    %3287 = vmatmul.mubr.f32.gmra.mrb[0].mxu0 %v2883
    %v3288 = vpop.f32.mrb[0].mxu0
    %v3289 = vadd.f32 0.0, %v3288
    %v3290 = vpop.f32.mrb[0].mxu0
    %3291 = vmatprep.mubr.f32.mxu0 %v3034
    %3292 = vmatmul.mubr.f32.gmra.mrb[0].mxu0 %v2885
    %v3293 = vpop.f32.mrb[0].mxu0
    %v3294 = vadd.f32 0.0, %v3293
    %v3295 = vpop.f32.mrb[0].mxu0
    %3296 = vmatprep.mubr.f32.mxu0 %v3037
    %3297 = vmatmul.mubr.f32.gmra.mrb[0].mxu0 %v2887
    %v3298 = vpop.f32.mrb[0].mxu0
    %v3299 = vadd.f32 0.0, %v3298
    %v3300 = vpop.f32.mrb[0].mxu0
    %3301 = vmatprep.mubr.f32.mxu0 %v3040
    %3302 = vmatmul.mubr.f32.gmra.mrb[0].mxu0 %v2889
    %v3303 = vpop.f32.mrb[0].mxu0
    %v3304 = vadd.f32 0.0, %v3303
    %v3305 = vpop.f32.mrb[0].mxu0
    %3306 = vdwg.mxu0
    %v3307 = vld [vmem:[%s6] sm:$0xff]
    %v3308 = vld [vmem:[%s6 + $0x8] sm:$0xff]
    %v3309 = vld [vmem:[%s6 + $0x10] sm:$0xff]
    %v3310 = vld [vmem:[%s6 + $0x18] sm:$0xff]
    %v3311 = vld [vmem:[%s6 + $0x20] sm:$0xff]
    %v3312 = vld [vmem:[%s6 + $0x28] sm:$0xff]
    %v3313 = vld [vmem:[%s6 + $0x30] sm:$0xff]
    %v3314 = vld [vmem:[%s6 + $0x38] sm:$0xff]
    %v3315 = vld [vmem:[%s6 + $0x40] sm:$0xff]
    %v3316 = vld [vmem:[%s6 + $0x48] sm:$0xff]
    %v3317 = vld [vmem:[%s6 + $0x50] sm:$0xff]
    %v3318 = vld [vmem:[%s6 + $0x58] sm:$0xff]
    %v3319 = vld [vmem:[%s6 + $0x60] sm:$0xff]
    %v3320 = vld [vmem:[%s6 + $0x68] sm:$0xff]
    %v3321 = vld [vmem:[%s6 + $0x70] sm:$0xff]
    %v3322 = vld [vmem:[%s6 + $0x78] sm:$0xff]
    %v3323 = vld [vmem:[%s6 + $0x80] sm:$0xff]
    %v3324 = vld [vmem:[%s6 + $0x88] sm:$0xff]
    %v3325 = vld [vmem:[%s6 + $0x90] sm:$0xff]
    %v3326 = vld [vmem:[%s6 + $0x98] sm:$0xff]
    %v3327 = vld [vmem:[%s6 + $0xa0] sm:$0xff]
    %v3328 = vld [vmem:[%s6 + $0xa8] sm:$0xff]
    %v3329 = vld [vmem:[%s6 + $0xb0] sm:$0xff]
    %v3330 = vld [vmem:[%s6 + $0xb8] sm:$0xff]
    %v3331 = vld [vmem:[%s6 + $0xc0] sm:$0xff]
    %v3332 = vld [vmem:[%s6 + $0xc8] sm:$0xff]
    %v3333 = vld [vmem:[%s6 + $0xd0] sm:$0xff]
    %v3334 = vld [vmem:[%s6 + $0xd8] sm:$0xff]
    %v3335 = vld [vmem:[%s6 + $0xe0] sm:$0xff]
    %v3336 = vld [vmem:[%s6 + $0xe8] sm:$0xff]
    %3337 = vmatprep.subr.mxu0 0.0
    %3338 = vmatpush1.msra.mxu0 %v3307
    %3339 = vmatprep.subr.mxu0 0.0
    %3340 = vmatpush1.msra.mxu0 %v3308
    %3341 = vmatprep.subr.mxu0 0.0
    %3342 = vmatpush1.msra.mxu0 %v3309
    %3343 = vmatprep.subr.mxu0 0.0
    %3344 = vmatpush1.msra.mxu0 %v3310
    %3345 = vmatprep.subr.mxu0 0.0
    %3346 = vmatpush1.msra.mxu0 %v3311
    %3347 = vmatprep.subr.mxu0 0.0
    %3348 = vmatpush1.msra.mxu0 %v3312
    %3349 = vmatprep.subr.mxu0 0.0
    %3350 = vmatpush1.msra.mxu0 %v3313
    %3351 = vmatprep.subr.mxu0 0.0
    %3352 = vmatpush1.msra.mxu0 %v3314
    %3353 = vmatprep.subr.mxu0 0.0
    %3354 = vmatpush1.msra.mxu0 %v3315
    %3355 = vmatprep.subr.mxu0 0.0
    %3356 = vmatpush1.msra.mxu0 %v3316
    %3357 = vmatprep.subr.mxu0 0.0
    %3358 = vmatpush1.msra.mxu0 %v3317
    %3359 = vmatprep.subr.mxu0 0.0
    %3360 = vmatpush1.msra.mxu0 %v3318
    %3361 = vmatprep.subr.mxu0 0.0
    %3362 = vmatpush1.msra.mxu0 %v3319
    %3363 = vmatprep.subr.mxu0 0.0
    %3364 = vmatpush1.msra.mxu0 %v3320
    %3365 = vmatprep.subr.mxu0 0.0
    %3366 = vmatpush1.msra.mxu0 %v3321
    %3367 = vmatprep.subr.mxu0 0.0
    %3368 = vmatpush1.msra.mxu0 %v3322
    %3369 = vmatprep.subr.mxu0 0.0
    %3370 = vmatpush1.msra.mxu0 %v3323
    %3371 = vmatprep.subr.mxu0 0.0
    %3372 = vmatpush1.msra.mxu0 %v3324
    %3373 = vmatprep.subr.mxu0 0.0
    %3374 = vmatpush1.msra.mxu0 %v3325
    %3375 = vmatprep.subr.mxu0 0.0
    %3376 = vmatpush1.msra.mxu0 %v3326
    %3377 = vmatprep.subr.mxu0 0.0
    %3378 = vmatpush1.msra.mxu0 %v3327
    %3379 = vmatprep.subr.mxu0 0.0
    %3380 = vmatpush1.msra.mxu0 %v3328
    %3381 = vmatprep.subr.mxu0 0.0
    %3382 = vmatpush1.msra.mxu0 %v3329
    %3383 = vmatprep.subr.mxu0 0.0
    %3384 = vmatpush1.msra.mxu0 %v3330
    %3385 = vmatprep.subr.mxu0 0.0
    %3386 = vmatpush1.msra.mxu0 %v3331
    %3387 = vmatprep.subr.mxu0 0.0
    %3388 = vmatpush1.msra.mxu0 %v3332
    %3389 = vmatprep.subr.mxu0 0.0
    %3390 = vmatpush1.msra.mxu0 %v3333
    %3391 = vmatprep.subr.mxu0 0.0
    %3392 = vmatpush1.msra.mxu0 %v3334
    %3393 = vmatprep.subr.mxu0 0.0
    %3394 = vmatpush1.msra.mxu0 %v3335
    %3395 = vmatprep.subr.mxu0 0.0
    %3396 = vmatpush1.msra.mxu0 %v3336
    %3397 = vmatprep.subr.mxu0 0.0
    %3398 = vmatpush1.msra.mxu0 0.0
    %3399 = vmatprep.subr.mxu0 0.0
    %3400 = vmatpush1.msra.mxu0 0.0
    %3401 = vmatprep.mubr.f32.mxu0 %v2923
    %3402 = vmatmul.mubr.f32.gmra.mrb[0].mxu0 %v2811
    %v3403 = vpop.f32.mrb[0].mxu0
    %v3404 = vadd.f32 0.0, %v3403
    %v3405 = vpop.f32.mrb[0].mxu0
    %3406 = vmatprep.mubr.f32.mxu0 %v2926
    %3407 = vmatmul.mubr.f32.gmra.mrb[0].mxu0 %v2813
    %v3408 = vpop.f32.mrb[0].mxu0
    %v3409 = vadd.f32 0.0, %v3408
    %v3410 = vpop.f32.mrb[0].mxu0
    %3411 = vmatprep.mubr.f32.mxu0 %v2929
    %3412 = vmatmul.mubr.f32.gmra.mrb[0].mxu0 %v2815
    %v3413 = vpop.f32.mrb[0].mxu0
    %v3414 = vadd.f32 0.0, %v3413
    %v3415 = vpop.f32.mrb[0].mxu0
    %3416 = vmatprep.mubr.f32.mxu0 %v2932
    %3417 = vmatmul.mubr.f32.gmra.mrb[0].mxu0 %v2817
    %v3418 = vpop.f32.mrb[0].mxu0
    %v3419 = vadd.f32 0.0, %v3418
    %v3420 = vpop.f32.mrb[0].mxu0
    %3421 = vmatprep.mubr.f32.mxu0 %v2935
    %3422 = vmatmul.mubr.f32.gmra.mrb[0].mxu0 %v2819
    %v3423 = vpop.f32.mrb[0].mxu0
    %v3424 = vadd.f32 0.0, %v3423
    %v3425 = vpop.f32.mrb[0].mxu0
    %3426 = vmatprep.mubr.f32.mxu0 %v2938
    %3427 = vmatmul.mubr.f32.gmra.mrb[0].mxu0 %v2821
    %v3428 = vpop.f32.mrb[0].mxu0
    %v3429 = vadd.f32 0.0, %v3428
    %v3430 = vpop.f32.mrb[0].mxu0
    %3431 = vmatprep.mubr.f32.mxu0 %v2941
    %3432 = vmatmul.mubr.f32.gmra.mrb[0].mxu0 %v2823
    %v3433 = vpop.f32.mrb[0].mxu0
    %v3434 = vadd.f32 0.0, %v3433
    %v3435 = vpop.f32.mrb[0].mxu0
    %3436 = vmatprep.mubr.f32.mxu0 %v2944
    %3437 = vmatmul.mubr.f32.gmra.mrb[0].mxu0 %v2825
    %v3438 = vpop.f32.mrb[0].mxu0
    %v3439 = vadd.f32 0.0, %v3438
    %v3440 = vpop.f32.mrb[0].mxu0
    %3441 = vmatprep.mubr.f32.mxu0 %v2947
    %3442 = vmatmul.mubr.f32.gmra.mrb[0].mxu0 %v2827
    %v3443 = vpop.f32.mrb[0].mxu0
    %v3444 = vadd.f32 0.0, %v3443
    %v3445 = vpop.f32.mrb[0].mxu0
    %3446 = vmatprep.mubr.f32.mxu0 %v2950
    %3447 = vmatmul.mubr.f32.gmra.mrb[0].mxu0 %v2829
    %v3448 = vpop.f32.mrb[0].mxu0
    %v3449 = vadd.f32 0.0, %v3448
    %v3450 = vpop.f32.mrb[0].mxu0
    %3451 = vmatprep.mubr.f32.mxu0 %v2953
    %3452 = vmatmul.mubr.f32.gmra.mrb[0].mxu0 %v2831
    %v3453 = vpop.f32.mrb[0].mxu0
    %v3454 = vadd.f32 0.0, %v3453
    %v3455 = vpop.f32.mrb[0].mxu0
    %3456 = vmatprep.mubr.f32.mxu0 %v2956
    %3457 = vmatmul.mubr.f32.gmra.mrb[0].mxu0 %v2833
    %v3458 = vpop.f32.mrb[0].mxu0
    %v3459 = vadd.f32 0.0, %v3458
    %v3460 = vpop.f32.mrb[0].mxu0
    %3461 = vmatprep.mubr.f32.mxu0 %v2959
    %3462 = vmatmul.mubr.f32.gmra.mrb[0].mxu0 %v2835
    %v3463 = vpop.f32.mrb[0].mxu0
    %v3464 = vadd.f32 0.0, %v3463
    %v3465 = vpop.f32.mrb[0].mxu0
    %3466 = vmatprep.mubr.f32.mxu0 %v2962
    %3467 = vmatmul.mubr.f32.gmra.mrb[0].mxu0 %v2837
    %v3468 = vpop.f32.mrb[0].mxu0
    %v3469 = vadd.f32 0.0, %v3468
    %v3470 = vpop.f32.mrb[0].mxu0
    %3471 = vmatprep.mubr.f32.mxu0 %v2965
    %3472 = vmatmul.mubr.f32.gmra.mrb[0].mxu0 %v2839
    %v3473 = vpop.f32.mrb[0].mxu0
    %v3474 = vadd.f32 0.0, %v3473
    %v3475 = vpop.f32.mrb[0].mxu0
    %3476 = vmatprep.mubr.f32.mxu0 %v2968
    %3477 = vmatmul.mubr.f32.gmra.mrb[0].mxu0 %v2841
    %v3478 = vpop.f32.mrb[0].mxu0
    %v3479 = vadd.f32 0.0, %v3478
    %v3480 = vpop.f32.mrb[0].mxu0
    %3481 = vmatprep.mubr.f32.mxu0 %v2971
    %3482 = vmatmul.mubr.f32.gmra.mrb[0].mxu0 %v2843
    %v3483 = vpop.f32.mrb[0].mxu0
    %v3484 = vadd.f32 0.0, %v3483
    %v3485 = vpop.f32.mrb[0].mxu0
    %3486 = vmatprep.mubr.f32.mxu0 %v2974
    %3487 = vmatmul.mubr.f32.gmra.mrb[0].mxu0 %v2845
    %v3488 = vpop.f32.mrb[0].mxu0
    %v3489 = vadd.f32 0.0, %v3488
    %v3490 = vpop.f32.mrb[0].mxu0
    %3491 = vmatprep.mubr.f32.mxu0 %v2977
    %3492 = vmatmul.mubr.f32.gmra.mrb[0].mxu0 %v2847
    %v3493 = vpop.f32.mrb[0].mxu0
    %v3494 = vadd.f32 0.0, %v3493
    %v3495 = vpop.f32.mrb[0].mxu0
    %3496 = vmatprep.mubr.f32.mxu0 %v2980
    %3497 = vmatmul.mubr.f32.gmra.mrb[0].mxu0 %v2849
    %v3498 = vpop.f32.mrb[0].mxu0
    %v3499 = vadd.f32 0.0, %v3498
    %v3500 = vpop.f32.mrb[0].mxu0
    %3501 = vmatprep.mubr.f32.mxu0 %v2983
    %3502 = vmatmul.mubr.f32.gmra.mrb[0].mxu0 %v2851
    %v3503 = vpop.f32.mrb[0].mxu0
    %v3504 = vadd.f32 0.0, %v3503
    %v3505 = vpop.f32.mrb[0].mxu0
    %3506 = vmatprep.mubr.f32.mxu0 %v2986
    %3507 = vmatmul.mubr.f32.gmra.mrb[0].mxu0 %v2853
    %v3508 = vpop.f32.mrb[0].mxu0
    %v3509 = vadd.f32 0.0, %v3508
    %v3510 = vpop.f32.mrb[0].mxu0
    %3511 = vmatprep.mubr.f32.mxu0 %v2989
    %3512 = vmatmul.mubr.f32.gmra.mrb[0].mxu0 %v2855
    %v3513 = vpop.f32.mrb[0].mxu0
    %v3514 = vadd.f32 0.0, %v3513
    %v3515 = vpop.f32.mrb[0].mxu0
    %3516 = vmatprep.mubr.f32.mxu0 %v2992
    %3517 = vmatmul.mubr.f32.gmra.mrb[0].mxu0 %v2857
    %v3518 = vpop.f32.mrb[0].mxu0
    %v3519 = vadd.f32 0.0, %v3518
    %v3520 = vpop.f32.mrb[0].mxu0
    %3521 = vmatprep.mubr.f32.mxu0 %v2995
    %3522 = vmatmul.mubr.f32.gmra.mrb[0].mxu0 %v2859
    %v3523 = vpop.f32.mrb[0].mxu0
    %v3524 = vadd.f32 0.0, %v3523
    %v3525 = vpop.f32.mrb[0].mxu0
    %3526 = vmatprep.mubr.f32.mxu0 %v2998
    %3527 = vmatmul.mubr.f32.gmra.mrb[0].mxu0 %v2861
    %v3528 = vpop.f32.mrb[0].mxu0
    %v3529 = vadd.f32 0.0, %v3528
    %v3530 = vpop.f32.mrb[0].mxu0
    %3531 = vmatprep.mubr.f32.mxu0 %v3001
    %3532 = vmatmul.mubr.f32.gmra.mrb[0].mxu0 %v2863
    %v3533 = vpop.f32.mrb[0].mxu0
    %v3534 = vadd.f32 0.0, %v3533
    %v3535 = vpop.f32.mrb[0].mxu0
    %3536 = vmatprep.mubr.f32.mxu0 %v3004
    %3537 = vmatmul.mubr.f32.gmra.mrb[0].mxu0 %v2865
    %v3538 = vpop.f32.mrb[0].mxu0
    %v3539 = vadd.f32 0.0, %v3538
    %v3540 = vpop.f32.mrb[0].mxu0
    %3541 = vmatprep.mubr.f32.mxu0 %v3007
    %3542 = vmatmul.mubr.f32.gmra.mrb[0].mxu0 %v2867
    %v3543 = vpop.f32.mrb[0].mxu0
    %v3544 = vadd.f32 0.0, %v3543
    %v3545 = vpop.f32.mrb[0].mxu0
    %3546 = vmatprep.mubr.f32.mxu0 %v3010
    %3547 = vmatmul.mubr.f32.gmra.mrb[0].mxu0 %v2869
    %v3548 = vpop.f32.mrb[0].mxu0
    %v3549 = vadd.f32 0.0, %v3548
    %v3550 = vpop.f32.mrb[0].mxu0
    %3551 = vmatprep.mubr.f32.mxu0 %v3013
    %3552 = vmatmul.mubr.f32.gmra.mrb[0].mxu0 %v2871
    %v3553 = vpop.f32.mrb[0].mxu0
    %v3554 = vadd.f32 0.0, %v3553
    %v3555 = vpop.f32.mrb[0].mxu0
    %3556 = vmatprep.mubr.f32.mxu0 %v3016
    %3557 = vmatmul.mubr.f32.gmra.mrb[0].mxu0 %v2873
    %v3558 = vpop.f32.mrb[0].mxu0
    %v3559 = vadd.f32 0.0, %v3558
    %v3560 = vpop.f32.mrb[0].mxu0
    %3561 = vmatprep.mubr.f32.mxu0 %v3019
    %3562 = vmatmul.mubr.f32.gmra.mrb[0].mxu0 %v2875
    %v3563 = vpop.f32.mrb[0].mxu0
    %v3564 = vadd.f32 0.0, %v3563
    %v3565 = vpop.f32.mrb[0].mxu0
    %3566 = vmatprep.mubr.f32.mxu0 %v3022
    %3567 = vmatmul.mubr.f32.gmra.mrb[0].mxu0 %v2877
    %v3568 = vpop.f32.mrb[0].mxu0
    %v3569 = vadd.f32 0.0, %v3568
    %v3570 = vpop.f32.mrb[0].mxu0
    %3571 = vmatprep.mubr.f32.mxu0 %v3025
    %3572 = vmatmul.mubr.f32.gmra.mrb[0].mxu0 %v2879
    %v3573 = vpop.f32.mrb[0].mxu0
    %v3574 = vadd.f32 0.0, %v3573
    %v3575 = vpop.f32.mrb[0].mxu0
    %3576 = vmatprep.mubr.f32.mxu0 %v3028
    %3577 = vmatmul.mubr.f32.gmra.mrb[0].mxu0 %v2881
    %v3578 = vpop.f32.mrb[0].mxu0
    %v3579 = vadd.f32 0.0, %v3578
    %v3580 = vpop.f32.mrb[0].mxu0
    %3581 = vmatprep.mubr.f32.mxu0 %v3031
    %3582 = vmatmul.mubr.f32.gmra.mrb[0].mxu0 %v2883
    %v3583 = vpop.f32.mrb[0].mxu0
    %v3584 = vadd.f32 0.0, %v3583
    %v3585 = vpop.f32.mrb[0].mxu0
    %3586 = vmatprep.mubr.f32.mxu0 %v3034
    %3587 = vmatmul.mubr.f32.gmra.mrb[0].mxu0 %v2885
    %v3588 = vpop.f32.mrb[0].mxu0
    %v3589 = vadd.f32 0.0, %v3588
    %v3590 = vpop.f32.mrb[0].mxu0
    %3591 = vmatprep.mubr.f32.mxu0 %v3037
    %3592 = vmatmul.mubr.f32.gmra.mrb[0].mxu0 %v2887
    %v3593 = vpop.f32.mrb[0].mxu0
    %v3594 = vadd.f32 0.0, %v3593
    %v3595 = vpop.f32.mrb[0].mxu0
    %3596 = vmatprep.mubr.f32.mxu0 %v3040
    %3597 = vmatmul.mubr.f32.gmra.mrb[0].mxu0 %v2889
    %v3598 = vpop.f32.mrb[0].mxu0
    %v3599 = vadd.f32 0.0, %v3598
    %v3600 = vpop.f32.mrb[0].mxu0
    %3601 = vdwg.mxu0
    %v3602 = vmax.f32 %v3109, %v3404
    %v3603 = vmax.f32 %v3114, %v3409
    %v3604 = vmax.f32 %v3119, %v3414
    %v3605 = vmax.f32 %v3124, %v3419
    %v3606 = vmax.f32 %v3129, %v3424
    %v3607 = vmax.f32 %v3134, %v3429
    %v3608 = vmax.f32 %v3139, %v3434
    %v3609 = vmax.f32 %v3144, %v3439
    %v3610 = vmax.f32 %v3149, %v3444
    %v3611 = vmax.f32 %v3154, %v3449
    %v3612 = vmax.f32 %v3159, %v3454
    %v3613 = vmax.f32 %v3164, %v3459
    %v3614 = vmax.f32 %v3169, %v3464
    %v3615 = vmax.f32 %v3174, %v3469
    %v3616 = vmax.f32 %v3179, %v3474
    %v3617 = vmax.f32 %v3184, %v3479
    %v3618 = vmax.f32 %v3189, %v3484
    %v3619 = vmax.f32 %v3194, %v3489
    %v3620 = vmax.f32 %v3199, %v3494
    %v3621 = vmax.f32 %v3204, %v3499
    %v3622 = vmax.f32 %v3209, %v3504
    %v3623 = vmax.f32 %v3214, %v3509
    %v3624 = vmax.f32 %v3219, %v3514
    %v3625 = vmax.f32 %v3224, %v3519
    %v3626 = vmax.f32 %v3229, %v3524
    %v3627 = vmax.f32 %v3234, %v3529
    %v3628 = vmax.f32 %v3239, %v3534
    %v3629 = vmax.f32 %v3244, %v3539
    %v3630 = vmax.f32 %v3249, %v3544
    %v3631 = vmax.f32 %v3254, %v3549
    %v3632 = vmax.f32 %v3259, %v3554
    %v3633 = vmax.f32 %v3264, %v3559
    %v3634 = vmax.f32 %v3269, %v3564
    %v3635 = vmax.f32 %v3274, %v3569
    %v3636 = vmax.f32 %v3279, %v3574
    %v3637 = vmax.f32 %v3284, %v3579
    %v3638 = vmax.f32 %v3289, %v3584
    %v3639 = vmax.f32 %v3294, %v3589
    %v3640 = vmax.f32 %v3299, %v3594
    %v3641 = vmax.f32 %v3304, %v3599
    %v3642 = vld [vmem:[%s2] sm:$0x1]
    %v3644 = vlaneseq
    %v3645 = vshrl.u32 %v3644, 7
    %v3646 = vsub.s32 0, %v3645
    %v3647 = vrot.slane %v3642, %v3646
    %v3649 = vadd.f32 %v3602, %v3647
    %v3650 = vadd.f32 %v3603, %v3647
    %v3651 = vadd.f32 %v3604, %v3647
    %v3652 = vadd.f32 %v3605, %v3647
    %v3653 = vadd.f32 %v3606, %v3647
    %v3654 = vadd.f32 %v3607, %v3647
    %v3655 = vadd.f32 %v3608, %v3647
    %v3656 = vadd.f32 %v3609, %v3647
    %v3657 = vadd.f32 %v3610, %v3647
    %v3658 = vadd.f32 %v3611, %v3647
    %v3659 = vadd.f32 %v3612, %v3647
    %v3660 = vadd.f32 %v3613, %v3647
    %v3661 = vadd.f32 %v3614, %v3647
    %v3662 = vadd.f32 %v3615, %v3647
    %v3663 = vadd.f32 %v3616, %v3647
    %v3664 = vadd.f32 %v3617, %v3647
    %v3665 = vadd.f32 %v3618, %v3647
    %v3666 = vadd.f32 %v3619, %v3647
    %v3667 = vadd.f32 %v3620, %v3647
    %v3668 = vadd.f32 %v3621, %v3647
    %v3669 = vadd.f32 %v3622, %v3647
    %v3670 = vadd.f32 %v3623, %v3647
    %v3671 = vadd.f32 %v3624, %v3647
    %v3672 = vadd.f32 %v3625, %v3647
    %v3673 = vadd.f32 %v3626, %v3647
    %v3674 = vadd.f32 %v3627, %v3647
    %v3675 = vadd.f32 %v3628, %v3647
    %v3676 = vadd.f32 %v3629, %v3647
    %v3677 = vadd.f32 %v3630, %v3647
    %v3678 = vadd.f32 %v3631, %v3647
    %v3679 = vadd.f32 %v3632, %v3647
    %v3680 = vadd.f32 %v3633, %v3647
    %v3681 = vadd.f32 %v3634, %v3647
    %v3682 = vadd.f32 %v3635, %v3647
    %v3683 = vadd.f32 %v3636, %v3647
    %v3684 = vadd.f32 %v3637, %v3647
    %v3685 = vadd.f32 %v3638, %v3647
    %v3686 = vadd.f32 %v3639, %v3647
    %v3687 = vadd.f32 %v3640, %v3647
    %v3688 = vadd.f32 %v3641, %v3647
    %v3689 = vld [vmem:[%s7] sm:$0xff]
    %v3690 = vld [vmem:[%s7 + $0x8] sm:$0xff]
    %v3691 = vld [vmem:[%s7 + $0x10] sm:$0xff]
    %v3692 = vld [vmem:[%s7 + $0x18] sm:$0xff]
    %v3693 = vld [vmem:[%s7 + $0x20] sm:$0xff]
    %v3694 = vld [vmem:[%s7 + $0x28] sm:$0xff]
    %v3695 = vld [vmem:[%s7 + $0x30] sm:$0xff]
    %v3696 = vld [vmem:[%s7 + $0x38] sm:$0xff]
    %v3697 = vld [vmem:[%s7 + $0x40] sm:$0xff]
    %v3698 = vld [vmem:[%s7 + $0x48] sm:$0xff]
    %v3699 = vld [vmem:[%s7 + $0x50] sm:$0xff]
    %v3700 = vld [vmem:[%s7 + $0x58] sm:$0xff]
    %v3701 = vld [vmem:[%s7 + $0x60] sm:$0xff]
    %v3702 = vld [vmem:[%s7 + $0x68] sm:$0xff]
    %v3703 = vld [vmem:[%s7 + $0x70] sm:$0xff]
    %v3704 = vld [vmem:[%s7 + $0x78] sm:$0xff]
    %v3705 = vld [vmem:[%s7 + $0x80] sm:$0xff]
    %v3706 = vld [vmem:[%s7 + $0x88] sm:$0xff]
    %v3707 = vld [vmem:[%s7 + $0x90] sm:$0xff]
    %v3708 = vld [vmem:[%s7 + $0x98] sm:$0xff]
    %v3709 = vld [vmem:[%s7 + $0xa0] sm:$0xff]
    %v3710 = vld [vmem:[%s7 + $0xa8] sm:$0xff]
    %v3711 = vld [vmem:[%s7 + $0xb0] sm:$0xff]
    %v3712 = vld [vmem:[%s7 + $0xb8] sm:$0xff]
    %v3713 = vld [vmem:[%s7 + $0xc0] sm:$0xff]
    %v3714 = vld [vmem:[%s7 + $0xc8] sm:$0xff]
    %v3715 = vld [vmem:[%s7 + $0xd0] sm:$0xff]
    %v3716 = vld [vmem:[%s7 + $0xd8] sm:$0xff]
    %v3717 = vld [vmem:[%s7 + $0xe0] sm:$0xff]
    %v3718 = vld [vmem:[%s7 + $0xe8] sm:$0xff]
    %s3719 = scalar_lea.vmem %s7, 240
    %v3720 = vld [vmem:[%s3719] sm:$0xff]
    %v3721 = vld [vmem:[%s3719 + $0x8] sm:$0xff]
    %v3722 = vld [vmem:[%s3719 + $0x10] sm:$0xff]
    %v3723 = vld [vmem:[%s3719 + $0x18] sm:$0xff]
    %v3724 = vld [vmem:[%s3719 + $0x20] sm:$0xff]
    %v3725 = vld [vmem:[%s3719 + $0x28] sm:$0xff]
    %v3726 = vld [vmem:[%s3719 + $0x30] sm:$0xff]
    %v3727 = vld [vmem:[%s3719 + $0x38] sm:$0xff]
    %v3728 = vld [vmem:[%s3719 + $0x40] sm:$0xff]
    %v3729 = vld [vmem:[%s3719 + $0x48] sm:$0xff]
    %v3730 = vld [vmem:[%s3719 + $0x50] sm:$0xff]
    %v3731 = vld [vmem:[%s3719 + $0x58] sm:$0xff]
    %v3732 = vld [vmem:[%s3719 + $0x60] sm:$0xff]
    %v3733 = vld [vmem:[%s3719 + $0x68] sm:$0xff]
    %v3734 = vld [vmem:[%s3719 + $0x70] sm:$0xff]
    %v3735 = vld [vmem:[%s3719 + $0x78] sm:$0xff]
    %v3736 = vld [vmem:[%s3719 + $0x80] sm:$0xff]
    %v3737 = vld [vmem:[%s3719 + $0x88] sm:$0xff]
    %v3738 = vld [vmem:[%s3719 + $0x90] sm:$0xff]
    %v3739 = vld [vmem:[%s3719 + $0x98] sm:$0xff]
    %v3740 = vld [vmem:[%s3719 + $0xa0] sm:$0xff]
    %v3741 = vld [vmem:[%s3719 + $0xa8] sm:$0xff]
    %v3742 = vld [vmem:[%s3719 + $0xb0] sm:$0xff]
    %v3743 = vld [vmem:[%s3719 + $0xb8] sm:$0xff]
    %v3744 = vld [vmem:[%s3719 + $0xc0] sm:$0xff]
    %v3745 = vld [vmem:[%s3719 + $0xc8] sm:$0xff]
    %v3746 = vld [vmem:[%s3719 + $0xd0] sm:$0xff]
    %v3747 = vld [vmem:[%s3719 + $0xd8] sm:$0xff]
    %v3748 = vld [vmem:[%s3719 + $0xe0] sm:$0xff]
    %v3749 = vld [vmem:[%s3719 + $0xe8] sm:$0xff]
    %vm3750 = vcmask 982016
    %v3752 = vsel %vm3750, %v3657, 0
    %v3755 = vsel %vm3750, %v3658, 0
    %v3758 = vsel %vm3750, %v3659, 0
    %v3761 = vsel %vm3750, %v3660, 0
    %v3764 = vsel %vm3750, %v3661, 0
    %v3767 = vsel %vm3750, %v3662, 0
    %v3770 = vsel %vm3750, %v3663, 0
    %v3773 = vsel %vm3750, %v3664, 0
    %3775 = vmatprep.subr.mxu0 %v3721
    %3776 = vmatpush1.msra.mxu0 %v3720
    %3777 = vmatprep.subr.mxu0 %v3723
    %3778 = vmatpush1.msra.mxu0 %v3722
    %3779 = vmatprep.subr.mxu0 %v3725
    %3780 = vmatpush1.msra.mxu0 %v3724
    %3781 = vmatprep.subr.mxu0 %v3727
    %3782 = vmatpush1.msra.mxu0 %v3726
    %3783 = vmatprep.subr.mxu0 %v3729
    %3784 = vmatpush1.msra.mxu0 %v3728
    %3785 = vmatprep.subr.mxu0 %v3731
    %3786 = vmatpush1.msra.mxu0 %v3730
    %3787 = vmatprep.subr.mxu0 %v3733
    %3788 = vmatpush1.msra.mxu0 %v3732
    %3789 = vmatprep.subr.mxu0 %v3735
    %3790 = vmatpush1.msra.mxu0 %v3734
    %3791 = vmatprep.subr.mxu0 %v3737
    %3792 = vmatpush1.msra.mxu0 %v3736
    %3793 = vmatprep.subr.mxu0 %v3739
    %3794 = vmatpush1.msra.mxu0 %v3738
    %3795 = vmatprep.subr.mxu0 %v3741
    %3796 = vmatpush1.msra.mxu0 %v3740
    %3797 = vmatprep.subr.mxu0 %v3743
    %3798 = vmatpush1.msra.mxu0 %v3742
    %3799 = vmatprep.subr.mxu0 %v3745
    %3800 = vmatpush1.msra.mxu0 %v3744
    %3801 = vmatprep.subr.mxu0 %v3747
    %3802 = vmatpush1.msra.mxu0 %v3746
    %3803 = vmatprep.subr.mxu0 %v3749
    %3804 = vmatpush1.msra.mxu0 %v3748
    %3805 = vmatprep.subr.mxu0 0.0
    %3806 = vmatpush1.msra.mxu0 0.0
    %3807 = vmatprep.subr.mxu0 0.0
    %3808 = vmatpush1.msra.mxu0 0.0
    %3809 = vmatprep.subr.mxu0 0.0
    %3810 = vmatpush1.msra.mxu0 0.0
    %3811 = vmatprep.subr.mxu0 0.0
    %3812 = vmatpush1.msra.mxu0 0.0
    %3813 = vmatprep.subr.mxu0 0.0
    %3814 = vmatpush1.msra.mxu0 0.0
    %3815 = vmatprep.subr.mxu0 0.0
    %3816 = vmatpush1.msra.mxu0 0.0
    %3817 = vmatprep.subr.mxu0 0.0
    %3818 = vmatpush1.msra.mxu0 0.0
    %3819 = vmatprep.subr.mxu0 0.0
    %3820 = vmatpush1.msra.mxu0 0.0
    %3821 = vmatprep.subr.mxu0 0.0
    %3822 = vmatpush1.msra.mxu0 0.0
    %3823 = vmatprep.subr.mxu0 0.0
    %3824 = vmatpush1.msra.mxu0 0.0
    %3825 = vmatprep.subr.mxu0 0.0
    %3826 = vmatpush1.msra.mxu0 0.0
    %3827 = vmatprep.subr.mxu0 0.0
    %3828 = vmatpush1.msra.mxu0 0.0
    %3829 = vmatprep.subr.mxu0 0.0
    %3830 = vmatpush1.msra.mxu0 0.0
    %3831 = vmatprep.subr.mxu0 0.0
    %3832 = vmatpush1.msra.mxu0 0.0
    %3833 = vmatprep.subr.mxu0 0.0
    %3834 = vmatpush1.msra.mxu0 0.0
    %3835 = vmatprep.subr.mxu0 0.0
    %3836 = vmatpush1.msra.mxu0 0.0
    %3837 = vmatprep.subr.mxu0 0.0
    %3838 = vmatpush1.msra.mxu0 0.0
    %3839 = vmatprep.mubr.f32.mxu0 0.0
    %3840 = vmatmul.mubr.f32.gmra.mrb[0].mxu0 %v3752
    %v3841 = vpop.f32.mrb[0].mxu0
    %v3842 = vadd.f32 0.0, %v3841
    %v3843 = vpop.f32.mrb[0].mxu0
    %v3844 = vadd.f32 0.0, %v3843
    %3845 = vmatprep.mubr.f32.mxu0 0.0
    %3846 = vmatmul.mubr.f32.gmra.mrb[0].mxu0 %v3755
    %v3847 = vpop.f32.mrb[0].mxu0
    %v3848 = vadd.f32 0.0, %v3847
    %v3849 = vpop.f32.mrb[0].mxu0
    %v3850 = vadd.f32 0.0, %v3849
    %3851 = vmatprep.mubr.f32.mxu0 0.0
    %3852 = vmatmul.mubr.f32.gmra.mrb[0].mxu0 %v3758
    %v3853 = vpop.f32.mrb[0].mxu0
    %v3854 = vadd.f32 0.0, %v3853
    %v3855 = vpop.f32.mrb[0].mxu0
    %v3856 = vadd.f32 0.0, %v3855
    %3857 = vmatprep.mubr.f32.mxu0 0.0
    %3858 = vmatmul.mubr.f32.gmra.mrb[0].mxu0 %v3761
    %v3859 = vpop.f32.mrb[0].mxu0
    %v3860 = vadd.f32 0.0, %v3859
    %v3861 = vpop.f32.mrb[0].mxu0
    %v3862 = vadd.f32 0.0, %v3861
    %3863 = vmatprep.mubr.f32.mxu0 0.0
    %3864 = vmatmul.mubr.f32.gmra.mrb[0].mxu0 %v3764
    %v3865 = vpop.f32.mrb[0].mxu0
    %v3866 = vadd.f32 0.0, %v3865
    %v3867 = vpop.f32.mrb[0].mxu0
    %v3868 = vadd.f32 0.0, %v3867
    %3869 = vmatprep.mubr.f32.mxu0 0.0
    %3870 = vmatmul.mubr.f32.gmra.mrb[0].mxu0 %v3767
    %v3871 = vpop.f32.mrb[0].mxu0
    %v3872 = vadd.f32 0.0, %v3871
    %v3873 = vpop.f32.mrb[0].mxu0
    %v3874 = vadd.f32 0.0, %v3873
    %3875 = vmatprep.mubr.f32.mxu0 0.0
    %3876 = vmatmul.mubr.f32.gmra.mrb[0].mxu0 %v3770
    %v3877 = vpop.f32.mrb[0].mxu0
    %v3878 = vadd.f32 0.0, %v3877
    %v3879 = vpop.f32.mrb[0].mxu0
    %v3880 = vadd.f32 0.0, %v3879
    %3881 = vmatprep.mubr.f32.mxu0 0.0
    %3882 = vmatmul.mubr.f32.gmra.mrb[0].mxu0 %v3773
    %v3883 = vpop.f32.mrb[0].mxu0
    %v3884 = vadd.f32 0.0, %v3883
    %v3885 = vpop.f32.mrb[0].mxu0
    %v3886 = vadd.f32 0.0, %v3885
    %3887 = vdwg.mxu0
    %v3889 = vsel %vm3750, %v3649, 0
    %v3892 = vsel %vm3750, %v3650, 0
    %v3895 = vsel %vm3750, %v3651, 0
    %v3898 = vsel %vm3750, %v3652, 0
    %v3901 = vsel %vm3750, %v3653, 0
    %v3904 = vsel %vm3750, %v3654, 0
    %v3907 = vsel %vm3750, %v3655, 0
    %v3910 = vsel %vm3750, %v3656, 0
    %3912 = vmatprep.subr.mxu0 %v3690
    %3913 = vmatpush1.msra.mxu0 %v3689
    %3914 = vmatprep.subr.mxu0 %v3692
    %3915 = vmatpush1.msra.mxu0 %v3691
    %3916 = vmatprep.subr.mxu0 %v3694
    %3917 = vmatpush1.msra.mxu0 %v3693
    %3918 = vmatprep.subr.mxu0 %v3696
    %3919 = vmatpush1.msra.mxu0 %v3695
    %3920 = vmatprep.subr.mxu0 %v3698
    %3921 = vmatpush1.msra.mxu0 %v3697
    %3922 = vmatprep.subr.mxu0 %v3700
    %3923 = vmatpush1.msra.mxu0 %v3699
    %3924 = vmatprep.subr.mxu0 %v3702
    %3925 = vmatpush1.msra.mxu0 %v3701
    %3926 = vmatprep.subr.mxu0 %v3704
    %3927 = vmatpush1.msra.mxu0 %v3703
    %3928 = vmatprep.subr.mxu0 %v3706
    %3929 = vmatpush1.msra.mxu0 %v3705
    %3930 = vmatprep.subr.mxu0 %v3708
    %3931 = vmatpush1.msra.mxu0 %v3707
    %3932 = vmatprep.subr.mxu0 %v3710
    %3933 = vmatpush1.msra.mxu0 %v3709
    %3934 = vmatprep.subr.mxu0 %v3712
    %3935 = vmatpush1.msra.mxu0 %v3711
    %3936 = vmatprep.subr.mxu0 %v3714
    %3937 = vmatpush1.msra.mxu0 %v3713
    %3938 = vmatprep.subr.mxu0 %v3716
    %3939 = vmatpush1.msra.mxu0 %v3715
    %3940 = vmatprep.subr.mxu0 %v3718
    %3941 = vmatpush1.msra.mxu0 %v3717
    %3942 = vmatprep.subr.mxu0 0.0
    %3943 = vmatpush1.msra.mxu0 0.0
    %3944 = vmatprep.subr.mxu0 0.0
    %3945 = vmatpush1.msra.mxu0 0.0
    %3946 = vmatprep.subr.mxu0 0.0
    %3947 = vmatpush1.msra.mxu0 0.0
    %3948 = vmatprep.subr.mxu0 0.0
    %3949 = vmatpush1.msra.mxu0 0.0
    %3950 = vmatprep.subr.mxu0 0.0
    %3951 = vmatpush1.msra.mxu0 0.0
    %3952 = vmatprep.subr.mxu0 0.0
    %3953 = vmatpush1.msra.mxu0 0.0
    %3954 = vmatprep.subr.mxu0 0.0
    %3955 = vmatpush1.msra.mxu0 0.0
    %3956 = vmatprep.subr.mxu0 0.0
    %3957 = vmatpush1.msra.mxu0 0.0
    %3958 = vmatprep.subr.mxu0 0.0
    %3959 = vmatpush1.msra.mxu0 0.0
    %3960 = vmatprep.subr.mxu0 0.0
    %3961 = vmatpush1.msra.mxu0 0.0
    %3962 = vmatprep.subr.mxu0 0.0
    %3963 = vmatpush1.msra.mxu0 0.0
    %3964 = vmatprep.subr.mxu0 0.0
    %3965 = vmatpush1.msra.mxu0 0.0
    %3966 = vmatprep.subr.mxu0 0.0
    %3967 = vmatpush1.msra.mxu0 0.0
    %3968 = vmatprep.subr.mxu0 0.0
    %3969 = vmatpush1.msra.mxu0 0.0
    %3970 = vmatprep.subr.mxu0 0.0
    %3971 = vmatpush1.msra.mxu0 0.0
    %3972 = vmatprep.subr.mxu0 0.0
    %3973 = vmatpush1.msra.mxu0 0.0
    %3974 = vmatprep.subr.mxu0 0.0
    %3975 = vmatpush1.msra.mxu0 0.0
    %3976 = vmatprep.mubr.f32.mxu0 0.0
    %3977 = vmatmul.mubr.f32.gmra.mrb[0].mxu0 %v3889
    %v3978 = vpop.f32.mrb[0].mxu0
    %v3979 = vadd.f32 %v3842, %v3978
    %v3980 = vpop.f32.mrb[0].mxu0
    %v3981 = vadd.f32 %v3844, %v3980
    %3982 = vmatprep.mubr.f32.mxu0 0.0
    %3983 = vmatmul.mubr.f32.gmra.mrb[0].mxu0 %v3892
    %v3984 = vpop.f32.mrb[0].mxu0
    %v3985 = vadd.f32 %v3848, %v3984
    %v3986 = vpop.f32.mrb[0].mxu0
    %v3987 = vadd.f32 %v3850, %v3986
    %3988 = vmatprep.mubr.f32.mxu0 0.0
    %3989 = vmatmul.mubr.f32.gmra.mrb[0].mxu0 %v3895
    %v3990 = vpop.f32.mrb[0].mxu0
    %v3991 = vadd.f32 %v3854, %v3990
    %v3992 = vpop.f32.mrb[0].mxu0
    %v3993 = vadd.f32 %v3856, %v3992
    %3994 = vmatprep.mubr.f32.mxu0 0.0
    %3995 = vmatmul.mubr.f32.gmra.mrb[0].mxu0 %v3898
    %v3996 = vpop.f32.mrb[0].mxu0
    %v3997 = vadd.f32 %v3860, %v3996
    %v3998 = vpop.f32.mrb[0].mxu0
    %v3999 = vadd.f32 %v3862, %v3998
    %4000 = vmatprep.mubr.f32.mxu0 0.0
    %4001 = vmatmul.mubr.f32.gmra.mrb[0].mxu0 %v3901
    %v4002 = vpop.f32.mrb[0].mxu0
    %v4003 = vadd.f32 %v3866, %v4002
    %v4004 = vpop.f32.mrb[0].mxu0
    %v4005 = vadd.f32 %v3868, %v4004
    %4006 = vmatprep.mubr.f32.mxu0 0.0
    %4007 = vmatmul.mubr.f32.gmra.mrb[0].mxu0 %v3904
    %v4008 = vpop.f32.mrb[0].mxu0
    %v4009 = vadd.f32 %v3872, %v4008
    %v4010 = vpop.f32.mrb[0].mxu0
    %v4011 = vadd.f32 %v3874, %v4010
    %4012 = vmatprep.mubr.f32.mxu0 0.0
    %4013 = vmatmul.mubr.f32.gmra.mrb[0].mxu0 %v3907
    %v4014 = vpop.f32.mrb[0].mxu0
    %v4015 = vadd.f32 %v3878, %v4014
    %v4016 = vpop.f32.mrb[0].mxu0
    %v4017 = vadd.f32 %v3880, %v4016
    %4018 = vmatprep.mubr.f32.mxu0 0.0
    %4019 = vmatmul.mubr.f32.gmra.mrb[0].mxu0 %v3910
    %v4020 = vpop.f32.mrb[0].mxu0
    %v4021 = vadd.f32 %v3884, %v4020
    %v4022 = vpop.f32.mrb[0].mxu0
    %v4023 = vadd.f32 %v3886, %v4022
    %4024 = vdwg.mxu0
    %s4025 = scalar_lea.vmem %s7, 480
    %v4026 = vld [vmem:[%s4025] sm:$0xff]
    %v4027 = vld [vmem:[%s4025 + $0x8] sm:$0xff]
    %v4028 = vld [vmem:[%s4025 + $0x10] sm:$0xff]
    %v4029 = vld [vmem:[%s4025 + $0x18] sm:$0xff]
    %v4030 = vld [vmem:[%s4025 + $0x20] sm:$0xff]
    %v4031 = vld [vmem:[%s4025 + $0x28] sm:$0xff]
    %v4032 = vld [vmem:[%s4025 + $0x30] sm:$0xff]
    %v4033 = vld [vmem:[%s4025 + $0x38] sm:$0xff]
    %v4034 = vld [vmem:[%s4025 + $0x40] sm:$0xff]
    %v4035 = vld [vmem:[%s4025 + $0x48] sm:$0xff]
    %v4036 = vld [vmem:[%s4025 + $0x50] sm:$0xff]
    %v4037 = vld [vmem:[%s4025 + $0x58] sm:$0xff]
    %v4038 = vld [vmem:[%s4025 + $0x60] sm:$0xff]
    %v4039 = vld [vmem:[%s4025 + $0x68] sm:$0xff]
    %v4040 = vld [vmem:[%s4025 + $0x70] sm:$0xff]
    %v4041 = vld [vmem:[%s4025 + $0x78] sm:$0xff]
    %v4042 = vld [vmem:[%s4025 + $0x80] sm:$0xff]
    %v4043 = vld [vmem:[%s4025 + $0x88] sm:$0xff]
    %v4044 = vld [vmem:[%s4025 + $0x90] sm:$0xff]
    %v4045 = vld [vmem:[%s4025 + $0x98] sm:$0xff]
    %v4046 = vld [vmem:[%s4025 + $0xa0] sm:$0xff]
    %v4047 = vld [vmem:[%s4025 + $0xa8] sm:$0xff]
    %v4048 = vld [vmem:[%s4025 + $0xb0] sm:$0xff]
    %v4049 = vld [vmem:[%s4025 + $0xb8] sm:$0xff]
    %v4050 = vld [vmem:[%s4025 + $0xc0] sm:$0xff]
    %v4051 = vld [vmem:[%s4025 + $0xc8] sm:$0xff]
    %v4052 = vld [vmem:[%s4025 + $0xd0] sm:$0xff]
    %v4053 = vld [vmem:[%s4025 + $0xd8] sm:$0xff]
    %v4054 = vld [vmem:[%s4025 + $0xe0] sm:$0xff]
    %v4055 = vld [vmem:[%s4025 + $0xe8] sm:$0xff]
    %v4057 = vsel %vm3750, %v3665, 0
    %v4060 = vsel %vm3750, %v3666, 0
    %v4063 = vsel %vm3750, %v3667, 0
    %v4066 = vsel %vm3750, %v3668, 0
    %v4069 = vsel %vm3750, %v3669, 0
    %v4072 = vsel %vm3750, %v3670, 0
    %v4075 = vsel %vm3750, %v3671, 0
    %v4078 = vsel %vm3750, %v3672, 0
    %4080 = vmatprep.subr.mxu0 %v4027
    %4081 = vmatpush1.msra.mxu0 %v4026
    %4082 = vmatprep.subr.mxu0 %v4029
    %4083 = vmatpush1.msra.mxu0 %v4028
    %4084 = vmatprep.subr.mxu0 %v4031
    %4085 = vmatpush1.msra.mxu0 %v4030
    %4086 = vmatprep.subr.mxu0 %v4033
    %4087 = vmatpush1.msra.mxu0 %v4032
    %4088 = vmatprep.subr.mxu0 %v4035
    %4089 = vmatpush1.msra.mxu0 %v4034
    %4090 = vmatprep.subr.mxu0 %v4037
    %4091 = vmatpush1.msra.mxu0 %v4036
    %4092 = vmatprep.subr.mxu0 %v4039
    %4093 = vmatpush1.msra.mxu0 %v4038
    %4094 = vmatprep.subr.mxu0 %v4041
    %4095 = vmatpush1.msra.mxu0 %v4040
    %4096 = vmatprep.subr.mxu0 %v4043
    %4097 = vmatpush1.msra.mxu0 %v4042
    %4098 = vmatprep.subr.mxu0 %v4045
    %4099 = vmatpush1.msra.mxu0 %v4044
    %4100 = vmatprep.subr.mxu0 %v4047
    %4101 = vmatpush1.msra.mxu0 %v4046
    %4102 = vmatprep.subr.mxu0 %v4049
    %4103 = vmatpush1.msra.mxu0 %v4048
    %4104 = vmatprep.subr.mxu0 %v4051
    %4105 = vmatpush1.msra.mxu0 %v4050
    %4106 = vmatprep.subr.mxu0 %v4053
    %4107 = vmatpush1.msra.mxu0 %v4052
    %4108 = vmatprep.subr.mxu0 %v4055
    %4109 = vmatpush1.msra.mxu0 %v4054
    %4110 = vmatprep.subr.mxu0 0.0
    %4111 = vmatpush1.msra.mxu0 0.0
    %4112 = vmatprep.subr.mxu0 0.0
    %4113 = vmatpush1.msra.mxu0 0.0
    %4114 = vmatprep.subr.mxu0 0.0
    %4115 = vmatpush1.msra.mxu0 0.0
    %4116 = vmatprep.subr.mxu0 0.0
    %4117 = vmatpush1.msra.mxu0 0.0
    %4118 = vmatprep.subr.mxu0 0.0
    %4119 = vmatpush1.msra.mxu0 0.0
    %4120 = vmatprep.subr.mxu0 0.0
    %4121 = vmatpush1.msra.mxu0 0.0
    %4122 = vmatprep.subr.mxu0 0.0
    %4123 = vmatpush1.msra.mxu0 0.0
    %4124 = vmatprep.subr.mxu0 0.0
    %4125 = vmatpush1.msra.mxu0 0.0
    %4126 = vmatprep.subr.mxu0 0.0
    %4127 = vmatpush1.msra.mxu0 0.0
    %4128 = vmatprep.subr.mxu0 0.0
    %4129 = vmatpush1.msra.mxu0 0.0
    %4130 = vmatprep.subr.mxu0 0.0
    %4131 = vmatpush1.msra.mxu0 0.0
    %4132 = vmatprep.subr.mxu0 0.0
    %4133 = vmatpush1.msra.mxu0 0.0
    %4134 = vmatprep.subr.mxu0 0.0
    %4135 = vmatpush1.msra.mxu0 0.0
    %4136 = vmatprep.subr.mxu0 0.0
    %4137 = vmatpush1.msra.mxu0 0.0
    %4138 = vmatprep.subr.mxu0 0.0
    %4139 = vmatpush1.msra.mxu0 0.0
    %4140 = vmatprep.subr.mxu0 0.0
    %4141 = vmatpush1.msra.mxu0 0.0
    %4142 = vmatprep.subr.mxu0 0.0
    %4143 = vmatpush1.msra.mxu0 0.0
    %4144 = vmatprep.mubr.f32.mxu0 0.0
    %4145 = vmatmul.mubr.f32.gmra.mrb[0].mxu0 %v4057
    %v4146 = vpop.f32.mrb[0].mxu0
    %v4147 = vadd.f32 0.0, %v4146
    %v4148 = vpop.f32.mrb[0].mxu0
    %v4149 = vadd.f32 0.0, %v4148
    %4150 = vmatprep.mubr.f32.mxu0 0.0
    %4151 = vmatmul.mubr.f32.gmra.mrb[0].mxu0 %v4060
    %v4152 = vpop.f32.mrb[0].mxu0
    %v4153 = vadd.f32 0.0, %v4152
    %v4154 = vpop.f32.mrb[0].mxu0
    %v4155 = vadd.f32 0.0, %v4154
    %4156 = vmatprep.mubr.f32.mxu0 0.0
    %4157 = vmatmul.mubr.f32.gmra.mrb[0].mxu0 %v4063
    %v4158 = vpop.f32.mrb[0].mxu0
    %v4159 = vadd.f32 0.0, %v4158
    %v4160 = vpop.f32.mrb[0].mxu0
    %v4161 = vadd.f32 0.0, %v4160
    %4162 = vmatprep.mubr.f32.mxu0 0.0
    %4163 = vmatmul.mubr.f32.gmra.mrb[0].mxu0 %v4066
    %v4164 = vpop.f32.mrb[0].mxu0
    %v4165 = vadd.f32 0.0, %v4164
    %v4166 = vpop.f32.mrb[0].mxu0
    %v4167 = vadd.f32 0.0, %v4166
    %4168 = vmatprep.mubr.f32.mxu0 0.0
    %4169 = vmatmul.mubr.f32.gmra.mrb[0].mxu0 %v4069
    %v4170 = vpop.f32.mrb[0].mxu0
    %v4171 = vadd.f32 0.0, %v4170
    %v4172 = vpop.f32.mrb[0].mxu0
    %v4173 = vadd.f32 0.0, %v4172
    %4174 = vmatprep.mubr.f32.mxu0 0.0
    %4175 = vmatmul.mubr.f32.gmra.mrb[0].mxu0 %v4072
    %v4176 = vpop.f32.mrb[0].mxu0
    %v4177 = vadd.f32 0.0, %v4176
    %v4178 = vpop.f32.mrb[0].mxu0
    %v4179 = vadd.f32 0.0, %v4178
    %4180 = vmatprep.mubr.f32.mxu0 0.0
    %4181 = vmatmul.mubr.f32.gmra.mrb[0].mxu0 %v4075
    %v4182 = vpop.f32.mrb[0].mxu0
    %v4183 = vadd.f32 0.0, %v4182
    %v4184 = vpop.f32.mrb[0].mxu0
    %v4185 = vadd.f32 0.0, %v4184
    %4186 = vmatprep.mubr.f32.mxu0 0.0
    %4187 = vmatmul.mubr.f32.gmra.mrb[0].mxu0 %v4078
    %v4188 = vpop.f32.mrb[0].mxu0
    %v4189 = vadd.f32 0.0, %v4188
    %v4190 = vpop.f32.mrb[0].mxu0
    %v4191 = vadd.f32 0.0, %v4190
    %4192 = vdwg.mxu0
    %v4193 = vadd.f32 %v3979, %v4147
    %v4194 = vadd.f32 %v3981, %v4149
    %v4195 = vadd.f32 %v3985, %v4153
    %v4196 = vadd.f32 %v3987, %v4155
    %v4197 = vadd.f32 %v3991, %v4159
    %v4198 = vadd.f32 %v3993, %v4161
    %v4199 = vadd.f32 %v3997, %v4165
    %v4200 = vadd.f32 %v3999, %v4167
    %v4201 = vadd.f32 %v4003, %v4171
    %v4202 = vadd.f32 %v4005, %v4173
    %v4203 = vadd.f32 %v4009, %v4177
    %v4204 = vadd.f32 %v4011, %v4179
    %v4205 = vadd.f32 %v4015, %v4183
    %v4206 = vadd.f32 %v4017, %v4185
    %v4207 = vadd.f32 %v4021, %v4189
    %v4208 = vadd.f32 %v4023, %v4191
    %s4209 = scalar_lea.vmem %s7, 720
    %v4210 = vld [vmem:[%s4209] sm:$0xff]
    %v4211 = vld [vmem:[%s4209 + $0x8] sm:$0xff]
    %v4212 = vld [vmem:[%s4209 + $0x10] sm:$0xff]
    %v4213 = vld [vmem:[%s4209 + $0x18] sm:$0xff]
    %v4214 = vld [vmem:[%s4209 + $0x20] sm:$0xff]
    %v4215 = vld [vmem:[%s4209 + $0x28] sm:$0xff]
    %v4216 = vld [vmem:[%s4209 + $0x30] sm:$0xff]
    %v4217 = vld [vmem:[%s4209 + $0x38] sm:$0xff]
    %v4218 = vld [vmem:[%s4209 + $0x40] sm:$0xff]
    %v4219 = vld [vmem:[%s4209 + $0x48] sm:$0xff]
    %v4220 = vld [vmem:[%s4209 + $0x50] sm:$0xff]
    %v4221 = vld [vmem:[%s4209 + $0x58] sm:$0xff]
    %v4222 = vld [vmem:[%s4209 + $0x60] sm:$0xff]
    %v4223 = vld [vmem:[%s4209 + $0x68] sm:$0xff]
    %v4224 = vld [vmem:[%s4209 + $0x70] sm:$0xff]
    %v4225 = vld [vmem:[%s4209 + $0x78] sm:$0xff]
    %v4226 = vld [vmem:[%s4209 + $0x80] sm:$0xff]
    %v4227 = vld [vmem:[%s4209 + $0x88] sm:$0xff]
    %v4228 = vld [vmem:[%s4209 + $0x90] sm:$0xff]
    %v4229 = vld [vmem:[%s4209 + $0x98] sm:$0xff]
    %v4230 = vld [vmem:[%s4209 + $0xa0] sm:$0xff]
    %v4231 = vld [vmem:[%s4209 + $0xa8] sm:$0xff]
    %v4232 = vld [vmem:[%s4209 + $0xb0] sm:$0xff]
    %v4233 = vld [vmem:[%s4209 + $0xb8] sm:$0xff]
    %v4234 = vld [vmem:[%s4209 + $0xc0] sm:$0xff]
    %v4235 = vld [vmem:[%s4209 + $0xc8] sm:$0xff]
    %v4236 = vld [vmem:[%s4209 + $0xd0] sm:$0xff]
    %v4237 = vld [vmem:[%s4209 + $0xd8] sm:$0xff]
    %v4238 = vld [vmem:[%s4209 + $0xe0] sm:$0xff]
    %v4239 = vld [vmem:[%s4209 + $0xe8] sm:$0xff]
    %v4241 = vsel %vm3750, %v3673, 0
    %v4244 = vsel %vm3750, %v3674, 0
    %v4247 = vsel %vm3750, %v3675, 0
    %v4250 = vsel %vm3750, %v3676, 0
    %v4253 = vsel %vm3750, %v3677, 0
    %v4256 = vsel %vm3750, %v3678, 0
    %v4259 = vsel %vm3750, %v3679, 0
    %v4262 = vsel %vm3750, %v3680, 0
    %4264 = vmatprep.subr.mxu0 %v4211
    %4265 = vmatpush1.msra.mxu0 %v4210
    %4266 = vmatprep.subr.mxu0 %v4213
    %4267 = vmatpush1.msra.mxu0 %v4212
    %4268 = vmatprep.subr.mxu0 %v4215
    %4269 = vmatpush1.msra.mxu0 %v4214
    %4270 = vmatprep.subr.mxu0 %v4217
    %4271 = vmatpush1.msra.mxu0 %v4216
    %4272 = vmatprep.subr.mxu0 %v4219
    %4273 = vmatpush1.msra.mxu0 %v4218
    %4274 = vmatprep.subr.mxu0 %v4221
    %4275 = vmatpush1.msra.mxu0 %v4220
    %4276 = vmatprep.subr.mxu0 %v4223
    %4277 = vmatpush1.msra.mxu0 %v4222
    %4278 = vmatprep.subr.mxu0 %v4225
    %4279 = vmatpush1.msra.mxu0 %v4224
    %4280 = vmatprep.subr.mxu0 %v4227
    %4281 = vmatpush1.msra.mxu0 %v4226
    %4282 = vmatprep.subr.mxu0 %v4229
    %4283 = vmatpush1.msra.mxu0 %v4228
    %4284 = vmatprep.subr.mxu0 %v4231
    %4285 = vmatpush1.msra.mxu0 %v4230
    %4286 = vmatprep.subr.mxu0 %v4233
    %4287 = vmatpush1.msra.mxu0 %v4232
    %4288 = vmatprep.subr.mxu0 %v4235
    %4289 = vmatpush1.msra.mxu0 %v4234
    %4290 = vmatprep.subr.mxu0 %v4237
    %4291 = vmatpush1.msra.mxu0 %v4236
    %4292 = vmatprep.subr.mxu0 %v4239
    %4293 = vmatpush1.msra.mxu0 %v4238
    %4294 = vmatprep.subr.mxu0 0.0
    %4295 = vmatpush1.msra.mxu0 0.0
    %4296 = vmatprep.subr.mxu0 0.0
    %4297 = vmatpush1.msra.mxu0 0.0
    %4298 = vmatprep.subr.mxu0 0.0
    %4299 = vmatpush1.msra.mxu0 0.0
    %4300 = vmatprep.subr.mxu0 0.0
    %4301 = vmatpush1.msra.mxu0 0.0
    %4302 = vmatprep.subr.mxu0 0.0
    %4303 = vmatpush1.msra.mxu0 0.0
    %4304 = vmatprep.subr.mxu0 0.0
    %4305 = vmatpush1.msra.mxu0 0.0
    %4306 = vmatprep.subr.mxu0 0.0
    %4307 = vmatpush1.msra.mxu0 0.0
    %4308 = vmatprep.subr.mxu0 0.0
    %4309 = vmatpush1.msra.mxu0 0.0
    %4310 = vmatprep.subr.mxu0 0.0
    %4311 = vmatpush1.msra.mxu0 0.0
    %4312 = vmatprep.subr.mxu0 0.0
    %4313 = vmatpush1.msra.mxu0 0.0
    %4314 = vmatprep.subr.mxu0 0.0
    %4315 = vmatpush1.msra.mxu0 0.0
    %4316 = vmatprep.subr.mxu0 0.0
    %4317 = vmatpush1.msra.mxu0 0.0
    %4318 = vmatprep.subr.mxu0 0.0
    %4319 = vmatpush1.msra.mxu0 0.0
    %4320 = vmatprep.subr.mxu0 0.0
    %4321 = vmatpush1.msra.mxu0 0.0
    %4322 = vmatprep.subr.mxu0 0.0
    %4323 = vmatpush1.msra.mxu0 0.0
    %4324 = vmatprep.subr.mxu0 0.0
    %4325 = vmatpush1.msra.mxu0 0.0
    %4326 = vmatprep.subr.mxu0 0.0
    %4327 = vmatpush1.msra.mxu0 0.0
    %4328 = vmatprep.mubr.f32.mxu0 0.0
    %4329 = vmatmul.mubr.f32.gmra.mrb[0].mxu0 %v4241
    %v4330 = vpop.f32.mrb[0].mxu0
    %v4331 = vadd.f32 0.0, %v4330
    %v4332 = vpop.f32.mrb[0].mxu0
    %v4333 = vadd.f32 0.0, %v4332
    %4334 = vmatprep.mubr.f32.mxu0 0.0
    %4335 = vmatmul.mubr.f32.gmra.mrb[0].mxu0 %v4244
    %v4336 = vpop.f32.mrb[0].mxu0
    %v4337 = vadd.f32 0.0, %v4336
    %v4338 = vpop.f32.mrb[0].mxu0
    %v4339 = vadd.f32 0.0, %v4338
    %4340 = vmatprep.mubr.f32.mxu0 0.0
    %4341 = vmatmul.mubr.f32.gmra.mrb[0].mxu0 %v4247
    %v4342 = vpop.f32.mrb[0].mxu0
    %v4343 = vadd.f32 0.0, %v4342
    %v4344 = vpop.f32.mrb[0].mxu0
    %v4345 = vadd.f32 0.0, %v4344
    %4346 = vmatprep.mubr.f32.mxu0 0.0
    %4347 = vmatmul.mubr.f32.gmra.mrb[0].mxu0 %v4250
    %v4348 = vpop.f32.mrb[0].mxu0
    %v4349 = vadd.f32 0.0, %v4348
    %v4350 = vpop.f32.mrb[0].mxu0
    %v4351 = vadd.f32 0.0, %v4350
    %4352 = vmatprep.mubr.f32.mxu0 0.0
    %4353 = vmatmul.mubr.f32.gmra.mrb[0].mxu0 %v4253
    %v4354 = vpop.f32.mrb[0].mxu0
    %v4355 = vadd.f32 0.0, %v4354
    %v4356 = vpop.f32.mrb[0].mxu0
    %v4357 = vadd.f32 0.0, %v4356
    %4358 = vmatprep.mubr.f32.mxu0 0.0
    %4359 = vmatmul.mubr.f32.gmra.mrb[0].mxu0 %v4256
    %v4360 = vpop.f32.mrb[0].mxu0
    %v4361 = vadd.f32 0.0, %v4360
    %v4362 = vpop.f32.mrb[0].mxu0
    %v4363 = vadd.f32 0.0, %v4362
    %4364 = vmatprep.mubr.f32.mxu0 0.0
    %4365 = vmatmul.mubr.f32.gmra.mrb[0].mxu0 %v4259
    %v4366 = vpop.f32.mrb[0].mxu0
    %v4367 = vadd.f32 0.0, %v4366
    %v4368 = vpop.f32.mrb[0].mxu0
    %v4369 = vadd.f32 0.0, %v4368
    %4370 = vmatprep.mubr.f32.mxu0 0.0
    %4371 = vmatmul.mubr.f32.gmra.mrb[0].mxu0 %v4262
    %v4372 = vpop.f32.mrb[0].mxu0
    %v4373 = vadd.f32 0.0, %v4372
    %v4374 = vpop.f32.mrb[0].mxu0
    %v4375 = vadd.f32 0.0, %v4374
    %4376 = vdwg.mxu0
    %v4377 = vadd.f32 %v4193, %v4331
    %v4378 = vadd.f32 %v4194, %v4333
    %v4379 = vadd.f32 %v4195, %v4337
    %v4380 = vadd.f32 %v4196, %v4339
    %v4381 = vadd.f32 %v4197, %v4343
    %v4382 = vadd.f32 %v4198, %v4345
    %v4383 = vadd.f32 %v4199, %v4349
    %v4384 = vadd.f32 %v4200, %v4351
    %v4385 = vadd.f32 %v4201, %v4355
    %v4386 = vadd.f32 %v4202, %v4357
    %v4387 = vadd.f32 %v4203, %v4361
    %v4388 = vadd.f32 %v4204, %v4363
    %v4389 = vadd.f32 %v4205, %v4367
    %v4390 = vadd.f32 %v4206, %v4369
    %v4391 = vadd.f32 %v4207, %v4373
    %v4392 = vadd.f32 %v4208, %v4375
    %s4393 = scalar_lea.vmem %s7, 960
    %v4394 = vld [vmem:[%s4393] sm:$0xff]
    %v4395 = vld [vmem:[%s4393 + $0x8] sm:$0xff]
    %v4396 = vld [vmem:[%s4393 + $0x10] sm:$0xff]
    %v4397 = vld [vmem:[%s4393 + $0x18] sm:$0xff]
    %v4398 = vld [vmem:[%s4393 + $0x20] sm:$0xff]
    %v4399 = vld [vmem:[%s4393 + $0x28] sm:$0xff]
    %v4400 = vld [vmem:[%s4393 + $0x30] sm:$0xff]
    %v4401 = vld [vmem:[%s4393 + $0x38] sm:$0xff]
    %v4402 = vld [vmem:[%s4393 + $0x40] sm:$0xff]
    %v4403 = vld [vmem:[%s4393 + $0x48] sm:$0xff]
    %v4404 = vld [vmem:[%s4393 + $0x50] sm:$0xff]
    %v4405 = vld [vmem:[%s4393 + $0x58] sm:$0xff]
    %v4406 = vld [vmem:[%s4393 + $0x60] sm:$0xff]
    %v4407 = vld [vmem:[%s4393 + $0x68] sm:$0xff]
    %v4408 = vld [vmem:[%s4393 + $0x70] sm:$0xff]
    %v4409 = vld [vmem:[%s4393 + $0x78] sm:$0xff]
    %v4410 = vld [vmem:[%s4393 + $0x80] sm:$0xff]
    %v4411 = vld [vmem:[%s4393 + $0x88] sm:$0xff]
    %v4412 = vld [vmem:[%s4393 + $0x90] sm:$0xff]
    %v4413 = vld [vmem:[%s4393 + $0x98] sm:$0xff]
    %v4414 = vld [vmem:[%s4393 + $0xa0] sm:$0xff]
    %v4415 = vld [vmem:[%s4393 + $0xa8] sm:$0xff]
    %v4416 = vld [vmem:[%s4393 + $0xb0] sm:$0xff]
    %v4417 = vld [vmem:[%s4393 + $0xb8] sm:$0xff]
    %v4418 = vld [vmem:[%s4393 + $0xc0] sm:$0xff]
    %v4419 = vld [vmem:[%s4393 + $0xc8] sm:$0xff]
    %v4420 = vld [vmem:[%s4393 + $0xd0] sm:$0xff]
    %v4421 = vld [vmem:[%s4393 + $0xd8] sm:$0xff]
    %v4422 = vld [vmem:[%s4393 + $0xe0] sm:$0xff]
    %v4423 = vld [vmem:[%s4393 + $0xe8] sm:$0xff]
    %v4425 = vsel %vm3750, %v3681, 0
    %v4428 = vsel %vm3750, %v3682, 0
    %v4431 = vsel %vm3750, %v3683, 0
    %v4434 = vsel %vm3750, %v3684, 0
    %v4437 = vsel %vm3750, %v3685, 0
    %v4440 = vsel %vm3750, %v3686, 0
    %v4443 = vsel %vm3750, %v3687, 0
    %v4446 = vsel %vm3750, %v3688, 0
    %4448 = vmatprep.subr.mxu0 %v4395
    %4449 = vmatpush1.msra.mxu0 %v4394
    %4450 = vmatprep.subr.mxu0 %v4397
    %4451 = vmatpush1.msra.mxu0 %v4396
    %4452 = vmatprep.subr.mxu0 %v4399
    %4453 = vmatpush1.msra.mxu0 %v4398
    %4454 = vmatprep.subr.mxu0 %v4401
    %4455 = vmatpush1.msra.mxu0 %v4400
    %4456 = vmatprep.subr.mxu0 %v4403
    %4457 = vmatpush1.msra.mxu0 %v4402
    %4458 = vmatprep.subr.mxu0 %v4405
    %4459 = vmatpush1.msra.mxu0 %v4404
    %4460 = vmatprep.subr.mxu0 %v4407
    %4461 = vmatpush1.msra.mxu0 %v4406
    %4462 = vmatprep.subr.mxu0 %v4409
    %4463 = vmatpush1.msra.mxu0 %v4408
    %4464 = vmatprep.subr.mxu0 %v4411
    %4465 = vmatpush1.msra.mxu0 %v4410
    %4466 = vmatprep.subr.mxu0 %v4413
    %4467 = vmatpush1.msra.mxu0 %v4412
    %4468 = vmatprep.subr.mxu0 %v4415
    %4469 = vmatpush1.msra.mxu0 %v4414
    %4470 = vmatprep.subr.mxu0 %v4417
    %4471 = vmatpush1.msra.mxu0 %v4416
    %4472 = vmatprep.subr.mxu0 %v4419
    %4473 = vmatpush1.msra.mxu0 %v4418
    %4474 = vmatprep.subr.mxu0 %v4421
    %4475 = vmatpush1.msra.mxu0 %v4420
    %4476 = vmatprep.subr.mxu0 %v4423
    %4477 = vmatpush1.msra.mxu0 %v4422
    %4478 = vmatprep.subr.mxu0 0.0
    %4479 = vmatpush1.msra.mxu0 0.0
    %4480 = vmatprep.subr.mxu0 0.0
    %4481 = vmatpush1.msra.mxu0 0.0
    %4482 = vmatprep.subr.mxu0 0.0
    %4483 = vmatpush1.msra.mxu0 0.0
    %4484 = vmatprep.subr.mxu0 0.0
    %4485 = vmatpush1.msra.mxu0 0.0
    %4486 = vmatprep.subr.mxu0 0.0
    %4487 = vmatpush1.msra.mxu0 0.0
    %4488 = vmatprep.subr.mxu0 0.0
    %4489 = vmatpush1.msra.mxu0 0.0
    %4490 = vmatprep.subr.mxu0 0.0
    %4491 = vmatpush1.msra.mxu0 0.0
    %4492 = vmatprep.subr.mxu0 0.0
    %4493 = vmatpush1.msra.mxu0 0.0
    %4494 = vmatprep.subr.mxu0 0.0
    %4495 = vmatpush1.msra.mxu0 0.0
    %4496 = vmatprep.subr.mxu0 0.0
    %4497 = vmatpush1.msra.mxu0 0.0
    %4498 = vmatprep.subr.mxu0 0.0
    %4499 = vmatpush1.msra.mxu0 0.0
    %4500 = vmatprep.subr.mxu0 0.0
    %4501 = vmatpush1.msra.mxu0 0.0
    %4502 = vmatprep.subr.mxu0 0.0
    %4503 = vmatpush1.msra.mxu0 0.0
    %4504 = vmatprep.subr.mxu0 0.0
    %4505 = vmatpush1.msra.mxu0 0.0
    %4506 = vmatprep.subr.mxu0 0.0
    %4507 = vmatpush1.msra.mxu0 0.0
    %4508 = vmatprep.subr.mxu0 0.0
    %4509 = vmatpush1.msra.mxu0 0.0
    %4510 = vmatprep.subr.mxu0 0.0
    %4511 = vmatpush1.msra.mxu0 0.0
    %4512 = vmatprep.mubr.f32.mxu0 0.0
    %4513 = vmatmul.mubr.f32.gmra.mrb[0].mxu0 %v4425
    %v4514 = vpop.f32.mrb[0].mxu0
    %v4515 = vadd.f32 0.0, %v4514
    %v4516 = vpop.f32.mrb[0].mxu0
    %v4517 = vadd.f32 0.0, %v4516
    %4518 = vmatprep.mubr.f32.mxu0 0.0
    %4519 = vmatmul.mubr.f32.gmra.mrb[0].mxu0 %v4428
    %v4520 = vpop.f32.mrb[0].mxu0
    %v4521 = vadd.f32 0.0, %v4520
    %v4522 = vpop.f32.mrb[0].mxu0
    %v4523 = vadd.f32 0.0, %v4522
    %4524 = vmatprep.mubr.f32.mxu0 0.0
    %4525 = vmatmul.mubr.f32.gmra.mrb[0].mxu0 %v4431
    %v4526 = vpop.f32.mrb[0].mxu0
    %v4527 = vadd.f32 0.0, %v4526
    %v4528 = vpop.f32.mrb[0].mxu0
    %v4529 = vadd.f32 0.0, %v4528
    %4530 = vmatprep.mubr.f32.mxu0 0.0
    %4531 = vmatmul.mubr.f32.gmra.mrb[0].mxu0 %v4434
    %v4532 = vpop.f32.mrb[0].mxu0
    %v4533 = vadd.f32 0.0, %v4532
    %v4534 = vpop.f32.mrb[0].mxu0
    %v4535 = vadd.f32 0.0, %v4534
    %4536 = vmatprep.mubr.f32.mxu0 0.0
    %4537 = vmatmul.mubr.f32.gmra.mrb[0].mxu0 %v4437
    %v4538 = vpop.f32.mrb[0].mxu0
    %v4539 = vadd.f32 0.0, %v4538
    %v4540 = vpop.f32.mrb[0].mxu0
    %v4541 = vadd.f32 0.0, %v4540
    %4542 = vmatprep.mubr.f32.mxu0 0.0
    %4543 = vmatmul.mubr.f32.gmra.mrb[0].mxu0 %v4440
    %v4544 = vpop.f32.mrb[0].mxu0
    %v4545 = vadd.f32 0.0, %v4544
    %v4546 = vpop.f32.mrb[0].mxu0
    %v4547 = vadd.f32 0.0, %v4546
    %4548 = vmatprep.mubr.f32.mxu0 0.0
    %4549 = vmatmul.mubr.f32.gmra.mrb[0].mxu0 %v4443
    %v4550 = vpop.f32.mrb[0].mxu0
    %v4551 = vadd.f32 0.0, %v4550
    %v4552 = vpop.f32.mrb[0].mxu0
    %v4553 = vadd.f32 0.0, %v4552
    %4554 = vmatprep.mubr.f32.mxu0 0.0
    %4555 = vmatmul.mubr.f32.gmra.mrb[0].mxu0 %v4446
    %v4556 = vpop.f32.mrb[0].mxu0
    %v4557 = vadd.f32 0.0, %v4556
    %v4558 = vpop.f32.mrb[0].mxu0
    %v4559 = vadd.f32 0.0, %v4558
    %4560 = vdwg.mxu0
    %v4561 = vadd.f32 %v4377, %v4515
    %v4562 = vadd.f32 %v4378, %v4517
    %v4563 = vadd.f32 %v4379, %v4521
    %v4564 = vadd.f32 %v4380, %v4523
    %v4565 = vadd.f32 %v4381, %v4527
    %v4566 = vadd.f32 %v4382, %v4529
    %v4567 = vadd.f32 %v4383, %v4533
    %v4568 = vadd.f32 %v4384, %v4535
    %v4569 = vadd.f32 %v4385, %v4539
    %v4570 = vadd.f32 %v4386, %v4541
    %v4571 = vadd.f32 %v4387, %v4545
    %v4572 = vadd.f32 %v4388, %v4547
    %v4573 = vadd.f32 %v4389, %v4551
    %v4574 = vadd.f32 %v4390, %v4553
    %v4575 = vadd.f32 %v4391, %v4557
    %v4576 = vadd.f32 %v4392, %v4559
    %v4577 = vld [vmem:[%s9] sm:$0xff]
    %v4578 = vld [vmem:[%s9 + $0x8] sm:$0xff]
    %v4579 = vld [vmem:[%s9 + $0x10] sm:$0xff]
    %v4580 = vld [vmem:[%s9 + $0x18] sm:$0xff]
    %v4582 = vsel %vm1880, %v4577, 0
    %v4585 = vsel %vm1880, %v4578, 0
    %v4588 = vsel %vm1880, %v4579, 0
    %v4591 = vsel %vm1880, %v4580, 0
    %4593 = vmatprep.subr.mxu0 %v4562
    %4594 = vmatpush1.msra.mxu0 %v4561
    %4595 = vmatprep.subr.mxu0 %v4564
    %4596 = vmatpush1.msra.mxu0 %v4563
    %4597 = vmatprep.subr.mxu0 %v4566
    %4598 = vmatpush1.msra.mxu0 %v4565
    %4599 = vmatprep.subr.mxu0 %v4568
    %4600 = vmatpush1.msra.mxu0 %v4567
    %4601 = vmatprep.subr.mxu0 %v4570
    %4602 = vmatpush1.msra.mxu0 %v4569
    %4603 = vmatprep.subr.mxu0 %v4572
    %4604 = vmatpush1.msra.mxu0 %v4571
    %4605 = vmatprep.subr.mxu0 %v4574
    %4606 = vmatpush1.msra.mxu0 %v4573
    %4607 = vmatprep.subr.mxu0 %v4576
    %4608 = vmatpush1.msra.mxu0 %v4575
    %4609 = vmatprep.subr.mxu0 0.0
    %4610 = vmatpush1.msra.mxu0 0.0
    %4611 = vmatprep.subr.mxu0 0.0
    %4612 = vmatpush1.msra.mxu0 0.0
    %4613 = vmatprep.subr.mxu0 0.0
    %4614 = vmatpush1.msra.mxu0 0.0
    %4615 = vmatprep.subr.mxu0 0.0
    %4616 = vmatpush1.msra.mxu0 0.0
    %4617 = vmatprep.subr.mxu0 0.0
    %4618 = vmatpush1.msra.mxu0 0.0
    %4619 = vmatprep.subr.mxu0 0.0
    %4620 = vmatpush1.msra.mxu0 0.0
    %4621 = vmatprep.subr.mxu0 0.0
    %4622 = vmatpush1.msra.mxu0 0.0
    %4623 = vmatprep.subr.mxu0 0.0
    %4624 = vmatpush1.msra.mxu0 0.0
    %4625 = vmatprep.subr.mxu0 0.0
    %4626 = vmatpush1.msra.mxu0 0.0
    %4627 = vmatprep.subr.mxu0 0.0
    %4628 = vmatpush1.msra.mxu0 0.0
    %4629 = vmatprep.subr.mxu0 0.0
    %4630 = vmatpush1.msra.mxu0 0.0
    %4631 = vmatprep.subr.mxu0 0.0
    %4632 = vmatpush1.msra.mxu0 0.0
    %4633 = vmatprep.subr.mxu0 0.0
    %4634 = vmatpush1.msra.mxu0 0.0
    %4635 = vmatprep.subr.mxu0 0.0
    %4636 = vmatpush1.msra.mxu0 0.0
    %4637 = vmatprep.subr.mxu0 0.0
    %4638 = vmatpush1.msra.mxu0 0.0
    %4639 = vmatprep.subr.mxu0 0.0
    %4640 = vmatpush1.msra.mxu0 0.0
    %4641 = vmatprep.subr.mxu0 0.0
    %4642 = vmatpush1.msra.mxu0 0.0
    %4643 = vmatprep.subr.mxu0 0.0
    %4644 = vmatpush1.msra.mxu0 0.0
    %4645 = vmatprep.subr.mxu0 0.0
    %4646 = vmatpush1.msra.mxu0 0.0
    %4647 = vmatprep.subr.mxu0 0.0
    %4648 = vmatpush1.msra.mxu0 0.0
    %4649 = vmatprep.subr.mxu0 0.0
    %4650 = vmatpush1.msra.mxu0 0.0
    %4651 = vmatprep.subr.mxu0 0.0
    %4652 = vmatpush1.msra.mxu0 0.0
    %4653 = vmatprep.subr.mxu0 0.0
    %4654 = vmatpush1.msra.mxu0 0.0
    %4655 = vmatprep.subr.mxu0 0.0
    %4656 = vmatpush1.msra.mxu0 0.0
    %4657 = vmatprep.mubr.f32.mxu0 0.0
    %4658 = vmatmul.mubr.f32.gmra.mrb[0].mxu0 %v4582
    %v4659 = vpop.f32.mrb[0].mxu0
    %v4660 = vadd.f32 0.0, %v4659
    %v4661 = vpop.f32.mrb[0].mxu0
    %v4662 = vadd.f32 0.0, %v4661
    %4663 = vmatprep.mubr.f32.mxu0 0.0
    %4664 = vmatmul.mubr.f32.gmra.mrb[0].mxu0 %v4585
    %v4665 = vpop.f32.mrb[0].mxu0
    %v4666 = vadd.f32 0.0, %v4665
    %v4667 = vpop.f32.mrb[0].mxu0
    %v4668 = vadd.f32 0.0, %v4667
    %4669 = vmatprep.mubr.f32.mxu0 0.0
    %4670 = vmatmul.mubr.f32.gmra.mrb[0].mxu0 %v4588
    %v4671 = vpop.f32.mrb[0].mxu0
    %v4672 = vadd.f32 0.0, %v4671
    %v4673 = vpop.f32.mrb[0].mxu0
    %v4674 = vadd.f32 0.0, %v4673
    %4675 = vmatprep.mubr.f32.mxu0 0.0
    %4676 = vmatmul.mubr.f32.gmra.mrb[0].mxu0 %v4591
    %v4677 = vpop.f32.mrb[0].mxu0
    %v4678 = vadd.f32 0.0, %v4677
    %v4679 = vpop.f32.mrb[0].mxu0
    %v4680 = vadd.f32 0.0, %v4679
    %4681 = vdwg.mxu0
    %v4682 = vld [vmem:[%s10] sm:$0xff]
    %v4683 = vld [vmem:[%s10 + $0x8] sm:$0xff]
    %v4684 = vld [vmem:[%s10 + $0x10] sm:$0xff]
    %v4685 = vld [vmem:[%s10 + $0x18] sm:$0xff]
    %v4687 = vsel %vm1880, %v4682, 0
    %v4690 = vsel %vm1880, %v4683, 0
    %v4693 = vsel %vm1880, %v4684, 0
    %v4696 = vsel %vm1880, %v4685, 0
    %4698 = vmatprep.subr.mxu0 %v4562
    %4699 = vmatpush1.msra.mxu0 %v4561
    %4700 = vmatprep.subr.mxu0 %v4564
    %4701 = vmatpush1.msra.mxu0 %v4563
    %4702 = vmatprep.subr.mxu0 %v4566
    %4703 = vmatpush1.msra.mxu0 %v4565
    %4704 = vmatprep.subr.mxu0 %v4568
    %4705 = vmatpush1.msra.mxu0 %v4567
    %4706 = vmatprep.subr.mxu0 %v4570
    %4707 = vmatpush1.msra.mxu0 %v4569
    %4708 = vmatprep.subr.mxu0 %v4572
    %4709 = vmatpush1.msra.mxu0 %v4571
    %4710 = vmatprep.subr.mxu0 %v4574
    %4711 = vmatpush1.msra.mxu0 %v4573
    %4712 = vmatprep.subr.mxu0 %v4576
    %4713 = vmatpush1.msra.mxu0 %v4575
    %4714 = vmatprep.subr.mxu0 0.0
    %4715 = vmatpush1.msra.mxu0 0.0
    %4716 = vmatprep.subr.mxu0 0.0
    %4717 = vmatpush1.msra.mxu0 0.0
    %4718 = vmatprep.subr.mxu0 0.0
    %4719 = vmatpush1.msra.mxu0 0.0
    %4720 = vmatprep.subr.mxu0 0.0
    %4721 = vmatpush1.msra.mxu0 0.0
    %4722 = vmatprep.subr.mxu0 0.0
    %4723 = vmatpush1.msra.mxu0 0.0
    %4724 = vmatprep.subr.mxu0 0.0
    %4725 = vmatpush1.msra.mxu0 0.0
    %4726 = vmatprep.subr.mxu0 0.0
    %4727 = vmatpush1.msra.mxu0 0.0
    %4728 = vmatprep.subr.mxu0 0.0
    %4729 = vmatpush1.msra.mxu0 0.0
    %4730 = vmatprep.subr.mxu0 0.0
    %4731 = vmatpush1.msra.mxu0 0.0
    %4732 = vmatprep.subr.mxu0 0.0
    %4733 = vmatpush1.msra.mxu0 0.0
    %4734 = vmatprep.subr.mxu0 0.0
    %4735 = vmatpush1.msra.mxu0 0.0
    %4736 = vmatprep.subr.mxu0 0.0
    %4737 = vmatpush1.msra.mxu0 0.0
    %4738 = vmatprep.subr.mxu0 0.0
    %4739 = vmatpush1.msra.mxu0 0.0
    %4740 = vmatprep.subr.mxu0 0.0
    %4741 = vmatpush1.msra.mxu0 0.0
    %4742 = vmatprep.subr.mxu0 0.0
    %4743 = vmatpush1.msra.mxu0 0.0
    %4744 = vmatprep.subr.mxu0 0.0
    %4745 = vmatpush1.msra.mxu0 0.0
    %4746 = vmatprep.subr.mxu0 0.0
    %4747 = vmatpush1.msra.mxu0 0.0
    %4748 = vmatprep.subr.mxu0 0.0
    %4749 = vmatpush1.msra.mxu0 0.0
    %4750 = vmatprep.subr.mxu0 0.0
    %4751 = vmatpush1.msra.mxu0 0.0
    %4752 = vmatprep.subr.mxu0 0.0
    %4753 = vmatpush1.msra.mxu0 0.0
    %4754 = vmatprep.subr.mxu0 0.0
    %4755 = vmatpush1.msra.mxu0 0.0
    %4756 = vmatprep.subr.mxu0 0.0
    %4757 = vmatpush1.msra.mxu0 0.0
    %4758 = vmatprep.subr.mxu0 0.0
    %4759 = vmatpush1.msra.mxu0 0.0
    %4760 = vmatprep.subr.mxu0 0.0
    %4761 = vmatpush1.msra.mxu0 0.0
    %4762 = vmatprep.mubr.f32.mxu0 0.0
    %4763 = vmatmul.mubr.f32.gmra.mrb[0].mxu0 %v4687
    %v4764 = vpop.f32.mrb[0].mxu0
    %v4765 = vadd.f32 0.0, %v4764
    %v4766 = vpop.f32.mrb[0].mxu0
    %v4767 = vadd.f32 0.0, %v4766
    %4768 = vmatprep.mubr.f32.mxu0 0.0
    %4769 = vmatmul.mubr.f32.gmra.mrb[0].mxu0 %v4690
    %v4770 = vpop.f32.mrb[0].mxu0
    %v4771 = vadd.f32 0.0, %v4770
    %v4772 = vpop.f32.mrb[0].mxu0
    %v4773 = vadd.f32 0.0, %v4772
    %4774 = vmatprep.mubr.f32.mxu0 0.0
    %4775 = vmatmul.mubr.f32.gmra.mrb[0].mxu0 %v4693
    %v4776 = vpop.f32.mrb[0].mxu0
    %v4777 = vadd.f32 0.0, %v4776
    %v4778 = vpop.f32.mrb[0].mxu0
    %v4779 = vadd.f32 0.0, %v4778
    %4780 = vmatprep.mubr.f32.mxu0 0.0
    %4781 = vmatmul.mubr.f32.gmra.mrb[0].mxu0 %v4696
    %v4782 = vpop.f32.mrb[0].mxu0
    %v4783 = vadd.f32 0.0, %v4782
    %v4784 = vpop.f32.mrb[0].mxu0
    %v4785 = vadd.f32 0.0, %v4784
    %4786 = vdwg.mxu0
    %v4787 = vmax.f32 %v4660, %v4765
    %v4788 = vmax.f32 %v4662, %v4767
    %v4789 = vmax.f32 %v4666, %v4771
    %v4790 = vmax.f32 %v4668, %v4773
    %v4791 = vmax.f32 %v4672, %v4777
    %v4792 = vmax.f32 %v4674, %v4779
    %v4793 = vmax.f32 %v4678, %v4783
    %v4794 = vmax.f32 %v4680, %v4785
    %v4795 = vld [vmem:[%s11] sm:$0xff]
    %v4796 = vld [vmem:[%s11 + $0x8] sm:$0xff]
    %v4797 = vld [vmem:[%s11 + $0x10] sm:$0xff]
    %v4798 = vld [vmem:[%s11 + $0x18] sm:$0xff]
    %v4799 = vld [vmem:[%s11 + $0x20] sm:$0xff]
    %v4800 = vld [vmem:[%s11 + $0x28] sm:$0xff]
    %v4801 = vld [vmem:[%s11 + $0x30] sm:$0xff]
    %v4802 = vld [vmem:[%s11 + $0x38] sm:$0xff]
    %v4803 = vld [vmem:[%s11 + $0x40] sm:$0xff]
    %v4804 = vld [vmem:[%s11 + $0x48] sm:$0xff]
    %v4805 = vld [vmem:[%s11 + $0x50] sm:$0xff]
    %v4806 = vld [vmem:[%s11 + $0x58] sm:$0xff]
    %v4807 = vld [vmem:[%s11 + $0x60] sm:$0xff]
    %v4808 = vld [vmem:[%s11 + $0x68] sm:$0xff]
    %v4809 = vld [vmem:[%s11 + $0x70] sm:$0xff]
    %v4810 = vld [vmem:[%s11 + $0x78] sm:$0xff]
    %v4811 = vld [vmem:[%s11 + $0x80] sm:$0xff]
    %v4812 = vld [vmem:[%s11 + $0x88] sm:$0xff]
    %v4813 = vld [vmem:[%s11 + $0x90] sm:$0xff]
    %v4814 = vld [vmem:[%s11 + $0x98] sm:$0xff]
    %vm4815 = vcmask 261120
    %v4817 = vsel %vm4815, %v4788, 0
    %v4820 = vsel %vm4815, %v4790, 0
    %v4823 = vsel %vm4815, %v4792, 0
    %v4826 = vsel %vm4815, %v4794, 0
    %4828 = vmatprep.subr.mxu0 0.0
    %4829 = vmatpush1.msra.mxu0 %v4795
    %4830 = vmatprep.subr.mxu0 0.0
    %4831 = vmatpush1.msra.mxu0 %v4796
    %4832 = vmatprep.subr.mxu0 0.0
    %4833 = vmatpush1.msra.mxu0 %v4797
    %4834 = vmatprep.subr.mxu0 0.0
    %4835 = vmatpush1.msra.mxu0 %v4798
    %4836 = vmatprep.subr.mxu0 0.0
    %4837 = vmatpush1.msra.mxu0 %v4799
    %4838 = vmatprep.subr.mxu0 0.0
    %4839 = vmatpush1.msra.mxu0 %v4800
    %4840 = vmatprep.subr.mxu0 0.0
    %4841 = vmatpush1.msra.mxu0 %v4801
    %4842 = vmatprep.subr.mxu0 0.0
    %4843 = vmatpush1.msra.mxu0 %v4802
    %4844 = vmatprep.subr.mxu0 0.0
    %4845 = vmatpush1.msra.mxu0 %v4803
    %4846 = vmatprep.subr.mxu0 0.0
    %4847 = vmatpush1.msra.mxu0 %v4804
    %4848 = vmatprep.subr.mxu0 0.0
    %4849 = vmatpush1.msra.mxu0 %v4805
    %4850 = vmatprep.subr.mxu0 0.0
    %4851 = vmatpush1.msra.mxu0 %v4806
    %4852 = vmatprep.subr.mxu0 0.0
    %4853 = vmatpush1.msra.mxu0 %v4807
    %4854 = vmatprep.subr.mxu0 0.0
    %4855 = vmatpush1.msra.mxu0 %v4808
    %4856 = vmatprep.subr.mxu0 0.0
    %4857 = vmatpush1.msra.mxu0 %v4809
    %4858 = vmatprep.subr.mxu0 0.0
    %4859 = vmatpush1.msra.mxu0 %v4810
    %4860 = vmatprep.subr.mxu0 0.0
    %4861 = vmatpush1.msra.mxu0 %v4811
    %4862 = vmatprep.subr.mxu0 0.0
    %4863 = vmatpush1.msra.mxu0 %v4812
    %4864 = vmatprep.subr.mxu0 0.0
    %4865 = vmatpush1.msra.mxu0 %v4813
    %4866 = vmatprep.subr.mxu0 0.0
    %4867 = vmatpush1.msra.mxu0 %v4814
    %4868 = vmatprep.subr.mxu0 0.0
    %4869 = vmatpush1.msra.mxu0 0.0
    %4870 = vmatprep.subr.mxu0 0.0
    %4871 = vmatpush1.msra.mxu0 0.0
    %4872 = vmatprep.subr.mxu0 0.0
    %4873 = vmatpush1.msra.mxu0 0.0
    %4874 = vmatprep.subr.mxu0 0.0
    %4875 = vmatpush1.msra.mxu0 0.0
    %4876 = vmatprep.subr.mxu0 0.0
    %4877 = vmatpush1.msra.mxu0 0.0
    %4878 = vmatprep.subr.mxu0 0.0
    %4879 = vmatpush1.msra.mxu0 0.0
    %4880 = vmatprep.subr.mxu0 0.0
    %4881 = vmatpush1.msra.mxu0 0.0
    %4882 = vmatprep.subr.mxu0 0.0
    %4883 = vmatpush1.msra.mxu0 0.0
    %4884 = vmatprep.subr.mxu0 0.0
    %4885 = vmatpush1.msra.mxu0 0.0
    %4886 = vmatprep.subr.mxu0 0.0
    %4887 = vmatpush1.msra.mxu0 0.0
    %4888 = vmatprep.subr.mxu0 0.0
    %4889 = vmatpush1.msra.mxu0 0.0
    %4890 = vmatprep.subr.mxu0 0.0
    %4891 = vmatpush1.msra.mxu0 0.0
    %4892 = vmatprep.mubr.f32.mxu0 %v4817
    %4893 = vmatmul.mubr.f32.gmra.mrb[0].mxu0 %v4787
    %v4894 = vpop.f32.mrb[0].mxu0
    %v4895 = vadd.f32 0.0, %v4894
    %v4896 = vpop.f32.mrb[0].mxu0
    %4897 = vmatprep.mubr.f32.mxu0 %v4820
    %4898 = vmatmul.mubr.f32.gmra.mrb[0].mxu0 %v4789
    %v4899 = vpop.f32.mrb[0].mxu0
    %v4900 = vadd.f32 0.0, %v4899
    %v4901 = vpop.f32.mrb[0].mxu0
    %4902 = vmatprep.mubr.f32.mxu0 %v4823
    %4903 = vmatmul.mubr.f32.gmra.mrb[0].mxu0 %v4791
    %v4904 = vpop.f32.mrb[0].mxu0
    %v4905 = vadd.f32 0.0, %v4904
    %v4906 = vpop.f32.mrb[0].mxu0
    %4907 = vmatprep.mubr.f32.mxu0 %v4826
    %4908 = vmatmul.mubr.f32.gmra.mrb[0].mxu0 %v4793
    %v4909 = vpop.f32.mrb[0].mxu0
    %v4910 = vadd.f32 0.0, %v4909
    %v4911 = vpop.f32.mrb[0].mxu0
    %4912 = vdwg.mxu0
    %v4913 = vld [vmem:[%s12] sm:$0xff]
    %v4914 = vld [vmem:[%s12 + $0x8] sm:$0xff]
    %v4915 = vld [vmem:[%s12 + $0x10] sm:$0xff]
    %v4916 = vld [vmem:[%s12 + $0x18] sm:$0xff]
    %v4917 = vld [vmem:[%s12 + $0x20] sm:$0xff]
    %v4918 = vld [vmem:[%s12 + $0x28] sm:$0xff]
    %v4919 = vld [vmem:[%s12 + $0x30] sm:$0xff]
    %v4920 = vld [vmem:[%s12 + $0x38] sm:$0xff]
    %v4921 = vld [vmem:[%s12 + $0x40] sm:$0xff]
    %v4922 = vld [vmem:[%s12 + $0x48] sm:$0xff]
    %v4923 = vld [vmem:[%s12 + $0x50] sm:$0xff]
    %v4924 = vld [vmem:[%s12 + $0x58] sm:$0xff]
    %v4925 = vld [vmem:[%s12 + $0x60] sm:$0xff]
    %v4926 = vld [vmem:[%s12 + $0x68] sm:$0xff]
    %v4927 = vld [vmem:[%s12 + $0x70] sm:$0xff]
    %v4928 = vld [vmem:[%s12 + $0x78] sm:$0xff]
    %v4929 = vld [vmem:[%s12 + $0x80] sm:$0xff]
    %v4930 = vld [vmem:[%s12 + $0x88] sm:$0xff]
    %v4931 = vld [vmem:[%s12 + $0x90] sm:$0xff]
    %v4932 = vld [vmem:[%s12 + $0x98] sm:$0xff]
    %4933 = vmatprep.subr.mxu0 0.0
    %4934 = vmatpush1.msra.mxu0 %v4913
    %4935 = vmatprep.subr.mxu0 0.0
    %4936 = vmatpush1.msra.mxu0 %v4914
    %4937 = vmatprep.subr.mxu0 0.0
    %4938 = vmatpush1.msra.mxu0 %v4915
    %4939 = vmatprep.subr.mxu0 0.0
    %4940 = vmatpush1.msra.mxu0 %v4916
    %4941 = vmatprep.subr.mxu0 0.0
    %4942 = vmatpush1.msra.mxu0 %v4917
    %4943 = vmatprep.subr.mxu0 0.0
    %4944 = vmatpush1.msra.mxu0 %v4918
    %4945 = vmatprep.subr.mxu0 0.0
    %4946 = vmatpush1.msra.mxu0 %v4919
    %4947 = vmatprep.subr.mxu0 0.0
    %4948 = vmatpush1.msra.mxu0 %v4920
    %4949 = vmatprep.subr.mxu0 0.0
    %4950 = vmatpush1.msra.mxu0 %v4921
    %4951 = vmatprep.subr.mxu0 0.0
    %4952 = vmatpush1.msra.mxu0 %v4922
    %4953 = vmatprep.subr.mxu0 0.0
    %4954 = vmatpush1.msra.mxu0 %v4923
    %4955 = vmatprep.subr.mxu0 0.0
    %4956 = vmatpush1.msra.mxu0 %v4924
    %4957 = vmatprep.subr.mxu0 0.0
    %4958 = vmatpush1.msra.mxu0 %v4925
    %4959 = vmatprep.subr.mxu0 0.0
    %4960 = vmatpush1.msra.mxu0 %v4926
    %4961 = vmatprep.subr.mxu0 0.0
    %4962 = vmatpush1.msra.mxu0 %v4927
    %4963 = vmatprep.subr.mxu0 0.0
    %4964 = vmatpush1.msra.mxu0 %v4928
    %4965 = vmatprep.subr.mxu0 0.0
    %4966 = vmatpush1.msra.mxu0 %v4929
    %4967 = vmatprep.subr.mxu0 0.0
    %4968 = vmatpush1.msra.mxu0 %v4930
    %4969 = vmatprep.subr.mxu0 0.0
    %4970 = vmatpush1.msra.mxu0 %v4931
    %4971 = vmatprep.subr.mxu0 0.0
    %4972 = vmatpush1.msra.mxu0 %v4932
    %4973 = vmatprep.subr.mxu0 0.0
    %4974 = vmatpush1.msra.mxu0 0.0
    %4975 = vmatprep.subr.mxu0 0.0
    %4976 = vmatpush1.msra.mxu0 0.0
    %4977 = vmatprep.subr.mxu0 0.0
    %4978 = vmatpush1.msra.mxu0 0.0
    %4979 = vmatprep.subr.mxu0 0.0
    %4980 = vmatpush1.msra.mxu0 0.0
    %4981 = vmatprep.subr.mxu0 0.0
    %4982 = vmatpush1.msra.mxu0 0.0
    %4983 = vmatprep.subr.mxu0 0.0
    %4984 = vmatpush1.msra.mxu0 0.0
    %4985 = vmatprep.subr.mxu0 0.0
    %4986 = vmatpush1.msra.mxu0 0.0
    %4987 = vmatprep.subr.mxu0 0.0
    %4988 = vmatpush1.msra.mxu0 0.0
    %4989 = vmatprep.subr.mxu0 0.0
    %4990 = vmatpush1.msra.mxu0 0.0
    %4991 = vmatprep.subr.mxu0 0.0
    %4992 = vmatpush1.msra.mxu0 0.0
    %4993 = vmatprep.subr.mxu0 0.0
    %4994 = vmatpush1.msra.mxu0 0.0
    %4995 = vmatprep.subr.mxu0 0.0
    %4996 = vmatpush1.msra.mxu0 0.0
    %4997 = vmatprep.mubr.f32.mxu0 %v4817
    %4998 = vmatmul.mubr.f32.gmra.mrb[0].mxu0 %v4787
    %v4999 = vpop.f32.mrb[0].mxu0
    %v5000 = vadd.f32 0.0, %v4999
    %v5001 = vpop.f32.mrb[0].mxu0
    %5002 = vmatprep.mubr.f32.mxu0 %v4820
    %5003 = vmatmul.mubr.f32.gmra.mrb[0].mxu0 %v4789
    %v5004 = vpop.f32.mrb[0].mxu0
    %v5005 = vadd.f32 0.0, %v5004
    %v5006 = vpop.f32.mrb[0].mxu0
    %5007 = vmatprep.mubr.f32.mxu0 %v4823
    %5008 = vmatmul.mubr.f32.gmra.mrb[0].mxu0 %v4791
    %v5009 = vpop.f32.mrb[0].mxu0
    %v5010 = vadd.f32 0.0, %v5009
    %v5011 = vpop.f32.mrb[0].mxu0
    %5012 = vmatprep.mubr.f32.mxu0 %v4826
    %5013 = vmatmul.mubr.f32.gmra.mrb[0].mxu0 %v4793
    %v5014 = vpop.f32.mrb[0].mxu0
    %v5015 = vadd.f32 0.0, %v5014
    %v5016 = vpop.f32.mrb[0].mxu0
    %5017 = vdwg.mxu0
    %v5018 = vmax.f32 %v4895, %v5000
    %v5019 = vmax.f32 %v4900, %v5005
    %v5020 = vmax.f32 %v4905, %v5010
    %v5021 = vmax.f32 %v4910, %v5015
    %v5022 = vld [vmem:[%s8] sm:$0x1]
    %v5024 = vlaneseq
    %v5025 = vshrl.u32 %v5024, 7
    %v5026 = vsub.s32 0, %v5025
    %v5027 = vrot.slane %v5022, %v5026
    %v5029 = vadd.f32 %v5018, %v5027
    %v5030 = vadd.f32 %v5019, %v5027
    %v5031 = vadd.f32 %v5020, %v5027
    %v5032 = vadd.f32 %v5021, %v5027
    %v5033 = vld [vmem:[%s14] sm:$0x1]
    %v5034 = vld [vmem:[%s13] sm:$0xff]
    %v5035 = vld [vmem:[%s13 + $0x8] sm:$0xff]
    %v5036 = vld [vmem:[%s13 + $0x10] sm:$0xff]
    %v5037 = vld [vmem:[%s13 + $0x18] sm:$0xff]
    %v5038 = vld [vmem:[%s13 + $0x20] sm:$0xff]
    %v5039 = vld [vmem:[%s13 + $0x28] sm:$0xff]
    %v5040 = vld [vmem:[%s13 + $0x30] sm:$0xff]
    %v5041 = vld [vmem:[%s13 + $0x38] sm:$0xff]
    %v5042 = vld [vmem:[%s13 + $0x40] sm:$0xff]
    %v5043 = vld [vmem:[%s13 + $0x48] sm:$0xff]
    %vm5044 = vcmask 654336
    %v5046 = vsel %vm5044, %v5029, 0
    %5048 = vmatprep.subr.mxu0 0.0
    %5049 = vmatpush1.msra.mxu0 %v5034
    %5050 = vmatprep.subr.mxu0 0.0
    %5051 = vmatpush1.msra.mxu0 %v5035
    %5052 = vmatprep.subr.mxu0 0.0
    %5053 = vmatpush1.msra.mxu0 %v5036
    %5054 = vmatprep.subr.mxu0 0.0
    %5055 = vmatpush1.msra.mxu0 %v5037
    %5056 = vmatprep.subr.mxu0 0.0
    %5057 = vmatpush1.msra.mxu0 %v5038
    %5058 = vmatprep.subr.mxu0 0.0
    %5059 = vmatpush1.msra.mxu0 %v5039
    %5060 = vmatprep.subr.mxu0 0.0
    %5061 = vmatpush1.msra.mxu0 %v5040
    %5062 = vmatprep.subr.mxu0 0.0
    %5063 = vmatpush1.msra.mxu0 %v5041
    %5064 = vmatprep.subr.mxu0 0.0
    %5065 = vmatpush1.msra.mxu0 %v5042
    %5066 = vmatprep.subr.mxu0 0.0
    %5067 = vmatpush1.msra.mxu0 %v5043
    %5068 = vmatprep.subr.mxu0 0.0
    %5069 = vmatpush1.msra.mxu0 0.0
    %5070 = vmatprep.subr.mxu0 0.0
    %5071 = vmatpush1.msra.mxu0 0.0
    %5072 = vmatprep.subr.mxu0 0.0
    %5073 = vmatpush1.msra.mxu0 0.0
    %5074 = vmatprep.subr.mxu0 0.0
    %5075 = vmatpush1.msra.mxu0 0.0
    %5076 = vmatprep.subr.mxu0 0.0
    %5077 = vmatpush1.msra.mxu0 0.0
    %5078 = vmatprep.subr.mxu0 0.0
    %5079 = vmatpush1.msra.mxu0 0.0
    %5080 = vmatprep.subr.mxu0 0.0
    %5081 = vmatpush1.msra.mxu0 0.0
    %5082 = vmatprep.subr.mxu0 0.0
    %5083 = vmatpush1.msra.mxu0 0.0
    %5084 = vmatprep.subr.mxu0 0.0
    %5085 = vmatpush1.msra.mxu0 0.0
    %5086 = vmatprep.subr.mxu0 0.0
    %5087 = vmatpush1.msra.mxu0 0.0
    %5088 = vmatprep.subr.mxu0 0.0
    %5089 = vmatpush1.msra.mxu0 0.0
    %5090 = vmatprep.subr.mxu0 0.0
    %5091 = vmatpush1.msra.mxu0 0.0
    %5092 = vmatprep.subr.mxu0 0.0
    %5093 = vmatpush1.msra.mxu0 0.0
    %5094 = vmatprep.subr.mxu0 0.0
    %5095 = vmatpush1.msra.mxu0 0.0
    %5096 = vmatprep.subr.mxu0 0.0
    %5097 = vmatpush1.msra.mxu0 0.0
    %5098 = vmatprep.subr.mxu0 0.0
    %5099 = vmatpush1.msra.mxu0 0.0
    %5100 = vmatprep.subr.mxu0 0.0
    %5101 = vmatpush1.msra.mxu0 0.0
    %5102 = vmatprep.subr.mxu0 0.0
    %5103 = vmatpush1.msra.mxu0 0.0
    %5104 = vmatprep.subr.mxu0 0.0
    %5105 = vmatpush1.msra.mxu0 0.0
    %5106 = vmatprep.subr.mxu0 0.0
    %5107 = vmatpush1.msra.mxu0 0.0
    %5108 = vmatprep.subr.mxu0 0.0
    %5109 = vmatpush1.msra.mxu0 0.0
    %5110 = vmatprep.subr.mxu0 0.0
    %5111 = vmatpush1.msra.mxu0 0.0
    %5112 = vmatprep.mubr.f32.mxu0 0.0
    %5113 = vmatmul.mubr.f32.gmra.mrb[0].mxu0 %v5046
    %v5114 = vpop.f32.mrb[0].mxu0
    %v5115 = vadd.f32 0.0, %v5114
    %v5116 = vpop.f32.mrb[0].mxu0
    %5117 = vdwg.mxu0
    %v5119 = vlaneseq
    %v5120 = vshrl.u32 %v5119, 7
    %v5121 = vsub.s32 0, %v5120
    %v5122 = vrot.slane %v5033, %v5121
    %v5124 = vadd.f32 %v5122, %v5115
    %s5125 = scalar_lea.vmem %s13, 80
    %v5126 = vld [vmem:[%s5125] sm:$0xff]
    %v5127 = vld [vmem:[%s5125 + $0x8] sm:$0xff]
    %v5128 = vld [vmem:[%s5125 + $0x10] sm:$0xff]
    %v5129 = vld [vmem:[%s5125 + $0x18] sm:$0xff]
    %v5130 = vld [vmem:[%s5125 + $0x20] sm:$0xff]
    %v5131 = vld [vmem:[%s5125 + $0x28] sm:$0xff]
    %v5132 = vld [vmem:[%s5125 + $0x30] sm:$0xff]
    %v5133 = vld [vmem:[%s5125 + $0x38] sm:$0xff]
    %v5134 = vld [vmem:[%s5125 + $0x40] sm:$0xff]
    %v5135 = vld [vmem:[%s5125 + $0x48] sm:$0xff]
    %v5137 = vsel %vm5044, %v5030, 0
    %5139 = vmatprep.subr.mxu0 0.0
    %5140 = vmatpush1.msra.mxu0 %v5126
    %5141 = vmatprep.subr.mxu0 0.0
    %5142 = vmatpush1.msra.mxu0 %v5127
    %5143 = vmatprep.subr.mxu0 0.0
    %5144 = vmatpush1.msra.mxu0 %v5128
    %5145 = vmatprep.subr.mxu0 0.0
    %5146 = vmatpush1.msra.mxu0 %v5129
    %5147 = vmatprep.subr.mxu0 0.0
    %5148 = vmatpush1.msra.mxu0 %v5130
    %5149 = vmatprep.subr.mxu0 0.0
    %5150 = vmatpush1.msra.mxu0 %v5131
    %5151 = vmatprep.subr.mxu0 0.0
    %5152 = vmatpush1.msra.mxu0 %v5132
    %5153 = vmatprep.subr.mxu0 0.0
    %5154 = vmatpush1.msra.mxu0 %v5133
    %5155 = vmatprep.subr.mxu0 0.0
    %5156 = vmatpush1.msra.mxu0 %v5134
    %5157 = vmatprep.subr.mxu0 0.0
    %5158 = vmatpush1.msra.mxu0 %v5135
    %5159 = vmatprep.subr.mxu0 0.0
    %5160 = vmatpush1.msra.mxu0 0.0
    %5161 = vmatprep.subr.mxu0 0.0
    %5162 = vmatpush1.msra.mxu0 0.0
    %5163 = vmatprep.subr.mxu0 0.0
    %5164 = vmatpush1.msra.mxu0 0.0
    %5165 = vmatprep.subr.mxu0 0.0
    %5166 = vmatpush1.msra.mxu0 0.0
    %5167 = vmatprep.subr.mxu0 0.0
    %5168 = vmatpush1.msra.mxu0 0.0
    %5169 = vmatprep.subr.mxu0 0.0
    %5170 = vmatpush1.msra.mxu0 0.0
    %5171 = vmatprep.subr.mxu0 0.0
    %5172 = vmatpush1.msra.mxu0 0.0
    %5173 = vmatprep.subr.mxu0 0.0
    %5174 = vmatpush1.msra.mxu0 0.0
    %5175 = vmatprep.subr.mxu0 0.0
    %5176 = vmatpush1.msra.mxu0 0.0
    %5177 = vmatprep.subr.mxu0 0.0
    %5178 = vmatpush1.msra.mxu0 0.0
    %5179 = vmatprep.subr.mxu0 0.0
    %5180 = vmatpush1.msra.mxu0 0.0
    %5181 = vmatprep.subr.mxu0 0.0
    %5182 = vmatpush1.msra.mxu0 0.0
    %5183 = vmatprep.subr.mxu0 0.0
    %5184 = vmatpush1.msra.mxu0 0.0
    %5185 = vmatprep.subr.mxu0 0.0
    %5186 = vmatpush1.msra.mxu0 0.0
    %5187 = vmatprep.subr.mxu0 0.0
    %5188 = vmatpush1.msra.mxu0 0.0
    %5189 = vmatprep.subr.mxu0 0.0
    %5190 = vmatpush1.msra.mxu0 0.0
    %5191 = vmatprep.subr.mxu0 0.0
    %5192 = vmatpush1.msra.mxu0 0.0
    %5193 = vmatprep.subr.mxu0 0.0
    %5194 = vmatpush1.msra.mxu0 0.0
    %5195 = vmatprep.subr.mxu0 0.0
    %5196 = vmatpush1.msra.mxu0 0.0
    %5197 = vmatprep.subr.mxu0 0.0
    %5198 = vmatpush1.msra.mxu0 0.0
    %5199 = vmatprep.subr.mxu0 0.0
    %5200 = vmatpush1.msra.mxu0 0.0
    %5201 = vmatprep.subr.mxu0 0.0
    %5202 = vmatpush1.msra.mxu0 0.0
    %5203 = vmatprep.mubr.f32.mxu0 0.0
    %5204 = vmatmul.mubr.f32.gmra.mrb[0].mxu0 %v5137
    %v5205 = vpop.f32.mrb[0].mxu0
    %v5206 = vadd.f32 0.0, %v5205
    %v5207 = vpop.f32.mrb[0].mxu0
    %5208 = vdwg.mxu0
    %v5209 = vadd.f32 %v5124, %v5206
    %s5210 = scalar_lea.vmem %s13, 160
    %v5211 = vld [vmem:[%s5210] sm:$0xff]
    %v5212 = vld [vmem:[%s5210 + $0x8] sm:$0xff]
    %v5213 = vld [vmem:[%s5210 + $0x10] sm:$0xff]
    %v5214 = vld [vmem:[%s5210 + $0x18] sm:$0xff]
    %v5215 = vld [vmem:[%s5210 + $0x20] sm:$0xff]
    %v5216 = vld [vmem:[%s5210 + $0x28] sm:$0xff]
    %v5217 = vld [vmem:[%s5210 + $0x30] sm:$0xff]
    %v5218 = vld [vmem:[%s5210 + $0x38] sm:$0xff]
    %v5219 = vld [vmem:[%s5210 + $0x40] sm:$0xff]
    %v5220 = vld [vmem:[%s5210 + $0x48] sm:$0xff]
    %v5222 = vsel %vm5044, %v5031, 0
    %5224 = vmatprep.subr.mxu0 0.0
    %5225 = vmatpush1.msra.mxu0 %v5211
    %5226 = vmatprep.subr.mxu0 0.0
    %5227 = vmatpush1.msra.mxu0 %v5212
    %5228 = vmatprep.subr.mxu0 0.0
    %5229 = vmatpush1.msra.mxu0 %v5213
    %5230 = vmatprep.subr.mxu0 0.0
    %5231 = vmatpush1.msra.mxu0 %v5214
    %5232 = vmatprep.subr.mxu0 0.0
    %5233 = vmatpush1.msra.mxu0 %v5215
    %5234 = vmatprep.subr.mxu0 0.0
    %5235 = vmatpush1.msra.mxu0 %v5216
    %5236 = vmatprep.subr.mxu0 0.0
    %5237 = vmatpush1.msra.mxu0 %v5217
    %5238 = vmatprep.subr.mxu0 0.0
    %5239 = vmatpush1.msra.mxu0 %v5218
    %5240 = vmatprep.subr.mxu0 0.0
    %5241 = vmatpush1.msra.mxu0 %v5219
    %5242 = vmatprep.subr.mxu0 0.0
    %5243 = vmatpush1.msra.mxu0 %v5220
    %5244 = vmatprep.subr.mxu0 0.0
    %5245 = vmatpush1.msra.mxu0 0.0
    %5246 = vmatprep.subr.mxu0 0.0
    %5247 = vmatpush1.msra.mxu0 0.0
    %5248 = vmatprep.subr.mxu0 0.0
    %5249 = vmatpush1.msra.mxu0 0.0
    %5250 = vmatprep.subr.mxu0 0.0
    %5251 = vmatpush1.msra.mxu0 0.0
    %5252 = vmatprep.subr.mxu0 0.0
    %5253 = vmatpush1.msra.mxu0 0.0
    %5254 = vmatprep.subr.mxu0 0.0
    %5255 = vmatpush1.msra.mxu0 0.0
    %5256 = vmatprep.subr.mxu0 0.0
    %5257 = vmatpush1.msra.mxu0 0.0
    %5258 = vmatprep.subr.mxu0 0.0
    %5259 = vmatpush1.msra.mxu0 0.0
    %5260 = vmatprep.subr.mxu0 0.0
    %5261 = vmatpush1.msra.mxu0 0.0
    %5262 = vmatprep.subr.mxu0 0.0
    %5263 = vmatpush1.msra.mxu0 0.0
    %5264 = vmatprep.subr.mxu0 0.0
    %5265 = vmatpush1.msra.mxu0 0.0
    %5266 = vmatprep.subr.mxu0 0.0
    %5267 = vmatpush1.msra.mxu0 0.0
    %5268 = vmatprep.subr.mxu0 0.0
    %5269 = vmatpush1.msra.mxu0 0.0
    %5270 = vmatprep.subr.mxu0 0.0
    %5271 = vmatpush1.msra.mxu0 0.0
    %5272 = vmatprep.subr.mxu0 0.0
    %5273 = vmatpush1.msra.mxu0 0.0
    %5274 = vmatprep.subr.mxu0 0.0
    %5275 = vmatpush1.msra.mxu0 0.0
    %5276 = vmatprep.subr.mxu0 0.0
    %5277 = vmatpush1.msra.mxu0 0.0
    %5278 = vmatprep.subr.mxu0 0.0
    %5279 = vmatpush1.msra.mxu0 0.0
    %5280 = vmatprep.subr.mxu0 0.0
    %5281 = vmatpush1.msra.mxu0 0.0
    %5282 = vmatprep.subr.mxu0 0.0
    %5283 = vmatpush1.msra.mxu0 0.0
    %5284 = vmatprep.subr.mxu0 0.0
    %5285 = vmatpush1.msra.mxu0 0.0
    %5286 = vmatprep.subr.mxu0 0.0
    %5287 = vmatpush1.msra.mxu0 0.0
    %5288 = vmatprep.mubr.f32.mxu0 0.0
    %5289 = vmatmul.mubr.f32.gmra.mrb[0].mxu0 %v5222
    %v5290 = vpop.f32.mrb[0].mxu0
    %v5291 = vadd.f32 0.0, %v5290
    %v5292 = vpop.f32.mrb[0].mxu0
    %5293 = vdwg.mxu0
    %v5294 = vadd.f32 %v5209, %v5291
    %s5295 = scalar_lea.vmem %s13, 240
    %v5296 = vld [vmem:[%s5295] sm:$0xff]
    %v5297 = vld [vmem:[%s5295 + $0x8] sm:$0xff]
    %v5298 = vld [vmem:[%s5295 + $0x10] sm:$0xff]
    %v5299 = vld [vmem:[%s5295 + $0x18] sm:$0xff]
    %v5300 = vld [vmem:[%s5295 + $0x20] sm:$0xff]
    %v5301 = vld [vmem:[%s5295 + $0x28] sm:$0xff]
    %v5302 = vld [vmem:[%s5295 + $0x30] sm:$0xff]
    %v5303 = vld [vmem:[%s5295 + $0x38] sm:$0xff]
    %v5304 = vld [vmem:[%s5295 + $0x40] sm:$0xff]
    %v5305 = vld [vmem:[%s5295 + $0x48] sm:$0xff]
    %v5307 = vsel %vm5044, %v5032, 0
    %5309 = vmatprep.subr.mxu0 0.0
    %5310 = vmatpush1.msra.mxu0 %v5296
    %5311 = vmatprep.subr.mxu0 0.0
    %5312 = vmatpush1.msra.mxu0 %v5297
    %5313 = vmatprep.subr.mxu0 0.0
    %5314 = vmatpush1.msra.mxu0 %v5298
    %5315 = vmatprep.subr.mxu0 0.0
    %5316 = vmatpush1.msra.mxu0 %v5299
    %5317 = vmatprep.subr.mxu0 0.0
    %5318 = vmatpush1.msra.mxu0 %v5300
    %5319 = vmatprep.subr.mxu0 0.0
    %5320 = vmatpush1.msra.mxu0 %v5301
    %5321 = vmatprep.subr.mxu0 0.0
    %5322 = vmatpush1.msra.mxu0 %v5302
    %5323 = vmatprep.subr.mxu0 0.0
    %5324 = vmatpush1.msra.mxu0 %v5303
    %5325 = vmatprep.subr.mxu0 0.0
    %5326 = vmatpush1.msra.mxu0 %v5304
    %5327 = vmatprep.subr.mxu0 0.0
    %5328 = vmatpush1.msra.mxu0 %v5305
    %5329 = vmatprep.subr.mxu0 0.0
    %5330 = vmatpush1.msra.mxu0 0.0
    %5331 = vmatprep.subr.mxu0 0.0
    %5332 = vmatpush1.msra.mxu0 0.0
    %5333 = vmatprep.subr.mxu0 0.0
    %5334 = vmatpush1.msra.mxu0 0.0
    %5335 = vmatprep.subr.mxu0 0.0
    %5336 = vmatpush1.msra.mxu0 0.0
    %5337 = vmatprep.subr.mxu0 0.0
    %5338 = vmatpush1.msra.mxu0 0.0
    %5339 = vmatprep.subr.mxu0 0.0
    %5340 = vmatpush1.msra.mxu0 0.0
    %5341 = vmatprep.subr.mxu0 0.0
    %5342 = vmatpush1.msra.mxu0 0.0
    %5343 = vmatprep.subr.mxu0 0.0
    %5344 = vmatpush1.msra.mxu0 0.0
    %5345 = vmatprep.subr.mxu0 0.0
    %5346 = vmatpush1.msra.mxu0 0.0
    %5347 = vmatprep.subr.mxu0 0.0
    %5348 = vmatpush1.msra.mxu0 0.0
    %5349 = vmatprep.subr.mxu0 0.0
    %5350 = vmatpush1.msra.mxu0 0.0
    %5351 = vmatprep.subr.mxu0 0.0
    %5352 = vmatpush1.msra.mxu0 0.0
    %5353 = vmatprep.subr.mxu0 0.0
    %5354 = vmatpush1.msra.mxu0 0.0
    %5355 = vmatprep.subr.mxu0 0.0
    %5356 = vmatpush1.msra.mxu0 0.0
    %5357 = vmatprep.subr.mxu0 0.0
    %5358 = vmatpush1.msra.mxu0 0.0
    %5359 = vmatprep.subr.mxu0 0.0
    %5360 = vmatpush1.msra.mxu0 0.0
    %5361 = vmatprep.subr.mxu0 0.0
    %5362 = vmatpush1.msra.mxu0 0.0
    %5363 = vmatprep.subr.mxu0 0.0
    %5364 = vmatpush1.msra.mxu0 0.0
    %5365 = vmatprep.subr.mxu0 0.0
    %5366 = vmatpush1.msra.mxu0 0.0
    %5367 = vmatprep.subr.mxu0 0.0
    %5368 = vmatpush1.msra.mxu0 0.0
    %5369 = vmatprep.subr.mxu0 0.0
    %5370 = vmatpush1.msra.mxu0 0.0
    %5371 = vmatprep.subr.mxu0 0.0
    %5372 = vmatpush1.msra.mxu0 0.0
    %5373 = vmatprep.mubr.f32.mxu0 0.0
    %5374 = vmatmul.mubr.f32.gmra.mrb[0].mxu0 %v5307
    %v5375 = vpop.f32.mrb[0].mxu0
    %v5376 = vadd.f32 0.0, %v5375
    %v5377 = vpop.f32.mrb[0].mxu0
    %5378 = vdwg.mxu0
    %v5379 = vadd.f32 %v5294, %v5376
    %vm5380 = vcmask 80896
    %5381 = vst.msk [vmem:[#allocation2] sm:$0xff] %vm5380, %v5379
    // Predicated region
    $region62: #{meisme_forward.1} parent=1 // pred_check
      _
    $region63: #{meisme_forward.1} parent=1 // pred_check_branch
      %5383 = sbr.rel (0) target = $region65
    $region64: #{meisme_forward.1} parent=1 // pred_region
      %s5385 = ssub.s32 128, 128
      %5386 = vsyncadd [#allocation3], %s5385
      %s5388 = sshll.u32 [#allocation2], 4
      %s5389 = int_to_ptr.vmem [resolvable:$true] %s5388
      %5391 = dma.vmem_to_hbm [thread:$0]  %s5389, 128, %s15, [#allocation3]
    $region65: #{meisme_forward.1} parent=1 // pred_fallthru
      _
    // Predicated region
    $region66: #{meisme_forward.1} parent=1 // pred_check
      _
    $region67: #{meisme_forward.1} parent=1 // pred_check_branch
      %5393 = sbr.rel (0) target = $region69
    $region68: #{meisme_forward.1} parent=1 // pred_region
      %5394 = dma.done [#allocation3], 128
    $region69: #{meisme_forward.1} parent=1 // pred_fallthru
      _
    %5395 = vsyncpa [#allocation3], 1

</llo_original>
